<compile_context>
chip_gen: v5e
topology: v5e:2x2
jax: 0.10.0
libtpu: 0.0.40
codegen_flags: <defaults>
</compile_context>

<pallas_src>
import jax
import jax.numpy as jnp
from jax.experimental import pallas as pl
from jax.experimental.pallas import tpu as pltpu

LANE = 128  # hidden / logit dims are zero-padded to this


# --------------------------------------------------------------------------
# Kernel 1: conv(3x3, pad=1) + tanh + 2x2 max-pool, TB samples per grid step.
# Output layout: (C, N_pad*196) -- channel-major, batch*spatial on lanes.
# --------------------------------------------------------------------------
def conv_tanh_pool(patches, w_c9, b_conv, *, tb=32):
    """patches: (4, 9, N_pad*196) bf16   w_c9: (C, 9) bf16   b_conv: (C, 1) f32
       ->  (C, N_pad*196) f32"""
    assert tb % 32 == 0, "tb*196 must be a multiple of 128 -> tb % 32 == 0"
    C = w_c9.shape[0]
    total = patches.shape[2]
    blk = tb * 196
    assert total % blk == 0

    def kernel(p_ref, w_ref, b_ref, o_ref):
        w = w_ref[...]                                                 # (C, 9)
        # max over the 4 pool sub-offsets; valid because +bias and tanh are
        # monotone, so pool(tanh(conv+b)) == tanh(max(conv)+b).
        pre = jnp.dot(w, p_ref[0], preferred_element_type=jnp.float32)
        for a in range(1, 4):
            pre = jnp.maximum(
                pre, jnp.dot(w, p_ref[a], preferred_element_type=jnp.float32))
        o_ref[...] = jnp.tanh(pre + b_ref[...])                        # (C, blk)

    return pl.pallas_call(
        kernel,
        out_shape=jax.ShapeDtypeStruct((C, total), jnp.float32),
        grid_spec=pltpu.PrefetchScalarGridSpec(
            num_scalar_prefetch=0,
            grid=(total // blk,),
            in_specs=[
                pl.BlockSpec((4, 9, blk), lambda n: (0, 0, n)),
                pl.BlockSpec((C, 9), lambda n: (0, 0)),
                pl.BlockSpec((C, 1), lambda n: (0, 0)),
            ],
            out_specs=pl.BlockSpec((C, blk), lambda n: (0, n)),
        ),
        compiler_params=pltpu.CompilerParams(dimension_semantics=("parallel",)),
    )(patches, w_c9, b_conv)


# --------------------------------------------------------------------------
# Kernel 2: fc1 + ReLU + fc2, tiled over the batch, resident FC weights.
# fc1 is computed as a per-channel contraction so no relayout is needed.
# --------------------------------------------------------------------------
def mlp(pooled_cm, w1c, b1, w2, b2, *, tn=32):
    """pooled_cm: (C, N_pad, 196)  w1c: (C, 196, H)  b1: (1, H)
       w2: (H, K)  b2: (1, K)  ->  (N_pad, K)"""
    C, n_pad, S = pooled_cm.shape
    H = w1c.shape[2]
    K = w2.shape[1]
    assert n_pad % tn == 0 and tn % 8 == 0

    def kernel(x_ref, w1_ref, b1_ref, w2_ref, b2_ref, o_ref):
        acc = jnp.dot(x_ref[0], w1_ref[0], preferred_element_type=jnp.float32)
        for c in range(1, C):
            acc = acc + jnp.dot(x_ref[c], w1_ref[c],
                                preferred_element_type=jnp.float32)
        h = jnp.maximum(acc + b1_ref[...], 0.0)                        # ReLU, (tn,H)
        o_ref[...] = jnp.dot(h, w2_ref[...],
                             preferred_element_type=jnp.float32) + b2_ref[...]

    return pl.pallas_call(
        kernel,
        out_shape=jax.ShapeDtypeStruct((n_pad, K), jnp.float32),
        grid_spec=pltpu.PrefetchScalarGridSpec(
            num_scalar_prefetch=0,
            grid=(n_pad // tn,),
            in_specs=[
                pl.BlockSpec((C, tn, S), lambda n: (0, n, 0)),
                pl.BlockSpec((C, S, H), lambda n: (0, 0, 0)),
                pl.BlockSpec((1, H), lambda n: (0, 0)),
                pl.BlockSpec((H, K), lambda n: (0, 0)),
                pl.BlockSpec((1, K), lambda n: (0, 0)),
            ],
            out_specs=pl.BlockSpec((tn, K), lambda n: (n, 0)),
        ),
        compiler_params=pltpu.CompilerParams(dimension_semantics=("parallel",)),
    )(pooled_cm, w1c, b1, w2, b2)


# --------------------------------------------------------------------------
# Glue: im2col with pool-offset grouping, batch/spatial on the lane axis.
# --------------------------------------------------------------------------
def _im2col_pool_patches(x, n_pad):
    """x: (N, 1, 28, 28) f32 -> (4, 9, n_pad*196) bf16,
       indexed [pool offset a*2+b, tap di*3+dj, n*196 + i*14 + j]."""
    N = x.shape[0]
    xi = x[:, 0]
    if n_pad > N:
        xi = jnp.pad(xi, ((0, n_pad - N), (0, 0), (0, 0)))
    xp = jnp.pad(xi, ((0, 0), (1, 1), (1, 1)))                          # (n,30,30)
    taps = jnp.stack([xp[:, di:di + 28, dj:dj + 28]
                      for di in range(3) for dj in range(3)], axis=0)   # (9,n,28,28)
    taps = taps.reshape(9, n_pad, 14, 2, 14, 2)                         # k,n,i,a,j,b
    patches = taps.transpose(3, 5, 0, 1, 2, 4).reshape(4, 9, n_pad * 196)
    return patches.astype(jnp.bfloat16)


@jax.jit
def tiny_lateral_net_forward(x, params):
    """x: (N, 1, 28, 28) NCHW float32  ->  logits (N, num_classes)."""
    N = x.shape[0]
    C = params["w_c9"].shape[0]
    num_classes = params["w2"].shape[1]
    TB = 32
    n_pad = ((N + TB - 1) // TB) * TB

    patches = _im2col_pool_patches(x, n_pad)                            # (4,9,n_pad*196)
    pooled = conv_tanh_pool(patches, params["w_c9"].astype(jnp.bfloat16),
                            params["b_conv"], tb=TB)                    # (C, n_pad*196)

    # TODO(synk): symmetric_padding(x, prd=1) + LaterallyConnectedLayer3 not
    # available in the reference source; identity pass-through here.

    pooled_cm = pooled.reshape(C, n_pad, 196)                           # free reshape

    h0 = params["w1"].shape[1]
    w1c = jnp.pad(params["w1"].reshape(C, 196, h0),
                  ((0, 0), (0, 0), (0, LANE - h0)))
    b1p = jnp.pad(params["b1"], ((0, 0), (0, LANE - h0)))
    w2p = jnp.pad(params["w2"], ((0, LANE - h0), (0, LANE - num_classes)))
    b2p = jnp.pad(params["b2"], ((0, 0), (0, LANE - num_classes)))

    logits = mlp(pooled_cm, w1c, b1p, w2p, b2p, tn=TB)                  # (n_pad,128)
    return logits[:N, :num_classes]


# --------------------------------------------------------------------------
# Pure-JAX (f32) reference for validation
# --------------------------------------------------------------------------
def reference_forward(x, params):
    N = x.shape[0]
    xpad = jnp.pad(x[:, 0], ((0, 0), (1, 1), (1, 1)))
    wins = jnp.stack([xpad[:, di:di + 28, dj:dj + 28]
                      for di in range(3) for dj in range(3)], axis=-1)  # (N,28,28,9)
    pre = jnp.einsum("nhwk,ck->nhwc", wins, params["w_c9"]) + params["b_conv"][:, 0]
    act = jnp.tanh(pre)                                                 # (N,28,28,C)
    pooled = jnp.max(act.reshape(N, 14, 2, 14, 2, -1), axis=(2, 4))     # (N,14,14,C)
    feat = pooled.transpose(0, 3, 1, 2).reshape(N, -1)                  # channel-major
    h = jnp.maximum(feat @ params["w1"] + params["b1"][0], 0.0)
    return h @ params["w2"] + params["b2"][0]


# --------------------------------------------------------------------------
# Deterministic synthetic parameters (shapes from the module's __init__)
# --------------------------------------------------------------------------
def init_params(key, conv_channels=10, num_classes=10):
    C = conv_channels
    F = C * 14 * 14
    ks = jax.random.split(key, 6)
    w_conv = 0.1 * jax.random.normal(ks[0], (C, 3, 3), jnp.float32)     # torch (C,1,3,3) squeezed
    w_c9 = w_conv.reshape(C, 9)                                         # (C, 9), tap = di*3+dj
    b_conv = 0.1 * jax.random.normal(ks[1], (C, 1), jnp.float32)
    w1 = jax.random.normal(ks[2], (F, 100), jnp.float32) / jnp.sqrt(F)
    b1 = 0.01 * jax.random.normal(ks[3], (1, 100), jnp.float32)
    w2 = 0.1 * jax.random.normal(ks[4], (100, num_classes), jnp.float32)
    b2 = 0.01 * jax.random.normal(ks[5], (1, num_classes), jnp.float32)
    return dict(w_c9=w_c9, b_conv=b_conv, w1=w1, b1=b1, w2=w2, b2=b2)


if __name__ == "__main__":
    key = jax.random.PRNGKey(0)
    k_x, k_p = jax.random.split(key)
    x = jax.random.normal(k_x, (2, 1, 28, 28), jnp.float32)             # NCHW
    params = init_params(k_p, conv_channels=10, num_classes=10)

    out = jax.block_until_ready(tiny_lateral_net_forward(x, params))
    ref = jax.block_until_ready(reference_forward(x, params))

    assert out.shape == (2, 10), out.shape
    assert jnp.allclose(out, ref, rtol=2e-2, atol=3e-2), (out, ref)

    print("KERNEL_OK")
</pallas_src>

<mosaic_0001>
module attributes {stable_mosaic.version = 11 : i64} {
  func.func @kernel(%arg0: i32, %arg1: memref<4x9x6272xbf16, #tpu.memory_space<vmem>>, %arg2: memref<10x9xbf16, #tpu.memory_space<vmem>>, %arg3: memref<10x1xf32, #tpu.memory_space<vmem>>, %arg4: memref<10x6272xf32, #tpu.memory_space<vmem>>) attributes {dimension_semantics = [#tpu.dimension_semantics<parallel>], iteration_bounds = array<i64: 1>, scalar_prefetch = 0 : i64, scratch_operands = 0 : i64, tpu.core_type = #tpu.core_type<tc>, window_params = [{transform_indices = @transform_0, window_bounds = array<i64: 4, 9, 6272>}, {pipeline_mode = #tpu.pipeline_mode<synchronous>, transform_indices = @transform_1, window_bounds = array<i64: 10, 9>}, {pipeline_mode = #tpu.pipeline_mode<synchronous>, transform_indices = @transform_2, window_bounds = array<i64: 10, 1>}, {transform_indices = @transform_3, window_bounds = array<i64: 10, 6272>}]} {
    %c0 = arith.constant 0 : index
    %c0_0 = arith.constant 0 : index
    %0 = vector.load %arg2[%c0, %c0_0] : memref<10x9xbf16, #tpu.memory_space<vmem>>, vector<10x9xbf16>
    %c0_1 = arith.constant 0 : index
    %c0_2 = arith.constant 0 : index
    %c0_3 = arith.constant 0 : index
    %1 = vector.load %arg1[%c0_1, %c0_2, %c0_3] : memref<4x9x6272xbf16, #tpu.memory_space<vmem>>, vector<1x9x6272xbf16>
    %2 = vector.shape_cast %1 : vector<1x9x6272xbf16> to vector<9x6272xbf16>
    %cst = arith.constant dense<0.000000e+00> : vector<10x6272xf32>
    %3 = tpu.matmul %0, %2, %cst {dimension_numbers = #tpu.dot_dimension_numbers<[1], [0], [0], [1], [0, 0, 1, 1], [], []>} : vector<10x9xbf16>, vector<9x6272xbf16>, vector<10x6272xf32> -> vector<10x6272xf32>
    %c1 = arith.constant 1 : index
    %c0_4 = arith.constant 0 : index
    %c0_5 = arith.constant 0 : index
    %4 = vector.load %arg1[%c1, %c0_4, %c0_5] : memref<4x9x6272xbf16, #tpu.memory_space<vmem>>, vector<1x9x6272xbf16>
    %5 = vector.shape_cast %4 : vector<1x9x6272xbf16> to vector<9x6272xbf16>
    %cst_6 = arith.constant dense<0.000000e+00> : vector<10x6272xf32>
    %6 = tpu.matmul %0, %5, %cst_6 {dimension_numbers = #tpu.dot_dimension_numbers<[1], [0], [0], [1], [0, 0, 1, 1], [], []>} : vector<10x9xbf16>, vector<9x6272xbf16>, vector<10x6272xf32> -> vector<10x6272xf32>
    %7 = arith.maximumf %3, %6 : vector<10x6272xf32>
    %c2 = arith.constant 2 : index
    %c0_7 = arith.constant 0 : index
    %c0_8 = arith.constant 0 : index
    %8 = vector.load %arg1[%c2, %c0_7, %c0_8] : memref<4x9x6272xbf16, #tpu.memory_space<vmem>>, vector<1x9x6272xbf16>
    %9 = vector.shape_cast %8 : vector<1x9x6272xbf16> to vector<9x6272xbf16>
    %cst_9 = arith.constant dense<0.000000e+00> : vector<10x6272xf32>
    %10 = tpu.matmul %0, %9, %cst_9 {dimension_numbers = #tpu.dot_dimension_numbers<[1], [0], [0], [1], [0, 0, 1, 1], [], []>} : vector<10x9xbf16>, vector<9x6272xbf16>, vector<10x6272xf32> -> vector<10x6272xf32>
    %11 = arith.maximumf %7, %10 : vector<10x6272xf32>
    %c3 = arith.constant 3 : index
    %c0_10 = arith.constant 0 : index
    %c0_11 = arith.constant 0 : index
    %12 = vector.load %arg1[%c3, %c0_10, %c0_11] : memref<4x9x6272xbf16, #tpu.memory_space<vmem>>, vector<1x9x6272xbf16>
    %13 = vector.shape_cast %12 : vector<1x9x6272xbf16> to vector<9x6272xbf16>
    %cst_12 = arith.constant dense<0.000000e+00> : vector<10x6272xf32>
    %14 = tpu.matmul %0, %13, %cst_12 {dimension_numbers = #tpu.dot_dimension_numbers<[1], [0], [0], [1], [0, 0, 1, 1], [], []>} : vector<10x9xbf16>, vector<9x6272xbf16>, vector<10x6272xf32> -> vector<10x6272xf32>
    %15 = arith.maximumf %11, %14 : vector<10x6272xf32>
    %c0_13 = arith.constant 0 : index
    %c0_14 = arith.constant 0 : index
    %16 = vector.load %arg3[%c0_13, %c0_14] : memref<10x1xf32, #tpu.memory_space<vmem>>, vector<10x1xf32>
    %17 = vector.broadcast %16 : vector<10x1xf32> to vector<10x6272xf32>
    %18 = arith.addf %15, %17 : vector<10x6272xf32>
    %19 = math.tanh %18 : vector<10x6272xf32>
    %c0_15 = arith.constant 0 : index
    %c0_16 = arith.constant 0 : index
    %20 = vector.load %arg4[%c0_15, %c0_16] : memref<10x6272xf32, #tpu.memory_space<vmem>>, vector<10x6272xf32>
    tpu.vector_store %arg4[%c0_15, %c0_16], %19 {strides = array<i32>} : memref<10x6272xf32, #tpu.memory_space<vmem>>, vector<10x6272xf32>,
    return
  }
  func.func @transform_0(%arg0: i32) -> (i32, i32, i32) {
    %c0_i32 = arith.constant 0 : i32
    %c0_i32_0 = arith.constant 0 : i32
    %c0_i32_1 = arith.constant 0 : i32
    return %c0_i32, %c0_i32_0, %arg0 : i32, i32, i32
  }
  func.func @transform_1(%arg0: i32) -> (i32, i32) {
    %c0_i32 = arith.constant 0 : i32
    %c0_i32_0 = arith.constant 0 : i32
    %c0_i32_1 = arith.constant 0 : i32
    return %c0_i32, %c0_i32_0 : i32, i32
  }
  func.func @transform_2(%arg0: i32) -> (i32, i32) {
    %c0_i32 = arith.constant 0 : i32
    %c0_i32_0 = arith.constant 0 : i32
    %c0_i32_1 = arith.constant 0 : i32
    return %c0_i32, %c0_i32_0 : i32, i32
  }
  func.func @transform_3(%arg0: i32) -> (i32, i32) {
    %c0_i32 = arith.constant 0 : i32
    %c0_i32_0 = arith.constant 0 : i32
    return %c0_i32, %arg0 : i32, i32
  }
}

module attributes {stable_mosaic.version = 11 : i64} {
  func.func @kernel(%arg0: i32, %arg1: memref<10x32x196xf32, #tpu.memory_space<vmem>>, %arg2: memref<10x196x128xf32, #tpu.memory_space<vmem>>, %arg3: memref<1x128xf32, #tpu.memory_space<vmem>>, %arg4: memref<128x128xf32, #tpu.memory_space<vmem>>, %arg5: memref<1x128xf32, #tpu.memory_space<vmem>>, %arg6: memref<32x128xf32, #tpu.memory_space<vmem>>) attributes {dimension_semantics = [#tpu.dimension_semantics<parallel>], iteration_bounds = array<i64: 1>, scalar_prefetch = 0 : i64, scratch_operands = 0 : i64, tpu.core_type = #tpu.core_type<tc>, window_params = [{transform_indices = @transform_0, window_bounds = array<i64: 10, 32, 196>}, {pipeline_mode = #tpu.pipeline_mode<synchronous>, transform_indices = @transform_1, window_bounds = array<i64: 10, 196, 128>}, {pipeline_mode = #tpu.pipeline_mode<synchronous>, transform_indices = @transform_2, window_bounds = array<i64: 1, 128>}, {pipeline_mode = #tpu.pipeline_mode<synchronous>, transform_indices = @transform_3, window_bounds = array<i64: 128, 128>}, {pipeline_mode = #tpu.pipeline_mode<synchronous>, transform_indices = @transform_4, window_bounds = array<i64: 1, 128>}, {transform_indices = @transform_5, window_bounds = array<i64: 32, 128>}]} {
    %c0 = arith.constant 0 : index
    %c0_0 = arith.constant 0 : index
    %c0_1 = arith.constant 0 : index
    %0 = vector.load %arg1[%c0, %c0_0, %c0_1] : memref<10x32x196xf32, #tpu.memory_space<vmem>>, vector<1x32x196xf32>
    %1 = vector.shape_cast %0 : vector<1x32x196xf32> to vector<32x196xf32>
    %c0_2 = arith.constant 0 : index
    %c0_3 = arith.constant 0 : index
    %c0_4 = arith.constant 0 : index
    %2 = vector.load %arg2[%c0_2, %c0_3, %c0_4] : memref<10x196x128xf32, #tpu.memory_space<vmem>>, vector<1x196x128xf32>
    %3 = vector.shape_cast %2 : vector<1x196x128xf32> to vector<196x128xf32>
    %cst = arith.constant dense<0.000000e+00> : vector<32x128xf32>
    %4 = tpu.matmul %1, %3, %cst {dimension_numbers = #tpu.dot_dimension_numbers<[1], [0], [0], [1], [0, 0, 1, 1], [], []>} : vector<32x196xf32>, vector<196x128xf32>, vector<32x128xf32> -> vector<32x128xf32>
    %c1 = arith.constant 1 : index
    %c0_5 = arith.constant 0 : index
    %c0_6 = arith.constant 0 : index
    %5 = vector.load %arg1[%c1, %c0_5, %c0_6] : memref<10x32x196xf32, #tpu.memory_space<vmem>>, vector<1x32x196xf32>
    %6 = vector.shape_cast %5 : vector<1x32x196xf32> to vector<32x196xf32>
    %c1_7 = arith.constant 1 : index
    %c0_8 = arith.constant 0 : index
    %c0_9 = arith.constant 0 : index
    %7 = vector.load %arg2[%c1_7, %c0_8, %c0_9] : memref<10x196x128xf32, #tpu.memory_space<vmem>>, vector<1x196x128xf32>
    %8 = vector.shape_cast %7 : vector<1x196x128xf32> to vector<196x128xf32>
    %cst_10 = arith.constant dense<0.000000e+00> : vector<32x128xf32>
    %9 = tpu.matmul %6, %8, %cst_10 {dimension_numbers = #tpu.dot_dimension_numbers<[1], [0], [0], [1], [0, 0, 1, 1], [], []>} : vector<32x196xf32>, vector<196x128xf32>, vector<32x128xf32> -> vector<32x128xf32>
    %10 = arith.addf %4, %9 : vector<32x128xf32>
    %c2 = arith.constant 2 : index
    %c0_11 = arith.constant 0 : index
    %c0_12 = arith.constant 0 : index
    %11 = vector.load %arg1[%c2, %c0_11, %c0_12] : memref<10x32x196xf32, #tpu.memory_space<vmem>>, vector<1x32x196xf32>
    %12 = vector.shape_cast %11 : vector<1x32x196xf32> to vector<32x196xf32>
    %c2_13 = arith.constant 2 : index
    %c0_14 = arith.constant 0 : index
    %c0_15 = arith.constant 0 : index
    %13 = vector.load %arg2[%c2_13, %c0_14, %c0_15] : memref<10x196x128xf32, #tpu.memory_space<vmem>>, vector<1x196x128xf32>
    %14 = vector.shape_cast %13 : vector<1x196x128xf32> to vector<196x128xf32>
    %cst_16 = arith.constant dense<0.000000e+00> : vector<32x128xf32>
    %15 = tpu.matmul %12, %14, %cst_16 {dimension_numbers = #tpu.dot_dimension_numbers<[1], [0], [0], [1], [0, 0, 1, 1], [], []>} : vector<32x196xf32>, vector<196x128xf32>, vector<32x128xf32> -> vector<32x128xf32>
    %16 = arith.addf %10, %15 : vector<32x128xf32>
    %c3 = arith.constant 3 : index
    %c0_17 = arith.constant 0 : index
    %c0_18 = arith.constant 0 : index
    %17 = vector.load %arg1[%c3, %c0_17, %c0_18] : memref<10x32x196xf32, #tpu.memory_space<vmem>>, vector<1x32x196xf32>
    %18 = vector.shape_cast %17 : vector<1x32x196xf32> to vector<32x196xf32>
    %c3_19 = arith.constant 3 : index
    %c0_20 = arith.constant 0 : index
    %c0_21 = arith.constant 0 : index
    %19 = vector.load %arg2[%c3_19, %c0_20, %c0_21] : memref<10x196x128xf32, #tpu.memory_space<vmem>>, vector<1x196x128xf32>
    %20 = vector.shape_cast %19 : vector<1x196x128xf32> to vector<196x128xf32>
    %cst_22 = arith.constant dense<0.000000e+00> : vector<32x128xf32>
    %21 = tpu.matmul %18, %20, %cst_22 {dimension_numbers = #tpu.dot_dimension_numbers<[1], [0], [0], [1], [0, 0, 1, 1], [], []>} : vector<32x196xf32>, vector<196x128xf32>, vector<32x128xf32> -> vector<32x128xf32>
    %22 = arith.addf %16, %21 : vector<32x128xf32>
    %c4 = arith.constant 4 : index
    %c0_23 = arith.constant 0 : index
    %c0_24 = arith.constant 0 : index
    %23 = vector.load %arg1[%c4, %c0_23, %c0_24] : memref<10x32x196xf32, #tpu.memory_space<vmem>>, vector<1x32x196xf32>
    %24 = vector.shape_cast %23 : vector<1x32x196xf32> to vector<32x196xf32>
    %c4_25 = arith.constant 4 : index
    %c0_26 = arith.constant 0 : index
    %c0_27 = arith.constant 0 : index
    %25 = vector.load %arg2[%c4_25, %c0_26, %c0_27] : memref<10x196x128xf32, #tpu.memory_space<vmem>>, vector<1x196x128xf32>
    %26 = vector.shape_cast %25 : vector<1x196x128xf32> to vector<196x128xf32>
    %cst_28 = arith.constant dense<0.000000e+00> : vector<32x128xf32>
    %27 = tpu.matmul %24, %26, %cst_28 {dimension_numbers = #tpu.dot_dimension_numbers<[1], [0], [0], [1], [0, 0, 1, 1], [], []>} : vector<32x196xf32>, vector<196x128xf32>, vector<32x128xf32> -> vector<32x128xf32>
    %28 = arith.addf %22, %27 : vector<32x128xf32>
    %c5 = arith.constant 5 : index
    %c0_29 = arith.constant 0 : index
    %c0_30 = arith.constant 0 : index
    %29 = vector.load %arg1[%c5, %c0_29, %c0_30] : memref<10x32x196xf32, #tpu.memory_space<vmem>>, vector<1x32x196xf32>
    %30 = vector.shape_cast %29 : vector<1x32x196xf32> to vector<32x196xf32>
    %c5_31 = arith.constant 5 : index
    %c0_32 = arith.constant 0 : index
    %c0_33 = arith.constant 0 : index
    %31 = vector.load %arg2[%c5_31, %c0_32, %c0_33] : memref<10x196x128xf32, #tpu.memory_space<vmem>>, vector<1x196x128xf32>
    %32 = vector.shape_cast %31 : vector<1x196x128xf32> to vector<196x128xf32>
    %cst_34 = arith.constant dense<0.000000e+00> : vector<32x128xf32>
    %33 = tpu.matmul %30, %32, %cst_34 {dimension_numbers = #tpu.dot_dimension_numbers<[1], [0], [0], [1], [0, 0, 1, 1], [], []>} : vector<32x196xf32>, vector<196x128xf32>, vector<32x128xf32> -> vector<32x128xf32>
    %34 = arith.addf %28, %33 : vector<32x128xf32>
    %c6 = arith.constant 6 : index
    %c0_35 = arith.constant 0 : index
    %c0_36 = arith.constant 0 : index
    %35 = vector.load %arg1[%c6, %c0_35, %c0_36] : memref<10x32x196xf32, #tpu.memory_space<vmem>>, vector<1x32x196xf32>
    %36 = vector.shape_cast %35 : vector<1x32x196xf32> to vector<32x196xf32>
    %c6_37 = arith.constant 6 : index
    %c0_38 = arith.constant 0 : index
    %c0_39 = arith.constant 0 : index
    %37 = vector.load %arg2[%c6_37, %c0_38, %c0_39] : memref<10x196x128xf32, #tpu.memory_space<vmem>>, vector<1x196x128xf32>
    %38 = vector.shape_cast %37 : vector<1x196x128xf32> to vector<196x128xf32>
    %cst_40 = arith.constant dense<0.000000e+00> : vector<32x128xf32>
    %39 = tpu.matmul %36, %38, %cst_40 {dimension_numbers = #tpu.dot_dimension_numbers<[1], [0], [0], [1], [0, 0, 1, 1], [], []>} : vector<32x196xf32>, vector<196x128xf32>, vector<32x128xf32> -> vector<32x128xf32>
    %40 = arith.addf %34, %39 : vector<32x128xf32>
    %c7 = arith.constant 7 : index
    %c0_41 = arith.constant 0 : index
    %c0_42 = arith.constant 0 : index
    %41 = vector.load %arg1[%c7, %c0_41, %c0_42] : memref<10x32x196xf32, #tpu.memory_space<vmem>>, vector<1x32x196xf32>
    %42 = vector.shape_cast %41 : vector<1x32x196xf32> to vector<32x196xf32>
    %c7_43 = arith.constant 7 : index
    %c0_44 = arith.constant 0 : index
    %c0_45 = arith.constant 0 : index
    %43 = vector.load %arg2[%c7_43, %c0_44, %c0_45] : memref<10x196x128xf32, #tpu.memory_space<vmem>>, vector<1x196x128xf32>
    %44 = vector.shape_cast %43 : vector<1x196x128xf32> to vector<196x128xf32>
    %cst_46 = arith.constant dense<0.000000e+00> : vector<32x128xf32>
    %45 = tpu.matmul %42, %44, %cst_46 {dimension_numbers = #tpu.dot_dimension_numbers<[1], [0], [0], [1], [0, 0, 1, 1], [], []>} : vector<32x196xf32>, vector<196x128xf32>, vector<32x128xf32> -> vector<32x128xf32>
    %46 = arith.addf %40, %45 : vector<32x128xf32>
    %c8 = arith.constant 8 : index
    %c0_47 = arith.constant 0 : index
    %c0_48 = arith.constant 0 : index
    %47 = vector.load %arg1[%c8, %c0_47, %c0_48] : memref<10x32x196xf32, #tpu.memory_space<vmem>>, vector<1x32x196xf32>
    %48 = vector.shape_cast %47 : vector<1x32x196xf32> to vector<32x196xf32>
    %c8_49 = arith.constant 8 : index
    %c0_50 = arith.constant 0 : index
    %c0_51 = arith.constant 0 : index
    %49 = vector.load %arg2[%c8_49, %c0_50, %c0_51] : memref<10x196x128xf32, #tpu.memory_space<vmem>>, vector<1x196x128xf32>
    %50 = vector.shape_cast %49 : vector<1x196x128xf32> to vector<196x128xf32>
    %cst_52 = arith.constant dense<0.000000e+00> : vector<32x128xf32>
    %51 = tpu.matmul %48, %50, %cst_52 {dimension_numbers = #tpu.dot_dimension_numbers<[1], [0], [0], [1], [0, 0, 1, 1], [], []>} : vector<32x196xf32>, vector<196x128xf32>, vector<32x128xf32> -> vector<32x128xf32>
    %52 = arith.addf %46, %51 : vector<32x128xf32>
    %c9 = arith.constant 9 : index
    %c0_53 = arith.constant 0 : index
    %c0_54 = arith.constant 0 : index
    %53 = vector.load %arg1[%c9, %c0_53, %c0_54] : memref<10x32x196xf32, #tpu.memory_space<vmem>>, vector<1x32x196xf32>
    %54 = vector.shape_cast %53 : vector<1x32x196xf32> to vector<32x196xf32>
    %c9_55 = arith.constant 9 : index
    %c0_56 = arith.constant 0 : index
    %c0_57 = arith.constant 0 : index
    %55 = vector.load %arg2[%c9_55, %c0_56, %c0_57] : memref<10x196x128xf32, #tpu.memory_space<vmem>>, vector<1x196x128xf32>
    %56 = vector.shape_cast %55 : vector<1x196x128xf32> to vector<196x128xf32>
    %cst_58 = arith.constant dense<0.000000e+00> : vector<32x128xf32>
    %57 = tpu.matmul %54, %56, %cst_58 {dimension_numbers = #tpu.dot_dimension_numbers<[1], [0], [0], [1], [0, 0, 1, 1], [], []>} : vector<32x196xf32>, vector<196x128xf32>, vector<32x128xf32> -> vector<32x128xf32>
    %58 = arith.addf %52, %57 : vector<32x128xf32>
    %c0_59 = arith.constant 0 : index
    %c0_60 = arith.constant 0 : index
    %59 = vector.load %arg3[%c0_59, %c0_60] : memref<1x128xf32, #tpu.memory_space<vmem>>, vector<1x128xf32>
    %60 = vector.broadcast %59 : vector<1x128xf32> to vector<32x128xf32>
    %61 = arith.addf %58, %60 : vector<32x128xf32>
    %cst_61 = arith.constant 0.000000e+00 : f32
    %62 = vector.broadcast %cst_61 : f32 to vector<32x128xf32>
    %63 = arith.maximumf %61, %62 : vector<32x128xf32>
    %c0_62 = arith.constant 0 : index
    %c0_63 = arith.constant 0 : index
    %64 = vector.load %arg4[%c0_62, %c0_63] : memref<128x128xf32, #tpu.memory_space<vmem>>, vector<128x128xf32>
    %cst_64 = arith.constant dense<0.000000e+00> : vector<32x128xf32>
    %65 = tpu.matmul %63, %64, %cst_64 {dimension_numbers = #tpu.dot_dimension_numbers<[1], [0], [0], [1], [0, 0, 1, 1], [], []>} : vector<32x128xf32>, vector<128x128xf32>, vector<32x128xf32> -> vector<32x128xf32>
    %c0_65 = arith.constant 0 : index
    %c0_66 = arith.constant 0 : index
    %66 = vector.load %arg5[%c0_65, %c0_66] : memref<1x128xf32, #tpu.memory_space<vmem>>, vector<1x128xf32>
    %67 = vector.broadcast %66 : vector<1x128xf32> to vector<32x128xf32>
    %68 = arith.addf %65, %67 : vector<32x128xf32>
    %c0_67 = arith.constant 0 : index
    %c0_68 = arith.constant 0 : index
    %69 = vector.load %arg6[%c0_67, %c0_68] : memref<32x128xf32, #tpu.memory_space<vmem>>, vector<32x128xf32>
    tpu.vector_store %arg6[%c0_67, %c0_68], %68 {strides = array<i32>} : memref<32x128xf32, #tpu.memory_space<vmem>>, vector<32x128xf32>,
    return
  }
  func.func @transform_0(%arg0: i32) -> (i32, i32, i32) {
    %c0_i32 = arith.constant 0 : i32
    %c0_i32_0 = arith.constant 0 : i32
    %c0_i32_1 = arith.constant 0 : i32
    return %c0_i32, %arg0, %c0_i32_0 : i32, i32, i32
  }
  func.func @transform_1(%arg0: i32) -> (i32, i32, i32) {
    %c0_i32 = arith.constant 0 : i32
    %c0_i32_0 = arith.constant 0 : i32
    %c0_i32_1 = arith.constant 0 : i32
    %c0_i32_2 = arith.constant 0 : i32
    return %c0_i32, %c0_i32_0, %c0_i32_1 : i32, i32, i32
  }
  func.func @transform_2(%arg0: i32) -> (i32, i32) {
    %c0_i32 = arith.constant 0 : i32
    %c0_i32_0 = arith.constant 0 : i32
    %c0_i32_1 = arith.constant 0 : i32
    return %c0_i32, %c0_i32_0 : i32, i32
  }
  func.func @transform_3(%arg0: i32) -> (i32, i32) {
    %c0_i32 = arith.constant 0 : i32
    %c0_i32_0 = arith.constant 0 : i32
    %c0_i32_1 = arith.constant 0 : i32
    return %c0_i32, %c0_i32_0 : i32, i32
  }
  func.func @transform_4(%arg0: i32) -> (i32, i32) {
    %c0_i32 = arith.constant 0 : i32
    %c0_i32_0 = arith.constant 0 : i32
    %c0_i32_1 = arith.constant 0 : i32
    return %c0_i32, %c0_i32_0 : i32, i32
  }
  func.func @transform_5(%arg0: i32) -> (i32, i32) {
    %c0_i32 = arith.constant 0 : i32
    %c0_i32_0 = arith.constant 0 : i32
    return %arg0, %c0_i32 : i32, i32
  }
}

</mosaic_0001>

<llo_original>
// kernel: tiny_lateral_net_forward.2
$region0: #{tiny_lateral_net_forward.2}
  #allocation0 [shape = 'u32[]', space=smem, size = 0x4, offset = 0x4, fixed_abs, tag = 'smem constant byte address 0x4 - core index']
  #allocation1 [shape = 'u32[72,128]{1,0:T(1,128)}', space=vmem, size = 0x9000, scoped, tag = 'internal scratch']
  %s0 = inlined_call_operand.vmem [shape: bf16[4,9,6272], index: 0, kind: input, shape index: {}]
  %s1 = inlined_call_operand.vmem [shape: bf16[10,9], index: 1, kind: input, shape index: {}]
  %s2 = inlined_call_operand.vmem [shape: f32[10,1], index: 2, kind: input, shape index: {}]
  %s3 = inlined_call_operand.vmem [shape: f32[10,6272], index: 3, kind: output, shape index: {}]
  %s4 = sld [smem:[#allocation0]]
  $region22: #{tiny_lateral_net_forward.2} parent=0
    _
  %s6 = ssub.s32 1, %s4
  %s7 = scalar_select 0, %s6, %s4
  // Predicated region
  $region2: #{tiny_lateral_net_forward.2} parent=0 // pred_check
    _
  $region3: #{tiny_lateral_net_forward.2} parent=0 // pred_check_branch
    %9 = sbr.rel (0) target = $region5
  $region4: #{tiny_lateral_net_forward.2} parent=0 // pred_region
    _
  $region5: #{tiny_lateral_net_forward.2} parent=0 // pred_fallthru
    _
  // Predicated region
  $region6: #{tiny_lateral_net_forward.2} parent=0 // pred_check
    _
  $region7: #{tiny_lateral_net_forward.2} parent=0 // pred_check_branch
    %11 = sbr.rel (0) target = $region9
  $region8: #{tiny_lateral_net_forward.2} parent=0 // pred_region
    _
  $region9: #{tiny_lateral_net_forward.2} parent=0 // pred_fallthru
    _
  // Predicated region
  $region10: #{tiny_lateral_net_forward.2} parent=0 // pred_check
    _
  $region11: #{tiny_lateral_net_forward.2} parent=0 // pred_check_branch
    %13 = sbr.rel (0) target = $region13
  $region12: #{tiny_lateral_net_forward.2} parent=0 // pred_region
    _
  $region13: #{tiny_lateral_net_forward.2} parent=0 // pred_fallthru
    _
  %v15 = vld [vmem:[%s1] sm:$0xf]
  %v16 = vld [vmem:[%s1 + $0x4] sm:$0x1]
  %v17 = vld [vmem:[%s0] sm:$0xff]
  %v18 = vld [vmem:[%s0 + $0x8] sm:$0xff]
  %v19 = vld [vmem:[%s0 + $0x10] sm:$0xff]
  %v20 = vld [vmem:[%s0 + $0x18] sm:$0xff]
  %v21 = vld [vmem:[%s0 + $0x20] sm:$0xff]
  %v22 = vld [vmem:[%s0 + $0x28] sm:$0xff]
  %v23 = vld [vmem:[%s0 + $0x30] sm:$0xff]
  %v24 = vld [vmem:[%s0 + $0x38] sm:$0xff]
  %v25 = vld [vmem:[%s0 + $0x40] sm:$0xff]
  %v26 = vld [vmem:[%s0 + $0x48] sm:$0xff]
  %v27 = vld [vmem:[%s0 + $0x50] sm:$0xff]
  %v28 = vld [vmem:[%s0 + $0x58] sm:$0xff]
  %v29 = vld [vmem:[%s0 + $0x60] sm:$0xff]
  %v30 = vld [vmem:[%s0 + $0x68] sm:$0xff]
  %v31 = vld [vmem:[%s0 + $0x70] sm:$0xff]
  %v32 = vld [vmem:[%s0 + $0x78] sm:$0xff]
  %v33 = vld [vmem:[%s0 + $0x80] sm:$0xff]
  %v34 = vld [vmem:[%s0 + $0x88] sm:$0xff]
  %v35 = vld [vmem:[%s0 + $0x90] sm:$0xff]
  %v36 = vld [vmem:[%s0 + $0x98] sm:$0xff]
  %v37 = vld [vmem:[%s0 + $0xa0] sm:$0xff]
  %v38 = vld [vmem:[%s0 + $0xa8] sm:$0xff]
  %v39 = vld [vmem:[%s0 + $0xb0] sm:$0xff]
  %v40 = vld [vmem:[%s0 + $0xb8] sm:$0xff]
  %v41 = vld [vmem:[%s0 + $0xc0] sm:$0xf]
  %v42 = vld [vmem:[%s0 + $0xc4] sm:$0x11]
  %v43 = vld [vmem:[%s0 + $0xcc] sm:$0x11]
  %v44 = vld [vmem:[%s0 + $0xd4] sm:$0x11]
  %v45 = vld [vmem:[%s0 + $0xdc] sm:$0x11]
  %v46 = vld [vmem:[%s0 + $0xe4] sm:$0x11]
  %v47 = vld [vmem:[%s0 + $0xec] sm:$0x11]
  %v48 = vld [vmem:[%s0 + $0xf4] sm:$0x11]
  %v49 = vld [vmem:[%s0 + $0xfc] sm:$0x11]
  %v50 = vld [vmem:[%s0 + $0x104] sm:$0x11]
  %v51 = vld [vmem:[%s0 + $0x10c] sm:$0x11]
  %v52 = vld [vmem:[%s0 + $0x114] sm:$0x11]
  %v53 = vld [vmem:[%s0 + $0x11c] sm:$0x11]
  %v54 = vld [vmem:[%s0 + $0x124] sm:$0x11]
  %v55 = vld [vmem:[%s0 + $0x12c] sm:$0x11]
  %v56 = vld [vmem:[%s0 + $0x134] sm:$0x11]
  %v57 = vld [vmem:[%s0 + $0x13c] sm:$0x11]
  %v58 = vld [vmem:[%s0 + $0x144] sm:$0x11]
  %v59 = vld [vmem:[%s0 + $0x14c] sm:$0x11]
  %v60 = vld [vmem:[%s0 + $0x154] sm:$0x11]
  %v61 = vld [vmem:[%s0 + $0x15c] sm:$0x11]
  %v62 = vld [vmem:[%s0 + $0x164] sm:$0x11]
  %v63 = vld [vmem:[%s0 + $0x16c] sm:$0x11]
  %v64 = vld [vmem:[%s0 + $0x174] sm:$0x11]
  %v65 = vld [vmem:[%s0 + $0x17c] sm:$0x11]
  %v66 = vld [vmem:[%s0 + $0x184] sm:$0x1]
  %v69 = vunpack.c.l.b16 %v15
  %v70 = vunpack.c.l.b16 %v16
  %v71 = vpack.c.b16 %v70, %v69
  %v122 = vunpack.c.l.b16 %v17
  %v123 = vunpack.c.h.b16 %v17
  %v124 = vunpack.c.l.b16 %v18
  %v125 = vunpack.c.h.b16 %v18
  %v126 = vunpack.c.l.b16 %v19
  %v127 = vunpack.c.h.b16 %v19
  %v128 = vunpack.c.l.b16 %v20
  %v129 = vunpack.c.h.b16 %v20
  %v130 = vunpack.c.l.b16 %v21
  %v131 = vunpack.c.h.b16 %v21
  %v132 = vunpack.c.l.b16 %v22
  %v133 = vunpack.c.h.b16 %v22
  %v134 = vunpack.c.l.b16 %v23
  %v135 = vunpack.c.h.b16 %v23
  %v136 = vunpack.c.l.b16 %v24
  %v137 = vunpack.c.h.b16 %v24
  %v138 = vunpack.c.l.b16 %v25
  %v139 = vunpack.c.h.b16 %v25
  %v140 = vunpack.c.l.b16 %v26
  %v141 = vunpack.c.h.b16 %v26
  %v142 = vunpack.c.l.b16 %v27
  %v143 = vunpack.c.h.b16 %v27
  %v144 = vunpack.c.l.b16 %v28
  %v145 = vunpack.c.h.b16 %v28
  %v146 = vunpack.c.l.b16 %v29
  %v147 = vunpack.c.h.b16 %v29
  %v148 = vunpack.c.l.b16 %v30
  %v149 = vunpack.c.h.b16 %v30
  %v150 = vunpack.c.l.b16 %v31
  %v151 = vunpack.c.h.b16 %v31
  %v152 = vunpack.c.l.b16 %v32
  %v153 = vunpack.c.h.b16 %v32
  %v154 = vunpack.c.l.b16 %v33
  %v155 = vunpack.c.h.b16 %v33
  %v156 = vunpack.c.l.b16 %v34
  %v157 = vunpack.c.h.b16 %v34
  %v158 = vunpack.c.l.b16 %v35
  %v159 = vunpack.c.h.b16 %v35
  %v160 = vunpack.c.l.b16 %v36
  %v161 = vunpack.c.h.b16 %v36
  %v162 = vunpack.c.l.b16 %v37
  %v163 = vunpack.c.h.b16 %v37
  %v164 = vunpack.c.l.b16 %v38
  %v165 = vunpack.c.h.b16 %v38
  %v166 = vunpack.c.l.b16 %v39
  %v167 = vunpack.c.h.b16 %v39
  %v168 = vunpack.c.l.b16 %v40
  %v169 = vunpack.c.h.b16 %v40
  %v170 = vunpack.c.l.b16 %v41
  %v171 = vunpack.c.l.b16 %v42
  %v172 = vunpack.c.h.b16 %v42
  %v173 = vunpack.c.l.b16 %v43
  %v174 = vunpack.c.h.b16 %v43
  %v175 = vunpack.c.l.b16 %v44
  %v176 = vunpack.c.h.b16 %v44
  %v177 = vunpack.c.l.b16 %v45
  %v178 = vunpack.c.h.b16 %v45
  %v179 = vunpack.c.l.b16 %v46
  %v180 = vunpack.c.h.b16 %v46
  %v181 = vunpack.c.l.b16 %v47
  %v182 = vunpack.c.h.b16 %v47
  %v183 = vunpack.c.l.b16 %v48
  %v184 = vunpack.c.h.b16 %v48
  %v185 = vunpack.c.l.b16 %v49
  %v186 = vunpack.c.h.b16 %v49
  %v187 = vunpack.c.l.b16 %v50
  %v188 = vunpack.c.h.b16 %v50
  %v189 = vunpack.c.l.b16 %v51
  %v190 = vunpack.c.h.b16 %v51
  %v191 = vunpack.c.l.b16 %v52
  %v192 = vunpack.c.h.b16 %v52
  %v193 = vunpack.c.l.b16 %v53
  %v194 = vunpack.c.h.b16 %v53
  %v195 = vunpack.c.l.b16 %v54
  %v196 = vunpack.c.h.b16 %v54
  %v197 = vunpack.c.l.b16 %v55
  %v198 = vunpack.c.h.b16 %v55
  %v199 = vunpack.c.l.b16 %v56
  %v200 = vunpack.c.h.b16 %v56
  %v201 = vunpack.c.l.b16 %v57
  %v202 = vunpack.c.h.b16 %v57
  %v203 = vunpack.c.l.b16 %v58
  %v204 = vunpack.c.h.b16 %v58
  %v205 = vunpack.c.l.b16 %v59
  %v206 = vunpack.c.h.b16 %v59
  %v207 = vunpack.c.l.b16 %v60
  %v208 = vunpack.c.h.b16 %v60
  %v209 = vunpack.c.l.b16 %v61
  %v210 = vunpack.c.h.b16 %v61
  %v211 = vunpack.c.l.b16 %v62
  %v212 = vunpack.c.h.b16 %v62
  %v213 = vunpack.c.l.b16 %v63
  %v214 = vunpack.c.h.b16 %v63
  %v215 = vunpack.c.l.b16 %v64
  %v216 = vunpack.c.h.b16 %v64
  %v217 = vunpack.c.l.b16 %v65
  %v218 = vunpack.c.h.b16 %v65
  %v219 = vunpack.c.l.b16 %v66
  %v220 = vpack.c.b16 %v171, %v122
  %v221 = vpack.c.b16 %v172, %v123
  %v222 = vpack.c.b16 %v173, %v124
  %v223 = vpack.c.b16 %v174, %v125
  %v224 = vpack.c.b16 %v175, %v126
  %v225 = vpack.c.b16 %v176, %v127
  %v226 = vpack.c.b16 %v177, %v128
  %v227 = vpack.c.b16 %v178, %v129
  %v228 = vpack.c.b16 %v179, %v130
  %v229 = vpack.c.b16 %v180, %v131
  %v230 = vpack.c.b16 %v181, %v132
  %v231 = vpack.c.b16 %v182, %v133
  %v232 = vpack.c.b16 %v183, %v134
  %v233 = vpack.c.b16 %v184, %v135
  %v234 = vpack.c.b16 %v185, %v136
  %v235 = vpack.c.b16 %v186, %v137
  %v236 = vpack.c.b16 %v187, %v138
  %v237 = vpack.c.b16 %v188, %v139
  %v238 = vpack.c.b16 %v189, %v140
  %v239 = vpack.c.b16 %v190, %v141
  %v240 = vpack.c.b16 %v191, %v142
  %v241 = vpack.c.b16 %v192, %v143
  %v242 = vpack.c.b16 %v193, %v144
  %v243 = vpack.c.b16 %v194, %v145
  %v244 = vpack.c.b16 %v195, %v146
  %v245 = vpack.c.b16 %v196, %v147
  %v246 = vpack.c.b16 %v197, %v148
  %v247 = vpack.c.b16 %v198, %v149
  %v248 = vpack.c.b16 %v199, %v150
  %v249 = vpack.c.b16 %v200, %v151
  %v250 = vpack.c.b16 %v201, %v152
  %v251 = vpack.c.b16 %v202, %v153
  %v252 = vpack.c.b16 %v203, %v154
  %v253 = vpack.c.b16 %v204, %v155
  %v254 = vpack.c.b16 %v205, %v156
  %v255 = vpack.c.b16 %v206, %v157
  %v256 = vpack.c.b16 %v207, %v158
  %v257 = vpack.c.b16 %v208, %v159
  %v258 = vpack.c.b16 %v209, %v160
  %v259 = vpack.c.b16 %v210, %v161
  %v260 = vpack.c.b16 %v211, %v162
  %v261 = vpack.c.b16 %v212, %v163
  %v262 = vpack.c.b16 %v213, %v164
  %v263 = vpack.c.b16 %v214, %v165
  %v264 = vpack.c.b16 %v215, %v166
  %v265 = vpack.c.b16 %v216, %v167
  %v266 = vpack.c.b16 %v217, %v168
  %v267 = vpack.c.b16 %v218, %v169
  %v268 = vpack.c.b16 %v219, %v170
  %vm269 = vcmask 72704
  %v271 = vsel %vm269, %v71, 0
  %vm273 = vcmask 1043456
  %vm274 = vcmask 1044480
  %v275 = vsel %vm273, 4294967295, 65535
  %v276 = vsel %vm274, %v275, 0
  %v278 = vand.u32 %v220, %v276
  %v281 = vand.u32 %v221, %v276
  %v284 = vand.u32 %v222, %v276
  %v287 = vand.u32 %v223, %v276
  %v290 = vand.u32 %v224, %v276
  %v293 = vand.u32 %v225, %v276
  %v296 = vand.u32 %v226, %v276
  %v299 = vand.u32 %v227, %v276
  %v302 = vand.u32 %v228, %v276
  %v305 = vand.u32 %v229, %v276
  %v308 = vand.u32 %v230, %v276
  %v311 = vand.u32 %v231, %v276
  %v314 = vand.u32 %v232, %v276
  %v317 = vand.u32 %v233, %v276
  %v320 = vand.u32 %v234, %v276
  %v323 = vand.u32 %v235, %v276
  %v326 = vand.u32 %v236, %v276
  %v329 = vand.u32 %v237, %v276
  %v332 = vand.u32 %v238, %v276
  %v335 = vand.u32 %v239, %v276
  %v338 = vand.u32 %v240, %v276
  %v341 = vand.u32 %v241, %v276
  %v344 = vand.u32 %v242, %v276
  %v347 = vand.u32 %v243, %v276
  %v350 = vand.u32 %v244, %v276
  %v353 = vand.u32 %v245, %v276
  %v356 = vand.u32 %v246, %v276
  %v359 = vand.u32 %v247, %v276
  %v362 = vand.u32 %v248, %v276
  %v365 = vand.u32 %v249, %v276
  %v368 = vand.u32 %v250, %v276
  %v371 = vand.u32 %v251, %v276
  %v374 = vand.u32 %v252, %v276
  %v377 = vand.u32 %v253, %v276
  %v380 = vand.u32 %v254, %v276
  %v383 = vand.u32 %v255, %v276
  %v386 = vand.u32 %v256, %v276
  %v389 = vand.u32 %v257, %v276
  %v392 = vand.u32 %v258, %v276
  %v395 = vand.u32 %v259, %v276
  %v398 = vand.u32 %v260, %v276
  %v401 = vand.u32 %v261, %v276
  %v404 = vand.u32 %v262, %v276
  %v407 = vand.u32 %v263, %v276
  %v410 = vand.u32 %v264, %v276
  %v413 = vand.u32 %v265, %v276
  %v416 = vand.u32 %v266, %v276
  %v419 = vand.u32 %v267, %v276
  %v422 = vand.u32 %v268, %v276
  %424 = vmatpush.bf16.msra.mxu0 0
  %425 = vmatpush.bf16.msra.mxu0 0
  %426 = vmatpush.bf16.msra.mxu0 0
  %427 = vmatpush.bf16.msra.mxu0 0
  %428 = vmatpush.bf16.msra.mxu0 0
  %429 = vmatpush.bf16.msra.mxu0 0
  %430 = vmatpush.bf16.msra.mxu0 0
  %431 = vmatpush.bf16.msra.mxu0 %v278
  %432 = vmatmul.bf16.gmra.mxu0 %v271
  %v433 = vpop.f32.mrf.mxu0
  %v434 = vadd.f32 0.0, %v433
  %v435 = vpop.f32.mrf.mxu0
  %v436 = vadd.f32 0.0, %v435
  %437 = vdwg.mxu0
  %438 = vmatpush.bf16.msra.mxu0 0
  %439 = vmatpush.bf16.msra.mxu0 0
  %440 = vmatpush.bf16.msra.mxu0 0
  %441 = vmatpush.bf16.msra.mxu0 0
  %442 = vmatpush.bf16.msra.mxu0 0
  %443 = vmatpush.bf16.msra.mxu0 0
  %444 = vmatpush.bf16.msra.mxu0 0
  %445 = vmatpush.bf16.msra.mxu0 %v281
  %446 = vmatmul.bf16.gmra.mxu0 %v271
  %v447 = vpop.f32.mrf.mxu0
  %v448 = vadd.f32 0.0, %v447
  %v449 = vpop.f32.mrf.mxu0
  %v450 = vadd.f32 0.0, %v449
  %451 = vdwg.mxu0
  %452 = vmatpush.bf16.msra.mxu0 0
  %453 = vmatpush.bf16.msra.mxu0 0
  %454 = vmatpush.bf16.msra.mxu0 0
  %455 = vmatpush.bf16.msra.mxu0 0
  %456 = vmatpush.bf16.msra.mxu0 0
  %457 = vmatpush.bf16.msra.mxu0 0
  %458 = vmatpush.bf16.msra.mxu0 0
  %459 = vmatpush.bf16.msra.mxu0 %v284
  %460 = vmatmul.bf16.gmra.mxu0 %v271
  %v461 = vpop.f32.mrf.mxu0
  %v462 = vadd.f32 0.0, %v461
  %v463 = vpop.f32.mrf.mxu0
  %v464 = vadd.f32 0.0, %v463
  %465 = vdwg.mxu0
  %466 = vmatpush.bf16.msra.mxu0 0
  %467 = vmatpush.bf16.msra.mxu0 0
  %468 = vmatpush.bf16.msra.mxu0 0
  %469 = vmatpush.bf16.msra.mxu0 0
  %470 = vmatpush.bf16.msra.mxu0 0
  %471 = vmatpush.bf16.msra.mxu0 0
  %472 = vmatpush.bf16.msra.mxu0 0
  %473 = vmatpush.bf16.msra.mxu0 %v287
  %474 = vmatmul.bf16.gmra.mxu0 %v271
  %v475 = vpop.f32.mrf.mxu0
  %v476 = vadd.f32 0.0, %v475
  %v477 = vpop.f32.mrf.mxu0
  %v478 = vadd.f32 0.0, %v477
  %479 = vdwg.mxu0
  %480 = vmatpush.bf16.msra.mxu0 0
  %481 = vmatpush.bf16.msra.mxu0 0
  %482 = vmatpush.bf16.msra.mxu0 0
  %483 = vmatpush.bf16.msra.mxu0 0
  %484 = vmatpush.bf16.msra.mxu0 0
  %485 = vmatpush.bf16.msra.mxu0 0
  %486 = vmatpush.bf16.msra.mxu0 0
  %487 = vmatpush.bf16.msra.mxu0 %v290
  %488 = vmatmul.bf16.gmra.mxu0 %v271
  %v489 = vpop.f32.mrf.mxu0
  %v490 = vadd.f32 0.0, %v489
  %v491 = vpop.f32.mrf.mxu0
  %v492 = vadd.f32 0.0, %v491
  %493 = vdwg.mxu0
  %494 = vmatpush.bf16.msra.mxu0 0
  %495 = vmatpush.bf16.msra.mxu0 0
  %496 = vmatpush.bf16.msra.mxu0 0
  %497 = vmatpush.bf16.msra.mxu0 0
  %498 = vmatpush.bf16.msra.mxu0 0
  %499 = vmatpush.bf16.msra.mxu0 0
  %500 = vmatpush.bf16.msra.mxu0 0
  %501 = vmatpush.bf16.msra.mxu0 %v293
  %502 = vmatmul.bf16.gmra.mxu0 %v271
  %v503 = vpop.f32.mrf.mxu0
  %v504 = vadd.f32 0.0, %v503
  %v505 = vpop.f32.mrf.mxu0
  %v506 = vadd.f32 0.0, %v505
  %507 = vdwg.mxu0
  %508 = vmatpush.bf16.msra.mxu0 0
  %509 = vmatpush.bf16.msra.mxu0 0
  %510 = vmatpush.bf16.msra.mxu0 0
  %511 = vmatpush.bf16.msra.mxu0 0
  %512 = vmatpush.bf16.msra.mxu0 0
  %513 = vmatpush.bf16.msra.mxu0 0
  %514 = vmatpush.bf16.msra.mxu0 0
  %515 = vmatpush.bf16.msra.mxu0 %v296
  %516 = vmatmul.bf16.gmra.mxu0 %v271
  %v517 = vpop.f32.mrf.mxu0
  %v518 = vadd.f32 0.0, %v517
  %v519 = vpop.f32.mrf.mxu0
  %v520 = vadd.f32 0.0, %v519
  %521 = vdwg.mxu0
  %522 = vmatpush.bf16.msra.mxu0 0
  %523 = vmatpush.bf16.msra.mxu0 0
  %524 = vmatpush.bf16.msra.mxu0 0
  %525 = vmatpush.bf16.msra.mxu0 0
  %526 = vmatpush.bf16.msra.mxu0 0
  %527 = vmatpush.bf16.msra.mxu0 0
  %528 = vmatpush.bf16.msra.mxu0 0
  %529 = vmatpush.bf16.msra.mxu0 %v299
  %530 = vmatmul.bf16.gmra.mxu0 %v271
  %v531 = vpop.f32.mrf.mxu0
  %v532 = vadd.f32 0.0, %v531
  %v533 = vpop.f32.mrf.mxu0
  %v534 = vadd.f32 0.0, %v533
  %535 = vdwg.mxu0
  %536 = vmatpush.bf16.msra.mxu0 0
  %537 = vmatpush.bf16.msra.mxu0 0
  %538 = vmatpush.bf16.msra.mxu0 0
  %539 = vmatpush.bf16.msra.mxu0 0
  %540 = vmatpush.bf16.msra.mxu0 0
  %541 = vmatpush.bf16.msra.mxu0 0
  %542 = vmatpush.bf16.msra.mxu0 0
  %543 = vmatpush.bf16.msra.mxu0 %v302
  %544 = vmatmul.bf16.gmra.mxu0 %v271
  %v545 = vpop.f32.mrf.mxu0
  %v546 = vadd.f32 0.0, %v545
  %v547 = vpop.f32.mrf.mxu0
  %v548 = vadd.f32 0.0, %v547
  %549 = vdwg.mxu0
  %550 = vmatpush.bf16.msra.mxu0 0
  %551 = vmatpush.bf16.msra.mxu0 0
  %552 = vmatpush.bf16.msra.mxu0 0
  %553 = vmatpush.bf16.msra.mxu0 0
  %554 = vmatpush.bf16.msra.mxu0 0
  %555 = vmatpush.bf16.msra.mxu0 0
  %556 = vmatpush.bf16.msra.mxu0 0
  %557 = vmatpush.bf16.msra.mxu0 %v305
  %558 = vmatmul.bf16.gmra.mxu0 %v271
  %v559 = vpop.f32.mrf.mxu0
  %v560 = vadd.f32 0.0, %v559
  %v561 = vpop.f32.mrf.mxu0
  %v562 = vadd.f32 0.0, %v561
  %563 = vdwg.mxu0
  %564 = vmatpush.bf16.msra.mxu0 0
  %565 = vmatpush.bf16.msra.mxu0 0
  %566 = vmatpush.bf16.msra.mxu0 0
  %567 = vmatpush.bf16.msra.mxu0 0
  %568 = vmatpush.bf16.msra.mxu0 0
  %569 = vmatpush.bf16.msra.mxu0 0
  %570 = vmatpush.bf16.msra.mxu0 0
  %571 = vmatpush.bf16.msra.mxu0 %v308
  %572 = vmatmul.bf16.gmra.mxu0 %v271
  %v573 = vpop.f32.mrf.mxu0
  %v574 = vadd.f32 0.0, %v573
  %v575 = vpop.f32.mrf.mxu0
  %v576 = vadd.f32 0.0, %v575
  %577 = vdwg.mxu0
  %578 = vmatpush.bf16.msra.mxu0 0
  %579 = vmatpush.bf16.msra.mxu0 0
  %580 = vmatpush.bf16.msra.mxu0 0
  %581 = vmatpush.bf16.msra.mxu0 0
  %582 = vmatpush.bf16.msra.mxu0 0
  %583 = vmatpush.bf16.msra.mxu0 0
  %584 = vmatpush.bf16.msra.mxu0 0
  %585 = vmatpush.bf16.msra.mxu0 %v311
  %586 = vmatmul.bf16.gmra.mxu0 %v271
  %v587 = vpop.f32.mrf.mxu0
  %v588 = vadd.f32 0.0, %v587
  %v589 = vpop.f32.mrf.mxu0
  %v590 = vadd.f32 0.0, %v589
  %591 = vdwg.mxu0
  %592 = vmatpush.bf16.msra.mxu0 0
  %593 = vmatpush.bf16.msra.mxu0 0
  %594 = vmatpush.bf16.msra.mxu0 0
  %595 = vmatpush.bf16.msra.mxu0 0
  %596 = vmatpush.bf16.msra.mxu0 0
  %597 = vmatpush.bf16.msra.mxu0 0
  %598 = vmatpush.bf16.msra.mxu0 0
  %599 = vmatpush.bf16.msra.mxu0 %v314
  %600 = vmatmul.bf16.gmra.mxu0 %v271
  %v601 = vpop.f32.mrf.mxu0
  %v602 = vadd.f32 0.0, %v601
  %v603 = vpop.f32.mrf.mxu0
  %v604 = vadd.f32 0.0, %v603
  %605 = vdwg.mxu0
  %606 = vmatpush.bf16.msra.mxu0 0
  %607 = vmatpush.bf16.msra.mxu0 0
  %608 = vmatpush.bf16.msra.mxu0 0
  %609 = vmatpush.bf16.msra.mxu0 0
  %610 = vmatpush.bf16.msra.mxu0 0
  %611 = vmatpush.bf16.msra.mxu0 0
  %612 = vmatpush.bf16.msra.mxu0 0
  %613 = vmatpush.bf16.msra.mxu0 %v317
  %614 = vmatmul.bf16.gmra.mxu0 %v271
  %v615 = vpop.f32.mrf.mxu0
  %v616 = vadd.f32 0.0, %v615
  %v617 = vpop.f32.mrf.mxu0
  %v618 = vadd.f32 0.0, %v617
  %619 = vdwg.mxu0
  %620 = vmatpush.bf16.msra.mxu0 0
  %621 = vmatpush.bf16.msra.mxu0 0
  %622 = vmatpush.bf16.msra.mxu0 0
  %623 = vmatpush.bf16.msra.mxu0 0
  %624 = vmatpush.bf16.msra.mxu0 0
  %625 = vmatpush.bf16.msra.mxu0 0
  %626 = vmatpush.bf16.msra.mxu0 0
  %627 = vmatpush.bf16.msra.mxu0 %v320
  %628 = vmatmul.bf16.gmra.mxu0 %v271
  %v629 = vpop.f32.mrf.mxu0
  %v630 = vadd.f32 0.0, %v629
  %v631 = vpop.f32.mrf.mxu0
  %v632 = vadd.f32 0.0, %v631
  %633 = vdwg.mxu0
  %634 = vmatpush.bf16.msra.mxu0 0
  %635 = vmatpush.bf16.msra.mxu0 0
  %636 = vmatpush.bf16.msra.mxu0 0
  %637 = vmatpush.bf16.msra.mxu0 0
  %638 = vmatpush.bf16.msra.mxu0 0
  %639 = vmatpush.bf16.msra.mxu0 0
  %640 = vmatpush.bf16.msra.mxu0 0
  %641 = vmatpush.bf16.msra.mxu0 %v323
  %642 = vmatmul.bf16.gmra.mxu0 %v271
  %v643 = vpop.f32.mrf.mxu0
  %v644 = vadd.f32 0.0, %v643
  %v645 = vpop.f32.mrf.mxu0
  %v646 = vadd.f32 0.0, %v645
  %647 = vdwg.mxu0
  %648 = vmatpush.bf16.msra.mxu0 0
  %649 = vmatpush.bf16.msra.mxu0 0
  %650 = vmatpush.bf16.msra.mxu0 0
  %651 = vmatpush.bf16.msra.mxu0 0
  %652 = vmatpush.bf16.msra.mxu0 0
  %653 = vmatpush.bf16.msra.mxu0 0
  %654 = vmatpush.bf16.msra.mxu0 0
  %655 = vmatpush.bf16.msra.mxu0 %v326
  %656 = vmatmul.bf16.gmra.mxu0 %v271
  %v657 = vpop.f32.mrf.mxu0
  %v658 = vadd.f32 0.0, %v657
  %v659 = vpop.f32.mrf.mxu0
  %v660 = vadd.f32 0.0, %v659
  %661 = vdwg.mxu0
  %662 = vmatpush.bf16.msra.mxu0 0
  %663 = vmatpush.bf16.msra.mxu0 0
  %664 = vmatpush.bf16.msra.mxu0 0
  %665 = vmatpush.bf16.msra.mxu0 0
  %666 = vmatpush.bf16.msra.mxu0 0
  %667 = vmatpush.bf16.msra.mxu0 0
  %668 = vmatpush.bf16.msra.mxu0 0
  %669 = vmatpush.bf16.msra.mxu0 %v329
  %670 = vmatmul.bf16.gmra.mxu0 %v271
  %v671 = vpop.f32.mrf.mxu0
  %v672 = vadd.f32 0.0, %v671
  %v673 = vpop.f32.mrf.mxu0
  %v674 = vadd.f32 0.0, %v673
  %675 = vdwg.mxu0
  %676 = vmatpush.bf16.msra.mxu0 0
  %677 = vmatpush.bf16.msra.mxu0 0
  %678 = vmatpush.bf16.msra.mxu0 0
  %679 = vmatpush.bf16.msra.mxu0 0
  %680 = vmatpush.bf16.msra.mxu0 0
  %681 = vmatpush.bf16.msra.mxu0 0
  %682 = vmatpush.bf16.msra.mxu0 0
  %683 = vmatpush.bf16.msra.mxu0 %v332
  %684 = vmatmul.bf16.gmra.mxu0 %v271
  %v685 = vpop.f32.mrf.mxu0
  %v686 = vadd.f32 0.0, %v685
  %v687 = vpop.f32.mrf.mxu0
  %v688 = vadd.f32 0.0, %v687
  %689 = vdwg.mxu0
  %690 = vmatpush.bf16.msra.mxu0 0
  %691 = vmatpush.bf16.msra.mxu0 0
  %692 = vmatpush.bf16.msra.mxu0 0
  %693 = vmatpush.bf16.msra.mxu0 0
  %694 = vmatpush.bf16.msra.mxu0 0
  %695 = vmatpush.bf16.msra.mxu0 0
  %696 = vmatpush.bf16.msra.mxu0 0
  %697 = vmatpush.bf16.msra.mxu0 %v335
  %698 = vmatmul.bf16.gmra.mxu0 %v271
  %v699 = vpop.f32.mrf.mxu0
  %v700 = vadd.f32 0.0, %v699
  %v701 = vpop.f32.mrf.mxu0
  %v702 = vadd.f32 0.0, %v701
  %703 = vdwg.mxu0
  %704 = vmatpush.bf16.msra.mxu0 0
  %705 = vmatpush.bf16.msra.mxu0 0
  %706 = vmatpush.bf16.msra.mxu0 0
  %707 = vmatpush.bf16.msra.mxu0 0
  %708 = vmatpush.bf16.msra.mxu0 0
  %709 = vmatpush.bf16.msra.mxu0 0
  %710 = vmatpush.bf16.msra.mxu0 0
  %711 = vmatpush.bf16.msra.mxu0 %v338
  %712 = vmatmul.bf16.gmra.mxu0 %v271
  %v713 = vpop.f32.mrf.mxu0
  %v714 = vadd.f32 0.0, %v713
  %v715 = vpop.f32.mrf.mxu0
  %v716 = vadd.f32 0.0, %v715
  %717 = vdwg.mxu0
  %718 = vmatpush.bf16.msra.mxu0 0
  %719 = vmatpush.bf16.msra.mxu0 0
  %720 = vmatpush.bf16.msra.mxu0 0
  %721 = vmatpush.bf16.msra.mxu0 0
  %722 = vmatpush.bf16.msra.mxu0 0
  %723 = vmatpush.bf16.msra.mxu0 0
  %724 = vmatpush.bf16.msra.mxu0 0
  %725 = vmatpush.bf16.msra.mxu0 %v341
  %726 = vmatmul.bf16.gmra.mxu0 %v271
  %v727 = vpop.f32.mrf.mxu0
  %v728 = vadd.f32 0.0, %v727
  %v729 = vpop.f32.mrf.mxu0
  %v730 = vadd.f32 0.0, %v729
  %731 = vdwg.mxu0
  %732 = vmatpush.bf16.msra.mxu0 0
  %733 = vmatpush.bf16.msra.mxu0 0
  %734 = vmatpush.bf16.msra.mxu0 0
  %735 = vmatpush.bf16.msra.mxu0 0
  %736 = vmatpush.bf16.msra.mxu0 0
  %737 = vmatpush.bf16.msra.mxu0 0
  %738 = vmatpush.bf16.msra.mxu0 0
  %739 = vmatpush.bf16.msra.mxu0 %v344
  %740 = vmatmul.bf16.gmra.mxu0 %v271
  %v741 = vpop.f32.mrf.mxu0
  %v742 = vadd.f32 0.0, %v741
  %v743 = vpop.f32.mrf.mxu0
  %v744 = vadd.f32 0.0, %v743
  %745 = vdwg.mxu0
  %746 = vmatpush.bf16.msra.mxu0 0
  %747 = vmatpush.bf16.msra.mxu0 0
  %748 = vmatpush.bf16.msra.mxu0 0
  %749 = vmatpush.bf16.msra.mxu0 0
  %750 = vmatpush.bf16.msra.mxu0 0
  %751 = vmatpush.bf16.msra.mxu0 0
  %752 = vmatpush.bf16.msra.mxu0 0
  %753 = vmatpush.bf16.msra.mxu0 %v347
  %754 = vmatmul.bf16.gmra.mxu0 %v271
  %v755 = vpop.f32.mrf.mxu0
  %v756 = vadd.f32 0.0, %v755
  %v757 = vpop.f32.mrf.mxu0
  %v758 = vadd.f32 0.0, %v757
  %759 = vdwg.mxu0
  %760 = vmatpush.bf16.msra.mxu0 0
  %761 = vmatpush.bf16.msra.mxu0 0
  %762 = vmatpush.bf16.msra.mxu0 0
  %763 = vmatpush.bf16.msra.mxu0 0
  %764 = vmatpush.bf16.msra.mxu0 0
  %765 = vmatpush.bf16.msra.mxu0 0
  %766 = vmatpush.bf16.msra.mxu0 0
  %767 = vmatpush.bf16.msra.mxu0 %v350
  %768 = vmatmul.bf16.gmra.mxu0 %v271
  %v769 = vpop.f32.mrf.mxu0
  %v770 = vadd.f32 0.0, %v769
  %v771 = vpop.f32.mrf.mxu0
  %v772 = vadd.f32 0.0, %v771
  %773 = vdwg.mxu0
  %774 = vmatpush.bf16.msra.mxu0 0
  %775 = vmatpush.bf16.msra.mxu0 0
  %776 = vmatpush.bf16.msra.mxu0 0
  %777 = vmatpush.bf16.msra.mxu0 0
  %778 = vmatpush.bf16.msra.mxu0 0
  %779 = vmatpush.bf16.msra.mxu0 0
  %780 = vmatpush.bf16.msra.mxu0 0
  %781 = vmatpush.bf16.msra.mxu0 %v353
  %782 = vmatmul.bf16.gmra.mxu0 %v271
  %v783 = vpop.f32.mrf.mxu0
  %v784 = vadd.f32 0.0, %v783
  %v785 = vpop.f32.mrf.mxu0
  %v786 = vadd.f32 0.0, %v785
  %787 = vdwg.mxu0
  %788 = vmatpush.bf16.msra.mxu0 0
  %789 = vmatpush.bf16.msra.mxu0 0
  %790 = vmatpush.bf16.msra.mxu0 0
  %791 = vmatpush.bf16.msra.mxu0 0
  %792 = vmatpush.bf16.msra.mxu0 0
  %793 = vmatpush.bf16.msra.mxu0 0
  %794 = vmatpush.bf16.msra.mxu0 0
  %795 = vmatpush.bf16.msra.mxu0 %v356
  %796 = vmatmul.bf16.gmra.mxu0 %v271
  %v797 = vpop.f32.mrf.mxu0
  %v798 = vadd.f32 0.0, %v797
  %v799 = vpop.f32.mrf.mxu0
  %v800 = vadd.f32 0.0, %v799
  %801 = vdwg.mxu0
  %802 = vmatpush.bf16.msra.mxu0 0
  %803 = vmatpush.bf16.msra.mxu0 0
  %804 = vmatpush.bf16.msra.mxu0 0
  %805 = vmatpush.bf16.msra.mxu0 0
  %806 = vmatpush.bf16.msra.mxu0 0
  %807 = vmatpush.bf16.msra.mxu0 0
  %808 = vmatpush.bf16.msra.mxu0 0
  %809 = vmatpush.bf16.msra.mxu0 %v359
  %810 = vmatmul.bf16.gmra.mxu0 %v271
  %v811 = vpop.f32.mrf.mxu0
  %v812 = vadd.f32 0.0, %v811
  %v813 = vpop.f32.mrf.mxu0
  %v814 = vadd.f32 0.0, %v813
  %815 = vdwg.mxu0
  %816 = vmatpush.bf16.msra.mxu0 0
  %817 = vmatpush.bf16.msra.mxu0 0
  %818 = vmatpush.bf16.msra.mxu0 0
  %819 = vmatpush.bf16.msra.mxu0 0
  %820 = vmatpush.bf16.msra.mxu0 0
  %821 = vmatpush.bf16.msra.mxu0 0
  %822 = vmatpush.bf16.msra.mxu0 0
  %823 = vmatpush.bf16.msra.mxu0 %v362
  %824 = vmatmul.bf16.gmra.mxu0 %v271
  %v825 = vpop.f32.mrf.mxu0
  %v826 = vadd.f32 0.0, %v825
  %v827 = vpop.f32.mrf.mxu0
  %v828 = vadd.f32 0.0, %v827
  %829 = vdwg.mxu0
  %830 = vmatpush.bf16.msra.mxu0 0
  %831 = vmatpush.bf16.msra.mxu0 0
  %832 = vmatpush.bf16.msra.mxu0 0
  %833 = vmatpush.bf16.msra.mxu0 0
  %834 = vmatpush.bf16.msra.mxu0 0
  %835 = vmatpush.bf16.msra.mxu0 0
  %836 = vmatpush.bf16.msra.mxu0 0
  %837 = vmatpush.bf16.msra.mxu0 %v365
  %838 = vmatmul.bf16.gmra.mxu0 %v271
  %v839 = vpop.f32.mrf.mxu0
  %v840 = vadd.f32 0.0, %v839
  %v841 = vpop.f32.mrf.mxu0
  %v842 = vadd.f32 0.0, %v841
  %843 = vdwg.mxu0
  %844 = vmatpush.bf16.msra.mxu0 0
  %845 = vmatpush.bf16.msra.mxu0 0
  %846 = vmatpush.bf16.msra.mxu0 0
  %847 = vmatpush.bf16.msra.mxu0 0
  %848 = vmatpush.bf16.msra.mxu0 0
  %849 = vmatpush.bf16.msra.mxu0 0
  %850 = vmatpush.bf16.msra.mxu0 0
  %851 = vmatpush.bf16.msra.mxu0 %v368
  %852 = vmatmul.bf16.gmra.mxu0 %v271
  %v853 = vpop.f32.mrf.mxu0
  %v854 = vadd.f32 0.0, %v853
  %v855 = vpop.f32.mrf.mxu0
  %v856 = vadd.f32 0.0, %v855
  %857 = vdwg.mxu0
  %858 = vmatpush.bf16.msra.mxu0 0
  %859 = vmatpush.bf16.msra.mxu0 0
  %860 = vmatpush.bf16.msra.mxu0 0
  %861 = vmatpush.bf16.msra.mxu0 0
  %862 = vmatpush.bf16.msra.mxu0 0
  %863 = vmatpush.bf16.msra.mxu0 0
  %864 = vmatpush.bf16.msra.mxu0 0
  %865 = vmatpush.bf16.msra.mxu0 %v371
  %866 = vmatmul.bf16.gmra.mxu0 %v271
  %v867 = vpop.f32.mrf.mxu0
  %v868 = vadd.f32 0.0, %v867
  %v869 = vpop.f32.mrf.mxu0
  %v870 = vadd.f32 0.0, %v869
  %871 = vdwg.mxu0
  %872 = vmatpush.bf16.msra.mxu0 0
  %873 = vmatpush.bf16.msra.mxu0 0
  %874 = vmatpush.bf16.msra.mxu0 0
  %875 = vmatpush.bf16.msra.mxu0 0
  %876 = vmatpush.bf16.msra.mxu0 0
  %877 = vmatpush.bf16.msra.mxu0 0
  %878 = vmatpush.bf16.msra.mxu0 0
  %879 = vmatpush.bf16.msra.mxu0 %v374
  %880 = vmatmul.bf16.gmra.mxu0 %v271
  %v881 = vpop.f32.mrf.mxu0
  %v882 = vadd.f32 0.0, %v881
  %v883 = vpop.f32.mrf.mxu0
  %v884 = vadd.f32 0.0, %v883
  %885 = vdwg.mxu0
  %886 = vmatpush.bf16.msra.mxu0 0
  %887 = vmatpush.bf16.msra.mxu0 0
  %888 = vmatpush.bf16.msra.mxu0 0
  %889 = vmatpush.bf16.msra.mxu0 0
  %890 = vmatpush.bf16.msra.mxu0 0
  %891 = vmatpush.bf16.msra.mxu0 0
  %892 = vmatpush.bf16.msra.mxu0 0
  %893 = vmatpush.bf16.msra.mxu0 %v377
  %894 = vmatmul.bf16.gmra.mxu0 %v271
  %v895 = vpop.f32.mrf.mxu0
  %v896 = vadd.f32 0.0, %v895
  %v897 = vpop.f32.mrf.mxu0
  %v898 = vadd.f32 0.0, %v897
  %899 = vdwg.mxu0
  %900 = vmatpush.bf16.msra.mxu0 0
  %901 = vmatpush.bf16.msra.mxu0 0
  %902 = vmatpush.bf16.msra.mxu0 0
  %903 = vmatpush.bf16.msra.mxu0 0
  %904 = vmatpush.bf16.msra.mxu0 0
  %905 = vmatpush.bf16.msra.mxu0 0
  %906 = vmatpush.bf16.msra.mxu0 0
  %907 = vmatpush.bf16.msra.mxu0 %v380
  %908 = vmatmul.bf16.gmra.mxu0 %v271
  %v909 = vpop.f32.mrf.mxu0
  %v910 = vadd.f32 0.0, %v909
  %v911 = vpop.f32.mrf.mxu0
  %v912 = vadd.f32 0.0, %v911
  %913 = vdwg.mxu0
  %914 = vmatpush.bf16.msra.mxu0 0
  %915 = vmatpush.bf16.msra.mxu0 0
  %916 = vmatpush.bf16.msra.mxu0 0
  %917 = vmatpush.bf16.msra.mxu0 0
  %918 = vmatpush.bf16.msra.mxu0 0
  %919 = vmatpush.bf16.msra.mxu0 0
  %920 = vmatpush.bf16.msra.mxu0 0
  %921 = vmatpush.bf16.msra.mxu0 %v383
  %922 = vmatmul.bf16.gmra.mxu0 %v271
  %v923 = vpop.f32.mrf.mxu0
  %v924 = vadd.f32 0.0, %v923
  %v925 = vpop.f32.mrf.mxu0
  %v926 = vadd.f32 0.0, %v925
  %927 = vdwg.mxu0
  %928 = vmatpush.bf16.msra.mxu0 0
  %929 = vmatpush.bf16.msra.mxu0 0
  %930 = vmatpush.bf16.msra.mxu0 0
  %931 = vmatpush.bf16.msra.mxu0 0
  %932 = vmatpush.bf16.msra.mxu0 0
  %933 = vmatpush.bf16.msra.mxu0 0
  %934 = vmatpush.bf16.msra.mxu0 0
  %935 = vmatpush.bf16.msra.mxu0 %v386
  %936 = vmatmul.bf16.gmra.mxu0 %v271
  %v937 = vpop.f32.mrf.mxu0
  %v938 = vadd.f32 0.0, %v937
  %v939 = vpop.f32.mrf.mxu0
  %v940 = vadd.f32 0.0, %v939
  %941 = vdwg.mxu0
  %942 = vmatpush.bf16.msra.mxu0 0
  %943 = vmatpush.bf16.msra.mxu0 0
  %944 = vmatpush.bf16.msra.mxu0 0
  %945 = vmatpush.bf16.msra.mxu0 0
  %946 = vmatpush.bf16.msra.mxu0 0
  %947 = vmatpush.bf16.msra.mxu0 0
  %948 = vmatpush.bf16.msra.mxu0 0
  %949 = vmatpush.bf16.msra.mxu0 %v389
  %950 = vmatmul.bf16.gmra.mxu0 %v271
  %v951 = vpop.f32.mrf.mxu0
  %v952 = vadd.f32 0.0, %v951
  %v953 = vpop.f32.mrf.mxu0
  %v954 = vadd.f32 0.0, %v953
  %955 = vdwg.mxu0
  %956 = vmatpush.bf16.msra.mxu0 0
  %957 = vmatpush.bf16.msra.mxu0 0
  %958 = vmatpush.bf16.msra.mxu0 0
  %959 = vmatpush.bf16.msra.mxu0 0
  %960 = vmatpush.bf16.msra.mxu0 0
  %961 = vmatpush.bf16.msra.mxu0 0
  %962 = vmatpush.bf16.msra.mxu0 0
  %963 = vmatpush.bf16.msra.mxu0 %v392
  %964 = vmatmul.bf16.gmra.mxu0 %v271
  %v965 = vpop.f32.mrf.mxu0
  %v966 = vadd.f32 0.0, %v965
  %v967 = vpop.f32.mrf.mxu0
  %v968 = vadd.f32 0.0, %v967
  %969 = vdwg.mxu0
  %970 = vmatpush.bf16.msra.mxu0 0
  %971 = vmatpush.bf16.msra.mxu0 0
  %972 = vmatpush.bf16.msra.mxu0 0
  %973 = vmatpush.bf16.msra.mxu0 0
  %974 = vmatpush.bf16.msra.mxu0 0
  %975 = vmatpush.bf16.msra.mxu0 0
  %976 = vmatpush.bf16.msra.mxu0 0
  %977 = vmatpush.bf16.msra.mxu0 %v395
  %978 = vmatmul.bf16.gmra.mxu0 %v271
  %v979 = vpop.f32.mrf.mxu0
  %v980 = vadd.f32 0.0, %v979
  %v981 = vpop.f32.mrf.mxu0
  %v982 = vadd.f32 0.0, %v981
  %983 = vdwg.mxu0
  %984 = vmatpush.bf16.msra.mxu0 0
  %985 = vmatpush.bf16.msra.mxu0 0
  %986 = vmatpush.bf16.msra.mxu0 0
  %987 = vmatpush.bf16.msra.mxu0 0
  %988 = vmatpush.bf16.msra.mxu0 0
  %989 = vmatpush.bf16.msra.mxu0 0
  %990 = vmatpush.bf16.msra.mxu0 0
  %991 = vmatpush.bf16.msra.mxu0 %v398
  %992 = vmatmul.bf16.gmra.mxu0 %v271
  %v993 = vpop.f32.mrf.mxu0
  %v994 = vadd.f32 0.0, %v993
  %v995 = vpop.f32.mrf.mxu0
  %v996 = vadd.f32 0.0, %v995
  %997 = vdwg.mxu0
  %998 = vmatpush.bf16.msra.mxu0 0
  %999 = vmatpush.bf16.msra.mxu0 0
  %1000 = vmatpush.bf16.msra.mxu0 0
  %1001 = vmatpush.bf16.msra.mxu0 0
  %1002 = vmatpush.bf16.msra.mxu0 0
  %1003 = vmatpush.bf16.msra.mxu0 0
  %1004 = vmatpush.bf16.msra.mxu0 0
  %1005 = vmatpush.bf16.msra.mxu0 %v401
  %1006 = vmatmul.bf16.gmra.mxu0 %v271
  %v1007 = vpop.f32.mrf.mxu0
  %v1008 = vadd.f32 0.0, %v1007
  %v1009 = vpop.f32.mrf.mxu0
  %v1010 = vadd.f32 0.0, %v1009
  %1011 = vdwg.mxu0
  %1012 = vmatpush.bf16.msra.mxu0 0
  %1013 = vmatpush.bf16.msra.mxu0 0
  %1014 = vmatpush.bf16.msra.mxu0 0
  %1015 = vmatpush.bf16.msra.mxu0 0
  %1016 = vmatpush.bf16.msra.mxu0 0
  %1017 = vmatpush.bf16.msra.mxu0 0
  %1018 = vmatpush.bf16.msra.mxu0 0
  %1019 = vmatpush.bf16.msra.mxu0 %v404
  %1020 = vmatmul.bf16.gmra.mxu0 %v271
  %v1021 = vpop.f32.mrf.mxu0
  %v1022 = vadd.f32 0.0, %v1021
  %v1023 = vpop.f32.mrf.mxu0
  %v1024 = vadd.f32 0.0, %v1023
  %1025 = vdwg.mxu0
  %1026 = vmatpush.bf16.msra.mxu0 0
  %1027 = vmatpush.bf16.msra.mxu0 0
  %1028 = vmatpush.bf16.msra.mxu0 0
  %1029 = vmatpush.bf16.msra.mxu0 0
  %1030 = vmatpush.bf16.msra.mxu0 0
  %1031 = vmatpush.bf16.msra.mxu0 0
  %1032 = vmatpush.bf16.msra.mxu0 0
  %1033 = vmatpush.bf16.msra.mxu0 %v407
  %1034 = vmatmul.bf16.gmra.mxu0 %v271
  %v1035 = vpop.f32.mrf.mxu0
  %v1036 = vadd.f32 0.0, %v1035
  %v1037 = vpop.f32.mrf.mxu0
  %v1038 = vadd.f32 0.0, %v1037
  %1039 = vdwg.mxu0
  %1040 = vmatpush.bf16.msra.mxu0 0
  %1041 = vmatpush.bf16.msra.mxu0 0
  %1042 = vmatpush.bf16.msra.mxu0 0
  %1043 = vmatpush.bf16.msra.mxu0 0
  %1044 = vmatpush.bf16.msra.mxu0 0
  %1045 = vmatpush.bf16.msra.mxu0 0
  %1046 = vmatpush.bf16.msra.mxu0 0
  %1047 = vmatpush.bf16.msra.mxu0 %v410
  %1048 = vmatmul.bf16.gmra.mxu0 %v271
  %v1049 = vpop.f32.mrf.mxu0
  %v1050 = vadd.f32 0.0, %v1049
  %v1051 = vpop.f32.mrf.mxu0
  %v1052 = vadd.f32 0.0, %v1051
  %1053 = vdwg.mxu0
  %1054 = vmatpush.bf16.msra.mxu0 0
  %1055 = vmatpush.bf16.msra.mxu0 0
  %1056 = vmatpush.bf16.msra.mxu0 0
  %1057 = vmatpush.bf16.msra.mxu0 0
  %1058 = vmatpush.bf16.msra.mxu0 0
  %1059 = vmatpush.bf16.msra.mxu0 0
  %1060 = vmatpush.bf16.msra.mxu0 0
  %1061 = vmatpush.bf16.msra.mxu0 %v413
  %1062 = vmatmul.bf16.gmra.mxu0 %v271
  %v1063 = vpop.f32.mrf.mxu0
  %v1064 = vadd.f32 0.0, %v1063
  %v1065 = vpop.f32.mrf.mxu0
  %v1066 = vadd.f32 0.0, %v1065
  %1067 = vdwg.mxu0
  %1068 = vmatpush.bf16.msra.mxu0 0
  %1069 = vmatpush.bf16.msra.mxu0 0
  %1070 = vmatpush.bf16.msra.mxu0 0
  %1071 = vmatpush.bf16.msra.mxu0 0
  %1072 = vmatpush.bf16.msra.mxu0 0
  %1073 = vmatpush.bf16.msra.mxu0 0
  %1074 = vmatpush.bf16.msra.mxu0 0
  %1075 = vmatpush.bf16.msra.mxu0 %v416
  %1076 = vmatmul.bf16.gmra.mxu0 %v271
  %v1077 = vpop.f32.mrf.mxu0
  %v1078 = vadd.f32 0.0, %v1077
  %v1079 = vpop.f32.mrf.mxu0
  %v1080 = vadd.f32 0.0, %v1079
  %1081 = vdwg.mxu0
  %1082 = vmatpush.bf16.msra.mxu0 0
  %1083 = vmatpush.bf16.msra.mxu0 0
  %1084 = vmatpush.bf16.msra.mxu0 0
  %1085 = vmatpush.bf16.msra.mxu0 0
  %1086 = vmatpush.bf16.msra.mxu0 0
  %1087 = vmatpush.bf16.msra.mxu0 0
  %1088 = vmatpush.bf16.msra.mxu0 0
  %1089 = vmatpush.bf16.msra.mxu0 %v419
  %1090 = vmatmul.bf16.gmra.mxu0 %v271
  %v1091 = vpop.f32.mrf.mxu0
  %v1092 = vadd.f32 0.0, %v1091
  %v1093 = vpop.f32.mrf.mxu0
  %v1094 = vadd.f32 0.0, %v1093
  %1095 = vdwg.mxu0
  %1096 = vmatpush.bf16.msra.mxu0 0
  %1097 = vmatpush.bf16.msra.mxu0 0
  %1098 = vmatpush.bf16.msra.mxu0 0
  %1099 = vmatpush.bf16.msra.mxu0 0
  %1100 = vmatpush.bf16.msra.mxu0 0
  %1101 = vmatpush.bf16.msra.mxu0 0
  %1102 = vmatpush.bf16.msra.mxu0 0
  %1103 = vmatpush.bf16.msra.mxu0 %v422
  %1104 = vmatmul.bf16.gmra.mxu0 %v271
  %v1105 = vpop.f32.mrf.mxu0
  %v1106 = vadd.f32 0.0, %v1105
  %v1107 = vpop.f32.mrf.mxu0
  %v1108 = vadd.f32 0.0, %v1107
  %1109 = vdwg.mxu0
  %s1110 = scalar_lea.vmem %s0, 392
  %v1111 = vld [vmem:[%s1110] sm:$0xff]
  %v1112 = vld [vmem:[%s1110 + $0x8] sm:$0xff]
  %v1113 = vld [vmem:[%s1110 + $0x10] sm:$0xff]
  %v1114 = vld [vmem:[%s1110 + $0x18] sm:$0xff]
  %v1115 = vld [vmem:[%s1110 + $0x20] sm:$0xff]
  %v1116 = vld [vmem:[%s1110 + $0x28] sm:$0xff]
  %v1117 = vld [vmem:[%s1110 + $0x30] sm:$0xff]
  %v1118 = vld [vmem:[%s1110 + $0x38] sm:$0xff]
  %v1119 = vld [vmem:[%s1110 + $0x40] sm:$0xff]
  %v1120 = vld [vmem:[%s1110 + $0x48] sm:$0xff]
  %v1121 = vld [vmem:[%s1110 + $0x50] sm:$0xff]
  %v1122 = vld [vmem:[%s1110 + $0x58] sm:$0xff]
  %v1123 = vld [vmem:[%s1110 + $0x60] sm:$0xff]
  %v1124 = vld [vmem:[%s1110 + $0x68] sm:$0xff]
  %v1125 = vld [vmem:[%s1110 + $0x70] sm:$0xff]
  %v1126 = vld [vmem:[%s1110 + $0x78] sm:$0xff]
  %v1127 = vld [vmem:[%s1110 + $0x80] sm:$0xff]
  %v1128 = vld [vmem:[%s1110 + $0x88] sm:$0xff]
  %v1129 = vld [vmem:[%s1110 + $0x90] sm:$0xff]
  %v1130 = vld [vmem:[%s1110 + $0x98] sm:$0xff]
  %v1131 = vld [vmem:[%s1110 + $0xa0] sm:$0xff]
  %v1132 = vld [vmem:[%s1110 + $0xa8] sm:$0xff]
  %v1133 = vld [vmem:[%s1110 + $0xb0] sm:$0xff]
  %v1134 = vld [vmem:[%s1110 + $0xb8] sm:$0xff]
  %v1135 = vld [vmem:[%s1110 + $0xc0] sm:$0xf]
  %v1136 = vld [vmem:[%s1110 + $0xc4] sm:$0x11]
  %v1137 = vld [vmem:[%s1110 + $0xcc] sm:$0x11]
  %v1138 = vld [vmem:[%s1110 + $0xd4] sm:$0x11]
  %v1139 = vld [vmem:[%s1110 + $0xdc] sm:$0x11]
  %v1140 = vld [vmem:[%s1110 + $0xe4] sm:$0x11]
  %v1141 = vld [vmem:[%s1110 + $0xec] sm:$0x11]
  %v1142 = vld [vmem:[%s1110 + $0xf4] sm:$0x11]
  %v1143 = vld [vmem:[%s1110 + $0xfc] sm:$0x11]
  %v1144 = vld [vmem:[%s1110 + $0x104] sm:$0x11]
  %v1145 = vld [vmem:[%s1110 + $0x10c] sm:$0x11]
  %v1146 = vld [vmem:[%s1110 + $0x114] sm:$0x11]
  %v1147 = vld [vmem:[%s1110 + $0x11c] sm:$0x11]
  %v1148 = vld [vmem:[%s1110 + $0x124] sm:$0x11]
  %v1149 = vld [vmem:[%s1110 + $0x12c] sm:$0x11]
  %v1150 = vld [vmem:[%s1110 + $0x134] sm:$0x11]
  %v1151 = vld [vmem:[%s1110 + $0x13c] sm:$0x11]
  %v1152 = vld [vmem:[%s1110 + $0x144] sm:$0x11]
  %v1153 = vld [vmem:[%s1110 + $0x14c] sm:$0x11]
  %v1154 = vld [vmem:[%s1110 + $0x154] sm:$0x11]
  %v1155 = vld [vmem:[%s1110 + $0x15c] sm:$0x11]
  %v1156 = vld [vmem:[%s1110 + $0x164] sm:$0x11]
  %v1157 = vld [vmem:[%s1110 + $0x16c] sm:$0x11]
  %v1158 = vld [vmem:[%s1110 + $0x174] sm:$0x11]
  %v1159 = vld [vmem:[%s1110 + $0x17c] sm:$0x11]
  %v1160 = vld [vmem:[%s1110 + $0x184] sm:$0x1]
  %v1211 = vunpack.c.l.b16 %v1111
  %v1212 = vunpack.c.h.b16 %v1111
  %v1213 = vunpack.c.l.b16 %v1112
  %v1214 = vunpack.c.h.b16 %v1112
  %v1215 = vunpack.c.l.b16 %v1113
  %v1216 = vunpack.c.h.b16 %v1113
  %v1217 = vunpack.c.l.b16 %v1114
  %v1218 = vunpack.c.h.b16 %v1114
  %v1219 = vunpack.c.l.b16 %v1115
  %v1220 = vunpack.c.h.b16 %v1115
  %v1221 = vunpack.c.l.b16 %v1116
  %v1222 = vunpack.c.h.b16 %v1116
  %v1223 = vunpack.c.l.b16 %v1117
  %v1224 = vunpack.c.h.b16 %v1117
  %v1225 = vunpack.c.l.b16 %v1118
  %v1226 = vunpack.c.h.b16 %v1118
  %v1227 = vunpack.c.l.b16 %v1119
  %v1228 = vunpack.c.h.b16 %v1119
  %v1229 = vunpack.c.l.b16 %v1120
  %v1230 = vunpack.c.h.b16 %v1120
  %v1231 = vunpack.c.l.b16 %v1121
  %v1232 = vunpack.c.h.b16 %v1121
  %v1233 = vunpack.c.l.b16 %v1122
  %v1234 = vunpack.c.h.b16 %v1122
  %v1235 = vunpack.c.l.b16 %v1123
  %v1236 = vunpack.c.h.b16 %v1123
  %v1237 = vunpack.c.l.b16 %v1124
  %v1238 = vunpack.c.h.b16 %v1124
  %v1239 = vunpack.c.l.b16 %v1125
  %v1240 = vunpack.c.h.b16 %v1125
  %v1241 = vunpack.c.l.b16 %v1126
  %v1242 = vunpack.c.h.b16 %v1126
  %v1243 = vunpack.c.l.b16 %v1127
  %v1244 = vunpack.c.h.b16 %v1127
  %v1245 = vunpack.c.l.b16 %v1128
  %v1246 = vunpack.c.h.b16 %v1128
  %v1247 = vunpack.c.l.b16 %v1129
  %v1248 = vunpack.c.h.b16 %v1129
  %v1249 = vunpack.c.l.b16 %v1130
  %v1250 = vunpack.c.h.b16 %v1130
  %v1251 = vunpack.c.l.b16 %v1131
  %v1252 = vunpack.c.h.b16 %v1131
  %v1253 = vunpack.c.l.b16 %v1132
  %v1254 = vunpack.c.h.b16 %v1132
  %v1255 = vunpack.c.l.b16 %v1133
  %v1256 = vunpack.c.h.b16 %v1133
  %v1257 = vunpack.c.l.b16 %v1134
  %v1258 = vunpack.c.h.b16 %v1134
  %v1259 = vunpack.c.l.b16 %v1135
  %v1260 = vunpack.c.l.b16 %v1136
  %v1261 = vunpack.c.h.b16 %v1136
  %v1262 = vunpack.c.l.b16 %v1137
  %v1263 = vunpack.c.h.b16 %v1137
  %v1264 = vunpack.c.l.b16 %v1138
  %v1265 = vunpack.c.h.b16 %v1138
  %v1266 = vunpack.c.l.b16 %v1139
  %v1267 = vunpack.c.h.b16 %v1139
  %v1268 = vunpack.c.l.b16 %v1140
  %v1269 = vunpack.c.h.b16 %v1140
  %v1270 = vunpack.c.l.b16 %v1141
  %v1271 = vunpack.c.h.b16 %v1141
  %v1272 = vunpack.c.l.b16 %v1142
  %v1273 = vunpack.c.h.b16 %v1142
  %v1274 = vunpack.c.l.b16 %v1143
  %v1275 = vunpack.c.h.b16 %v1143
  %v1276 = vunpack.c.l.b16 %v1144
  %v1277 = vunpack.c.h.b16 %v1144
  %v1278 = vunpack.c.l.b16 %v1145
  %v1279 = vunpack.c.h.b16 %v1145
  %v1280 = vunpack.c.l.b16 %v1146
  %v1281 = vunpack.c.h.b16 %v1146
  %v1282 = vunpack.c.l.b16 %v1147
  %v1283 = vunpack.c.h.b16 %v1147
  %v1284 = vunpack.c.l.b16 %v1148
  %v1285 = vunpack.c.h.b16 %v1148
  %v1286 = vunpack.c.l.b16 %v1149
  %v1287 = vunpack.c.h.b16 %v1149
  %v1288 = vunpack.c.l.b16 %v1150
  %v1289 = vunpack.c.h.b16 %v1150
  %v1290 = vunpack.c.l.b16 %v1151
  %v1291 = vunpack.c.h.b16 %v1151
  %v1292 = vunpack.c.l.b16 %v1152
  %v1293 = vunpack.c.h.b16 %v1152
  %v1294 = vunpack.c.l.b16 %v1153
  %v1295 = vunpack.c.h.b16 %v1153
  %v1296 = vunpack.c.l.b16 %v1154
  %v1297 = vunpack.c.h.b16 %v1154
  %v1298 = vunpack.c.l.b16 %v1155
  %v1299 = vunpack.c.h.b16 %v1155
  %v1300 = vunpack.c.l.b16 %v1156
  %v1301 = vunpack.c.h.b16 %v1156
  %v1302 = vunpack.c.l.b16 %v1157
  %v1303 = vunpack.c.h.b16 %v1157
  %v1304 = vunpack.c.l.b16 %v1158
  %v1305 = vunpack.c.h.b16 %v1158
  %v1306 = vunpack.c.l.b16 %v1159
  %v1307 = vunpack.c.h.b16 %v1159
  %v1308 = vunpack.c.l.b16 %v1160
  %v1309 = vpack.c.b16 %v1260, %v1211
  %v1310 = vpack.c.b16 %v1261, %v1212
  %v1311 = vpack.c.b16 %v1262, %v1213
  %v1312 = vpack.c.b16 %v1263, %v1214
  %v1313 = vpack.c.b16 %v1264, %v1215
  %v1314 = vpack.c.b16 %v1265, %v1216
  %v1315 = vpack.c.b16 %v1266, %v1217
  %v1316 = vpack.c.b16 %v1267, %v1218
  %v1317 = vpack.c.b16 %v1268, %v1219
  %v1318 = vpack.c.b16 %v1269, %v1220
  %v1319 = vpack.c.b16 %v1270, %v1221
  %v1320 = vpack.c.b16 %v1271, %v1222
  %v1321 = vpack.c.b16 %v1272, %v1223
  %v1322 = vpack.c.b16 %v1273, %v1224
  %v1323 = vpack.c.b16 %v1274, %v1225
  %v1324 = vpack.c.b16 %v1275, %v1226
  %v1325 = vpack.c.b16 %v1276, %v1227
  %v1326 = vpack.c.b16 %v1277, %v1228
  %v1327 = vpack.c.b16 %v1278, %v1229
  %v1328 = vpack.c.b16 %v1279, %v1230
  %v1329 = vpack.c.b16 %v1280, %v1231
  %v1330 = vpack.c.b16 %v1281, %v1232
  %v1331 = vpack.c.b16 %v1282, %v1233
  %v1332 = vpack.c.b16 %v1283, %v1234
  %v1333 = vpack.c.b16 %v1284, %v1235
  %v1334 = vpack.c.b16 %v1285, %v1236
  %v1335 = vpack.c.b16 %v1286, %v1237
  %v1336 = vpack.c.b16 %v1287, %v1238
  %v1337 = vpack.c.b16 %v1288, %v1239
  %v1338 = vpack.c.b16 %v1289, %v1240
  %v1339 = vpack.c.b16 %v1290, %v1241
  %v1340 = vpack.c.b16 %v1291, %v1242
  %v1341 = vpack.c.b16 %v1292, %v1243
  %v1342 = vpack.c.b16 %v1293, %v1244
  %v1343 = vpack.c.b16 %v1294, %v1245
  %v1344 = vpack.c.b16 %v1295, %v1246
  %v1345 = vpack.c.b16 %v1296, %v1247
  %v1346 = vpack.c.b16 %v1297, %v1248
  %v1347 = vpack.c.b16 %v1298, %v1249
  %v1348 = vpack.c.b16 %v1299, %v1250
  %v1349 = vpack.c.b16 %v1300, %v1251
  %v1350 = vpack.c.b16 %v1301, %v1252
  %v1351 = vpack.c.b16 %v1302, %v1253
  %v1352 = vpack.c.b16 %v1303, %v1254
  %v1353 = vpack.c.b16 %v1304, %v1255
  %v1354 = vpack.c.b16 %v1305, %v1256
  %v1355 = vpack.c.b16 %v1306, %v1257
  %v1356 = vpack.c.b16 %v1307, %v1258
  %v1357 = vpack.c.b16 %v1308, %v1259
  %v1359 = vand.u32 %v1309, %v276
  %v1362 = vand.u32 %v1310, %v276
  %v1365 = vand.u32 %v1311, %v276
  %v1368 = vand.u32 %v1312, %v276
  %v1371 = vand.u32 %v1313, %v276
  %v1374 = vand.u32 %v1314, %v276
  %v1377 = vand.u32 %v1315, %v276
  %v1380 = vand.u32 %v1316, %v276
  %v1383 = vand.u32 %v1317, %v276
  %v1386 = vand.u32 %v1318, %v276
  %v1389 = vand.u32 %v1319, %v276
  %v1392 = vand.u32 %v1320, %v276
  %v1395 = vand.u32 %v1321, %v276
  %v1398 = vand.u32 %v1322, %v276
  %v1401 = vand.u32 %v1323, %v276
  %v1404 = vand.u32 %v1324, %v276
  %v1407 = vand.u32 %v1325, %v276
  %v1410 = vand.u32 %v1326, %v276
  %v1413 = vand.u32 %v1327, %v276
  %v1416 = vand.u32 %v1328, %v276
  %v1419 = vand.u32 %v1329, %v276
  %v1422 = vand.u32 %v1330, %v276
  %v1425 = vand.u32 %v1331, %v276
  %v1428 = vand.u32 %v1332, %v276
  %v1431 = vand.u32 %v1333, %v276
  %v1434 = vand.u32 %v1334, %v276
  %v1437 = vand.u32 %v1335, %v276
  %v1440 = vand.u32 %v1336, %v276
  %v1443 = vand.u32 %v1337, %v276
  %v1446 = vand.u32 %v1338, %v276
  %v1449 = vand.u32 %v1339, %v276
  %v1452 = vand.u32 %v1340, %v276
  %v1455 = vand.u32 %v1341, %v276
  %v1458 = vand.u32 %v1342, %v276
  %v1461 = vand.u32 %v1343, %v276
  %v1464 = vand.u32 %v1344, %v276
  %v1467 = vand.u32 %v1345, %v276
  %v1470 = vand.u32 %v1346, %v276
  %v1473 = vand.u32 %v1347, %v276
  %v1476 = vand.u32 %v1348, %v276
  %v1479 = vand.u32 %v1349, %v276
  %v1482 = vand.u32 %v1350, %v276
  %v1485 = vand.u32 %v1351, %v276
  %v1488 = vand.u32 %v1352, %v276
  %v1491 = vand.u32 %v1353, %v276
  %v1494 = vand.u32 %v1354, %v276
  %v1497 = vand.u32 %v1355, %v276
  %v1500 = vand.u32 %v1356, %v276
  %v1503 = vand.u32 %v1357, %v276
  %1505 = vmatpush.bf16.msra.mxu0 0
  %1506 = vmatpush.bf16.msra.mxu0 0
  %1507 = vmatpush.bf16.msra.mxu0 0
  %1508 = vmatpush.bf16.msra.mxu0 0
  %1509 = vmatpush.bf16.msra.mxu0 0
  %1510 = vmatpush.bf16.msra.mxu0 0
  %1511 = vmatpush.bf16.msra.mxu0 0
  %1512 = vmatpush.bf16.msra.mxu0 %v1359
  %1513 = vmatmul.bf16.gmra.mxu0 %v271
  %v1514 = vpop.f32.mrf.mxu0
  %v1515 = vadd.f32 0.0, %v1514
  %v1516 = vpop.f32.mrf.mxu0
  %v1517 = vadd.f32 0.0, %v1516
  %1518 = vdwg.mxu0
  %1519 = vmatpush.bf16.msra.mxu0 0
  %1520 = vmatpush.bf16.msra.mxu0 0
  %1521 = vmatpush.bf16.msra.mxu0 0
  %1522 = vmatpush.bf16.msra.mxu0 0
  %1523 = vmatpush.bf16.msra.mxu0 0
  %1524 = vmatpush.bf16.msra.mxu0 0
  %1525 = vmatpush.bf16.msra.mxu0 0
  %1526 = vmatpush.bf16.msra.mxu0 %v1362
  %1527 = vmatmul.bf16.gmra.mxu0 %v271
  %v1528 = vpop.f32.mrf.mxu0
  %v1529 = vadd.f32 0.0, %v1528
  %v1530 = vpop.f32.mrf.mxu0
  %v1531 = vadd.f32 0.0, %v1530
  %1532 = vdwg.mxu0
  %1533 = vmatpush.bf16.msra.mxu0 0
  %1534 = vmatpush.bf16.msra.mxu0 0
  %1535 = vmatpush.bf16.msra.mxu0 0
  %1536 = vmatpush.bf16.msra.mxu0 0
  %1537 = vmatpush.bf16.msra.mxu0 0
  %1538 = vmatpush.bf16.msra.mxu0 0
  %1539 = vmatpush.bf16.msra.mxu0 0
  %1540 = vmatpush.bf16.msra.mxu0 %v1365
  %1541 = vmatmul.bf16.gmra.mxu0 %v271
  %v1542 = vpop.f32.mrf.mxu0
  %v1543 = vadd.f32 0.0, %v1542
  %v1544 = vpop.f32.mrf.mxu0
  %v1545 = vadd.f32 0.0, %v1544
  %1546 = vdwg.mxu0
  %1547 = vmatpush.bf16.msra.mxu0 0
  %1548 = vmatpush.bf16.msra.mxu0 0
  %1549 = vmatpush.bf16.msra.mxu0 0
  %1550 = vmatpush.bf16.msra.mxu0 0
  %1551 = vmatpush.bf16.msra.mxu0 0
  %1552 = vmatpush.bf16.msra.mxu0 0
  %1553 = vmatpush.bf16.msra.mxu0 0
  %1554 = vmatpush.bf16.msra.mxu0 %v1368
  %1555 = vmatmul.bf16.gmra.mxu0 %v271
  %v1556 = vpop.f32.mrf.mxu0
  %v1557 = vadd.f32 0.0, %v1556
  %v1558 = vpop.f32.mrf.mxu0
  %v1559 = vadd.f32 0.0, %v1558
  %1560 = vdwg.mxu0
  %1561 = vmatpush.bf16.msra.mxu0 0
  %1562 = vmatpush.bf16.msra.mxu0 0
  %1563 = vmatpush.bf16.msra.mxu0 0
  %1564 = vmatpush.bf16.msra.mxu0 0
  %1565 = vmatpush.bf16.msra.mxu0 0
  %1566 = vmatpush.bf16.msra.mxu0 0
  %1567 = vmatpush.bf16.msra.mxu0 0
  %1568 = vmatpush.bf16.msra.mxu0 %v1371
  %1569 = vmatmul.bf16.gmra.mxu0 %v271
  %v1570 = vpop.f32.mrf.mxu0
  %v1571 = vadd.f32 0.0, %v1570
  %v1572 = vpop.f32.mrf.mxu0
  %v1573 = vadd.f32 0.0, %v1572
  %1574 = vdwg.mxu0
  %1575 = vmatpush.bf16.msra.mxu0 0
  %1576 = vmatpush.bf16.msra.mxu0 0
  %1577 = vmatpush.bf16.msra.mxu0 0
  %1578 = vmatpush.bf16.msra.mxu0 0
  %1579 = vmatpush.bf16.msra.mxu0 0
  %1580 = vmatpush.bf16.msra.mxu0 0
  %1581 = vmatpush.bf16.msra.mxu0 0
  %1582 = vmatpush.bf16.msra.mxu0 %v1374
  %1583 = vmatmul.bf16.gmra.mxu0 %v271
  %v1584 = vpop.f32.mrf.mxu0
  %v1585 = vadd.f32 0.0, %v1584
  %v1586 = vpop.f32.mrf.mxu0
  %v1587 = vadd.f32 0.0, %v1586
  %1588 = vdwg.mxu0
  %1589 = vmatpush.bf16.msra.mxu0 0
  %1590 = vmatpush.bf16.msra.mxu0 0
  %1591 = vmatpush.bf16.msra.mxu0 0
  %1592 = vmatpush.bf16.msra.mxu0 0
  %1593 = vmatpush.bf16.msra.mxu0 0
  %1594 = vmatpush.bf16.msra.mxu0 0
  %1595 = vmatpush.bf16.msra.mxu0 0
  %1596 = vmatpush.bf16.msra.mxu0 %v1377
  %1597 = vmatmul.bf16.gmra.mxu0 %v271
  %v1598 = vpop.f32.mrf.mxu0
  %v1599 = vadd.f32 0.0, %v1598
  %v1600 = vpop.f32.mrf.mxu0
  %v1601 = vadd.f32 0.0, %v1600
  %1602 = vdwg.mxu0
  %1603 = vmatpush.bf16.msra.mxu0 0
  %1604 = vmatpush.bf16.msra.mxu0 0
  %1605 = vmatpush.bf16.msra.mxu0 0
  %1606 = vmatpush.bf16.msra.mxu0 0
  %1607 = vmatpush.bf16.msra.mxu0 0
  %1608 = vmatpush.bf16.msra.mxu0 0
  %1609 = vmatpush.bf16.msra.mxu0 0
  %1610 = vmatpush.bf16.msra.mxu0 %v1380
  %1611 = vmatmul.bf16.gmra.mxu0 %v271
  %v1612 = vpop.f32.mrf.mxu0
  %v1613 = vadd.f32 0.0, %v1612
  %v1614 = vpop.f32.mrf.mxu0
  %v1615 = vadd.f32 0.0, %v1614
  %1616 = vdwg.mxu0
  %1617 = vmatpush.bf16.msra.mxu0 0
  %1618 = vmatpush.bf16.msra.mxu0 0
  %1619 = vmatpush.bf16.msra.mxu0 0
  %1620 = vmatpush.bf16.msra.mxu0 0
  %1621 = vmatpush.bf16.msra.mxu0 0
  %1622 = vmatpush.bf16.msra.mxu0 0
  %1623 = vmatpush.bf16.msra.mxu0 0
  %1624 = vmatpush.bf16.msra.mxu0 %v1383
  %1625 = vmatmul.bf16.gmra.mxu0 %v271
  %v1626 = vpop.f32.mrf.mxu0
  %v1627 = vadd.f32 0.0, %v1626
  %v1628 = vpop.f32.mrf.mxu0
  %v1629 = vadd.f32 0.0, %v1628
  %1630 = vdwg.mxu0
  %1631 = vmatpush.bf16.msra.mxu0 0
  %1632 = vmatpush.bf16.msra.mxu0 0
  %1633 = vmatpush.bf16.msra.mxu0 0
  %1634 = vmatpush.bf16.msra.mxu0 0
  %1635 = vmatpush.bf16.msra.mxu0 0
  %1636 = vmatpush.bf16.msra.mxu0 0
  %1637 = vmatpush.bf16.msra.mxu0 0
  %1638 = vmatpush.bf16.msra.mxu0 %v1386
  %1639 = vmatmul.bf16.gmra.mxu0 %v271
  %v1640 = vpop.f32.mrf.mxu0
  %v1641 = vadd.f32 0.0, %v1640
  %v1642 = vpop.f32.mrf.mxu0
  %v1643 = vadd.f32 0.0, %v1642
  %1644 = vdwg.mxu0
  %1645 = vmatpush.bf16.msra.mxu0 0
  %1646 = vmatpush.bf16.msra.mxu0 0
  %1647 = vmatpush.bf16.msra.mxu0 0
  %1648 = vmatpush.bf16.msra.mxu0 0
  %1649 = vmatpush.bf16.msra.mxu0 0
  %1650 = vmatpush.bf16.msra.mxu0 0
  %1651 = vmatpush.bf16.msra.mxu0 0
  %1652 = vmatpush.bf16.msra.mxu0 %v1389
  %1653 = vmatmul.bf16.gmra.mxu0 %v271
  %v1654 = vpop.f32.mrf.mxu0
  %v1655 = vadd.f32 0.0, %v1654
  %v1656 = vpop.f32.mrf.mxu0
  %v1657 = vadd.f32 0.0, %v1656
  %1658 = vdwg.mxu0
  %1659 = vmatpush.bf16.msra.mxu0 0
  %1660 = vmatpush.bf16.msra.mxu0 0
  %1661 = vmatpush.bf16.msra.mxu0 0
  %1662 = vmatpush.bf16.msra.mxu0 0
  %1663 = vmatpush.bf16.msra.mxu0 0
  %1664 = vmatpush.bf16.msra.mxu0 0
  %1665 = vmatpush.bf16.msra.mxu0 0
  %1666 = vmatpush.bf16.msra.mxu0 %v1392
  %1667 = vmatmul.bf16.gmra.mxu0 %v271
  %v1668 = vpop.f32.mrf.mxu0
  %v1669 = vadd.f32 0.0, %v1668
  %v1670 = vpop.f32.mrf.mxu0
  %v1671 = vadd.f32 0.0, %v1670
  %1672 = vdwg.mxu0
  %1673 = vmatpush.bf16.msra.mxu0 0
  %1674 = vmatpush.bf16.msra.mxu0 0
  %1675 = vmatpush.bf16.msra.mxu0 0
  %1676 = vmatpush.bf16.msra.mxu0 0
  %1677 = vmatpush.bf16.msra.mxu0 0
  %1678 = vmatpush.bf16.msra.mxu0 0
  %1679 = vmatpush.bf16.msra.mxu0 0
  %1680 = vmatpush.bf16.msra.mxu0 %v1395
  %1681 = vmatmul.bf16.gmra.mxu0 %v271
  %v1682 = vpop.f32.mrf.mxu0
  %v1683 = vadd.f32 0.0, %v1682
  %v1684 = vpop.f32.mrf.mxu0
  %v1685 = vadd.f32 0.0, %v1684
  %1686 = vdwg.mxu0
  %1687 = vmatpush.bf16.msra.mxu0 0
  %1688 = vmatpush.bf16.msra.mxu0 0
  %1689 = vmatpush.bf16.msra.mxu0 0
  %1690 = vmatpush.bf16.msra.mxu0 0
  %1691 = vmatpush.bf16.msra.mxu0 0
  %1692 = vmatpush.bf16.msra.mxu0 0
  %1693 = vmatpush.bf16.msra.mxu0 0
  %1694 = vmatpush.bf16.msra.mxu0 %v1398
  %1695 = vmatmul.bf16.gmra.mxu0 %v271
  %v1696 = vpop.f32.mrf.mxu0
  %v1697 = vadd.f32 0.0, %v1696
  %v1698 = vpop.f32.mrf.mxu0
  %v1699 = vadd.f32 0.0, %v1698
  %1700 = vdwg.mxu0
  %1701 = vmatpush.bf16.msra.mxu0 0
  %1702 = vmatpush.bf16.msra.mxu0 0
  %1703 = vmatpush.bf16.msra.mxu0 0
  %1704 = vmatpush.bf16.msra.mxu0 0
  %1705 = vmatpush.bf16.msra.mxu0 0
  %1706 = vmatpush.bf16.msra.mxu0 0
  %1707 = vmatpush.bf16.msra.mxu0 0
  %1708 = vmatpush.bf16.msra.mxu0 %v1401
  %1709 = vmatmul.bf16.gmra.mxu0 %v271
  %v1710 = vpop.f32.mrf.mxu0
  %v1711 = vadd.f32 0.0, %v1710
  %v1712 = vpop.f32.mrf.mxu0
  %v1713 = vadd.f32 0.0, %v1712
  %1714 = vdwg.mxu0
  %1715 = vmatpush.bf16.msra.mxu0 0
  %1716 = vmatpush.bf16.msra.mxu0 0
  %1717 = vmatpush.bf16.msra.mxu0 0
  %1718 = vmatpush.bf16.msra.mxu0 0
  %1719 = vmatpush.bf16.msra.mxu0 0
  %1720 = vmatpush.bf16.msra.mxu0 0
  %1721 = vmatpush.bf16.msra.mxu0 0
  %1722 = vmatpush.bf16.msra.mxu0 %v1404
  %1723 = vmatmul.bf16.gmra.mxu0 %v271
  %v1724 = vpop.f32.mrf.mxu0
  %v1725 = vadd.f32 0.0, %v1724
  %v1726 = vpop.f32.mrf.mxu0
  %v1727 = vadd.f32 0.0, %v1726
  %1728 = vdwg.mxu0
  %1729 = vmatpush.bf16.msra.mxu0 0
  %1730 = vmatpush.bf16.msra.mxu0 0
  %1731 = vmatpush.bf16.msra.mxu0 0
  %1732 = vmatpush.bf16.msra.mxu0 0
  %1733 = vmatpush.bf16.msra.mxu0 0
  %1734 = vmatpush.bf16.msra.mxu0 0
  %1735 = vmatpush.bf16.msra.mxu0 0
  %1736 = vmatpush.bf16.msra.mxu0 %v1407
  %1737 = vmatmul.bf16.gmra.mxu0 %v271
  %v1738 = vpop.f32.mrf.mxu0
  %v1739 = vadd.f32 0.0, %v1738
  %v1740 = vpop.f32.mrf.mxu0
  %v1741 = vadd.f32 0.0, %v1740
  %1742 = vdwg.mxu0
  %1743 = vmatpush.bf16.msra.mxu0 0
  %1744 = vmatpush.bf16.msra.mxu0 0
  %1745 = vmatpush.bf16.msra.mxu0 0
  %1746 = vmatpush.bf16.msra.mxu0 0
  %1747 = vmatpush.bf16.msra.mxu0 0
  %1748 = vmatpush.bf16.msra.mxu0 0
  %1749 = vmatpush.bf16.msra.mxu0 0
  %1750 = vmatpush.bf16.msra.mxu0 %v1410
  %1751 = vmatmul.bf16.gmra.mxu0 %v271
  %v1752 = vpop.f32.mrf.mxu0
  %v1753 = vadd.f32 0.0, %v1752
  %v1754 = vpop.f32.mrf.mxu0
  %v1755 = vadd.f32 0.0, %v1754
  %1756 = vdwg.mxu0
  %1757 = vmatpush.bf16.msra.mxu0 0
  %1758 = vmatpush.bf16.msra.mxu0 0
  %1759 = vmatpush.bf16.msra.mxu0 0
  %1760 = vmatpush.bf16.msra.mxu0 0
  %1761 = vmatpush.bf16.msra.mxu0 0
  %1762 = vmatpush.bf16.msra.mxu0 0
  %1763 = vmatpush.bf16.msra.mxu0 0
  %1764 = vmatpush.bf16.msra.mxu0 %v1413
  %1765 = vmatmul.bf16.gmra.mxu0 %v271
  %v1766 = vpop.f32.mrf.mxu0
  %v1767 = vadd.f32 0.0, %v1766
  %v1768 = vpop.f32.mrf.mxu0
  %v1769 = vadd.f32 0.0, %v1768
  %1770 = vdwg.mxu0
  %1771 = vmatpush.bf16.msra.mxu0 0
  %1772 = vmatpush.bf16.msra.mxu0 0
  %1773 = vmatpush.bf16.msra.mxu0 0
  %1774 = vmatpush.bf16.msra.mxu0 0
  %1775 = vmatpush.bf16.msra.mxu0 0
  %1776 = vmatpush.bf16.msra.mxu0 0
  %1777 = vmatpush.bf16.msra.mxu0 0
  %1778 = vmatpush.bf16.msra.mxu0 %v1416
  %1779 = vmatmul.bf16.gmra.mxu0 %v271
  %v1780 = vpop.f32.mrf.mxu0
  %v1781 = vadd.f32 0.0, %v1780
  %v1782 = vpop.f32.mrf.mxu0
  %v1783 = vadd.f32 0.0, %v1782
  %1784 = vdwg.mxu0
  %1785 = vmatpush.bf16.msra.mxu0 0
  %1786 = vmatpush.bf16.msra.mxu0 0
  %1787 = vmatpush.bf16.msra.mxu0 0
  %1788 = vmatpush.bf16.msra.mxu0 0
  %1789 = vmatpush.bf16.msra.mxu0 0
  %1790 = vmatpush.bf16.msra.mxu0 0
  %1791 = vmatpush.bf16.msra.mxu0 0
  %1792 = vmatpush.bf16.msra.mxu0 %v1419
  %1793 = vmatmul.bf16.gmra.mxu0 %v271
  %v1794 = vpop.f32.mrf.mxu0
  %v1795 = vadd.f32 0.0, %v1794
  %v1796 = vpop.f32.mrf.mxu0
  %v1797 = vadd.f32 0.0, %v1796
  %1798 = vdwg.mxu0
  %1799 = vmatpush.bf16.msra.mxu0 0
  %1800 = vmatpush.bf16.msra.mxu0 0
  %1801 = vmatpush.bf16.msra.mxu0 0
  %1802 = vmatpush.bf16.msra.mxu0 0
  %1803 = vmatpush.bf16.msra.mxu0 0
  %1804 = vmatpush.bf16.msra.mxu0 0
  %1805 = vmatpush.bf16.msra.mxu0 0
  %1806 = vmatpush.bf16.msra.mxu0 %v1422
  %1807 = vmatmul.bf16.gmra.mxu0 %v271
  %v1808 = vpop.f32.mrf.mxu0
  %v1809 = vadd.f32 0.0, %v1808
  %v1810 = vpop.f32.mrf.mxu0
  %v1811 = vadd.f32 0.0, %v1810
  %1812 = vdwg.mxu0
  %1813 = vmatpush.bf16.msra.mxu0 0
  %1814 = vmatpush.bf16.msra.mxu0 0
  %1815 = vmatpush.bf16.msra.mxu0 0
  %1816 = vmatpush.bf16.msra.mxu0 0
  %1817 = vmatpush.bf16.msra.mxu0 0
  %1818 = vmatpush.bf16.msra.mxu0 0
  %1819 = vmatpush.bf16.msra.mxu0 0
  %1820 = vmatpush.bf16.msra.mxu0 %v1425
  %1821 = vmatmul.bf16.gmra.mxu0 %v271
  %v1822 = vpop.f32.mrf.mxu0
  %v1823 = vadd.f32 0.0, %v1822
  %v1824 = vpop.f32.mrf.mxu0
  %v1825 = vadd.f32 0.0, %v1824
  %1826 = vdwg.mxu0
  %1827 = vmatpush.bf16.msra.mxu0 0
  %1828 = vmatpush.bf16.msra.mxu0 0
  %1829 = vmatpush.bf16.msra.mxu0 0
  %1830 = vmatpush.bf16.msra.mxu0 0
  %1831 = vmatpush.bf16.msra.mxu0 0
  %1832 = vmatpush.bf16.msra.mxu0 0
  %1833 = vmatpush.bf16.msra.mxu0 0
  %1834 = vmatpush.bf16.msra.mxu0 %v1428
  %1835 = vmatmul.bf16.gmra.mxu0 %v271
  %v1836 = vpop.f32.mrf.mxu0
  %v1837 = vadd.f32 0.0, %v1836
  %v1838 = vpop.f32.mrf.mxu0
  %v1839 = vadd.f32 0.0, %v1838
  %1840 = vdwg.mxu0
  %1841 = vmatpush.bf16.msra.mxu0 0
  %1842 = vmatpush.bf16.msra.mxu0 0
  %1843 = vmatpush.bf16.msra.mxu0 0
  %1844 = vmatpush.bf16.msra.mxu0 0
  %1845 = vmatpush.bf16.msra.mxu0 0
  %1846 = vmatpush.bf16.msra.mxu0 0
  %1847 = vmatpush.bf16.msra.mxu0 0
  %1848 = vmatpush.bf16.msra.mxu0 %v1431
  %1849 = vmatmul.bf16.gmra.mxu0 %v271
  %v1850 = vpop.f32.mrf.mxu0
  %v1851 = vadd.f32 0.0, %v1850
  %v1852 = vpop.f32.mrf.mxu0
  %v1853 = vadd.f32 0.0, %v1852
  %1854 = vdwg.mxu0
  %1855 = vmatpush.bf16.msra.mxu0 0
  %1856 = vmatpush.bf16.msra.mxu0 0
  %1857 = vmatpush.bf16.msra.mxu0 0
  %1858 = vmatpush.bf16.msra.mxu0 0
  %1859 = vmatpush.bf16.msra.mxu0 0
  %1860 = vmatpush.bf16.msra.mxu0 0
  %1861 = vmatpush.bf16.msra.mxu0 0
  %1862 = vmatpush.bf16.msra.mxu0 %v1434
  %1863 = vmatmul.bf16.gmra.mxu0 %v271
  %v1864 = vpop.f32.mrf.mxu0
  %v1865 = vadd.f32 0.0, %v1864
  %v1866 = vpop.f32.mrf.mxu0
  %v1867 = vadd.f32 0.0, %v1866
  %1868 = vdwg.mxu0
  %1869 = vmatpush.bf16.msra.mxu0 0
  %1870 = vmatpush.bf16.msra.mxu0 0
  %1871 = vmatpush.bf16.msra.mxu0 0
  %1872 = vmatpush.bf16.msra.mxu0 0
  %1873 = vmatpush.bf16.msra.mxu0 0
  %1874 = vmatpush.bf16.msra.mxu0 0
  %1875 = vmatpush.bf16.msra.mxu0 0
  %1876 = vmatpush.bf16.msra.mxu0 %v1437
  %1877 = vmatmul.bf16.gmra.mxu0 %v271
  %v1878 = vpop.f32.mrf.mxu0
  %v1879 = vadd.f32 0.0, %v1878
  %v1880 = vpop.f32.mrf.mxu0
  %v1881 = vadd.f32 0.0, %v1880
  %1882 = vdwg.mxu0
  %1883 = vmatpush.bf16.msra.mxu0 0
  %1884 = vmatpush.bf16.msra.mxu0 0
  %1885 = vmatpush.bf16.msra.mxu0 0
  %1886 = vmatpush.bf16.msra.mxu0 0
  %1887 = vmatpush.bf16.msra.mxu0 0
  %1888 = vmatpush.bf16.msra.mxu0 0
  %1889 = vmatpush.bf16.msra.mxu0 0
  %1890 = vmatpush.bf16.msra.mxu0 %v1440
  %1891 = vmatmul.bf16.gmra.mxu0 %v271
  %v1892 = vpop.f32.mrf.mxu0
  %v1893 = vadd.f32 0.0, %v1892
  %v1894 = vpop.f32.mrf.mxu0
  %v1895 = vadd.f32 0.0, %v1894
  %1896 = vdwg.mxu0
  %1897 = vmatpush.bf16.msra.mxu0 0
  %1898 = vmatpush.bf16.msra.mxu0 0
  %1899 = vmatpush.bf16.msra.mxu0 0
  %1900 = vmatpush.bf16.msra.mxu0 0
  %1901 = vmatpush.bf16.msra.mxu0 0
  %1902 = vmatpush.bf16.msra.mxu0 0
  %1903 = vmatpush.bf16.msra.mxu0 0
  %1904 = vmatpush.bf16.msra.mxu0 %v1443
  %1905 = vmatmul.bf16.gmra.mxu0 %v271
  %v1906 = vpop.f32.mrf.mxu0
  %v1907 = vadd.f32 0.0, %v1906
  %v1908 = vpop.f32.mrf.mxu0
  %v1909 = vadd.f32 0.0, %v1908
  %1910 = vdwg.mxu0
  %1911 = vmatpush.bf16.msra.mxu0 0
  %1912 = vmatpush.bf16.msra.mxu0 0
  %1913 = vmatpush.bf16.msra.mxu0 0
  %1914 = vmatpush.bf16.msra.mxu0 0
  %1915 = vmatpush.bf16.msra.mxu0 0
  %1916 = vmatpush.bf16.msra.mxu0 0
  %1917 = vmatpush.bf16.msra.mxu0 0
  %1918 = vmatpush.bf16.msra.mxu0 %v1446
  %1919 = vmatmul.bf16.gmra.mxu0 %v271
  %v1920 = vpop.f32.mrf.mxu0
  %v1921 = vadd.f32 0.0, %v1920
  %v1922 = vpop.f32.mrf.mxu0
  %v1923 = vadd.f32 0.0, %v1922
  %1924 = vdwg.mxu0
  %1925 = vmatpush.bf16.msra.mxu0 0
  %1926 = vmatpush.bf16.msra.mxu0 0
  %1927 = vmatpush.bf16.msra.mxu0 0
  %1928 = vmatpush.bf16.msra.mxu0 0
  %1929 = vmatpush.bf16.msra.mxu0 0
  %1930 = vmatpush.bf16.msra.mxu0 0
  %1931 = vmatpush.bf16.msra.mxu0 0
  %1932 = vmatpush.bf16.msra.mxu0 %v1449
  %1933 = vmatmul.bf16.gmra.mxu0 %v271
  %v1934 = vpop.f32.mrf.mxu0
  %v1935 = vadd.f32 0.0, %v1934
  %v1936 = vpop.f32.mrf.mxu0
  %v1937 = vadd.f32 0.0, %v1936
  %1938 = vdwg.mxu0
  %1939 = vmatpush.bf16.msra.mxu0 0
  %1940 = vmatpush.bf16.msra.mxu0 0
  %1941 = vmatpush.bf16.msra.mxu0 0
  %1942 = vmatpush.bf16.msra.mxu0 0
  %1943 = vmatpush.bf16.msra.mxu0 0
  %1944 = vmatpush.bf16.msra.mxu0 0
  %1945 = vmatpush.bf16.msra.mxu0 0
  %1946 = vmatpush.bf16.msra.mxu0 %v1452
  %1947 = vmatmul.bf16.gmra.mxu0 %v271
  %v1948 = vpop.f32.mrf.mxu0
  %v1949 = vadd.f32 0.0, %v1948
  %v1950 = vpop.f32.mrf.mxu0
  %v1951 = vadd.f32 0.0, %v1950
  %1952 = vdwg.mxu0
  %1953 = vmatpush.bf16.msra.mxu0 0
  %1954 = vmatpush.bf16.msra.mxu0 0
  %1955 = vmatpush.bf16.msra.mxu0 0
  %1956 = vmatpush.bf16.msra.mxu0 0
  %1957 = vmatpush.bf16.msra.mxu0 0
  %1958 = vmatpush.bf16.msra.mxu0 0
  %1959 = vmatpush.bf16.msra.mxu0 0
  %1960 = vmatpush.bf16.msra.mxu0 %v1455
  %1961 = vmatmul.bf16.gmra.mxu0 %v271
  %v1962 = vpop.f32.mrf.mxu0
  %v1963 = vadd.f32 0.0, %v1962
  %v1964 = vpop.f32.mrf.mxu0
  %v1965 = vadd.f32 0.0, %v1964
  %1966 = vdwg.mxu0
  %1967 = vmatpush.bf16.msra.mxu0 0
  %1968 = vmatpush.bf16.msra.mxu0 0
  %1969 = vmatpush.bf16.msra.mxu0 0
  %1970 = vmatpush.bf16.msra.mxu0 0
  %1971 = vmatpush.bf16.msra.mxu0 0
  %1972 = vmatpush.bf16.msra.mxu0 0
  %1973 = vmatpush.bf16.msra.mxu0 0
  %1974 = vmatpush.bf16.msra.mxu0 %v1458
  %1975 = vmatmul.bf16.gmra.mxu0 %v271
  %v1976 = vpop.f32.mrf.mxu0
  %v1977 = vadd.f32 0.0, %v1976
  %v1978 = vpop.f32.mrf.mxu0
  %v1979 = vadd.f32 0.0, %v1978
  %1980 = vdwg.mxu0
  %1981 = vmatpush.bf16.msra.mxu0 0
  %1982 = vmatpush.bf16.msra.mxu0 0
  %1983 = vmatpush.bf16.msra.mxu0 0
  %1984 = vmatpush.bf16.msra.mxu0 0
  %1985 = vmatpush.bf16.msra.mxu0 0
  %1986 = vmatpush.bf16.msra.mxu0 0
  %1987 = vmatpush.bf16.msra.mxu0 0
  %1988 = vmatpush.bf16.msra.mxu0 %v1461
  %1989 = vmatmul.bf16.gmra.mxu0 %v271
  %v1990 = vpop.f32.mrf.mxu0
  %v1991 = vadd.f32 0.0, %v1990
  %v1992 = vpop.f32.mrf.mxu0
  %v1993 = vadd.f32 0.0, %v1992
  %1994 = vdwg.mxu0
  %1995 = vmatpush.bf16.msra.mxu0 0
  %1996 = vmatpush.bf16.msra.mxu0 0
  %1997 = vmatpush.bf16.msra.mxu0 0
  %1998 = vmatpush.bf16.msra.mxu0 0
  %1999 = vmatpush.bf16.msra.mxu0 0
  %2000 = vmatpush.bf16.msra.mxu0 0
  %2001 = vmatpush.bf16.msra.mxu0 0
  %2002 = vmatpush.bf16.msra.mxu0 %v1464
  %2003 = vmatmul.bf16.gmra.mxu0 %v271
  %v2004 = vpop.f32.mrf.mxu0
  %v2005 = vadd.f32 0.0, %v2004
  %v2006 = vpop.f32.mrf.mxu0
  %v2007 = vadd.f32 0.0, %v2006
  %2008 = vdwg.mxu0
  %2009 = vmatpush.bf16.msra.mxu0 0
  %2010 = vmatpush.bf16.msra.mxu0 0
  %2011 = vmatpush.bf16.msra.mxu0 0
  %2012 = vmatpush.bf16.msra.mxu0 0
  %2013 = vmatpush.bf16.msra.mxu0 0
  %2014 = vmatpush.bf16.msra.mxu0 0
  %2015 = vmatpush.bf16.msra.mxu0 0
  %2016 = vmatpush.bf16.msra.mxu0 %v1467
  %2017 = vmatmul.bf16.gmra.mxu0 %v271
  %v2018 = vpop.f32.mrf.mxu0
  %v2019 = vadd.f32 0.0, %v2018
  %v2020 = vpop.f32.mrf.mxu0
  %v2021 = vadd.f32 0.0, %v2020
  %2022 = vdwg.mxu0
  %2023 = vmatpush.bf16.msra.mxu0 0
  %2024 = vmatpush.bf16.msra.mxu0 0
  %2025 = vmatpush.bf16.msra.mxu0 0
  %2026 = vmatpush.bf16.msra.mxu0 0
  %2027 = vmatpush.bf16.msra.mxu0 0
  %2028 = vmatpush.bf16.msra.mxu0 0
  %2029 = vmatpush.bf16.msra.mxu0 0
  %2030 = vmatpush.bf16.msra.mxu0 %v1470
  %2031 = vmatmul.bf16.gmra.mxu0 %v271
  %v2032 = vpop.f32.mrf.mxu0
  %v2033 = vadd.f32 0.0, %v2032
  %v2034 = vpop.f32.mrf.mxu0
  %v2035 = vadd.f32 0.0, %v2034
  %2036 = vdwg.mxu0
  %2037 = vmatpush.bf16.msra.mxu0 0
  %2038 = vmatpush.bf16.msra.mxu0 0
  %2039 = vmatpush.bf16.msra.mxu0 0
  %2040 = vmatpush.bf16.msra.mxu0 0
  %2041 = vmatpush.bf16.msra.mxu0 0
  %2042 = vmatpush.bf16.msra.mxu0 0
  %2043 = vmatpush.bf16.msra.mxu0 0
  %2044 = vmatpush.bf16.msra.mxu0 %v1473
  %2045 = vmatmul.bf16.gmra.mxu0 %v271
  %v2046 = vpop.f32.mrf.mxu0
  %v2047 = vadd.f32 0.0, %v2046
  %v2048 = vpop.f32.mrf.mxu0
  %v2049 = vadd.f32 0.0, %v2048
  %2050 = vdwg.mxu0
  %2051 = vmatpush.bf16.msra.mxu0 0
  %2052 = vmatpush.bf16.msra.mxu0 0
  %2053 = vmatpush.bf16.msra.mxu0 0
  %2054 = vmatpush.bf16.msra.mxu0 0
  %2055 = vmatpush.bf16.msra.mxu0 0
  %2056 = vmatpush.bf16.msra.mxu0 0
  %2057 = vmatpush.bf16.msra.mxu0 0
  %2058 = vmatpush.bf16.msra.mxu0 %v1476
  %2059 = vmatmul.bf16.gmra.mxu0 %v271
  %v2060 = vpop.f32.mrf.mxu0
  %v2061 = vadd.f32 0.0, %v2060
  %v2062 = vpop.f32.mrf.mxu0
  %v2063 = vadd.f32 0.0, %v2062
  %2064 = vdwg.mxu0
  %2065 = vmatpush.bf16.msra.mxu0 0
  %2066 = vmatpush.bf16.msra.mxu0 0
  %2067 = vmatpush.bf16.msra.mxu0 0
  %2068 = vmatpush.bf16.msra.mxu0 0
  %2069 = vmatpush.bf16.msra.mxu0 0
  %2070 = vmatpush.bf16.msra.mxu0 0
  %2071 = vmatpush.bf16.msra.mxu0 0
  %2072 = vmatpush.bf16.msra.mxu0 %v1479
  %2073 = vmatmul.bf16.gmra.mxu0 %v271
  %v2074 = vpop.f32.mrf.mxu0
  %v2075 = vadd.f32 0.0, %v2074
  %v2076 = vpop.f32.mrf.mxu0
  %v2077 = vadd.f32 0.0, %v2076
  %2078 = vdwg.mxu0
  %2079 = vmatpush.bf16.msra.mxu0 0
  %2080 = vmatpush.bf16.msra.mxu0 0
  %2081 = vmatpush.bf16.msra.mxu0 0
  %2082 = vmatpush.bf16.msra.mxu0 0
  %2083 = vmatpush.bf16.msra.mxu0 0
  %2084 = vmatpush.bf16.msra.mxu0 0
  %2085 = vmatpush.bf16.msra.mxu0 0
  %2086 = vmatpush.bf16.msra.mxu0 %v1482
  %2087 = vmatmul.bf16.gmra.mxu0 %v271
  %v2088 = vpop.f32.mrf.mxu0
  %v2089 = vadd.f32 0.0, %v2088
  %v2090 = vpop.f32.mrf.mxu0
  %v2091 = vadd.f32 0.0, %v2090
  %2092 = vdwg.mxu0
  %2093 = vmatpush.bf16.msra.mxu0 0
  %2094 = vmatpush.bf16.msra.mxu0 0
  %2095 = vmatpush.bf16.msra.mxu0 0
  %2096 = vmatpush.bf16.msra.mxu0 0
  %2097 = vmatpush.bf16.msra.mxu0 0
  %2098 = vmatpush.bf16.msra.mxu0 0
  %2099 = vmatpush.bf16.msra.mxu0 0
  %2100 = vmatpush.bf16.msra.mxu0 %v1485
  %2101 = vmatmul.bf16.gmra.mxu0 %v271
  %v2102 = vpop.f32.mrf.mxu0
  %v2103 = vadd.f32 0.0, %v2102
  %v2104 = vpop.f32.mrf.mxu0
  %v2105 = vadd.f32 0.0, %v2104
  %2106 = vdwg.mxu0
  %2107 = vmatpush.bf16.msra.mxu0 0
  %2108 = vmatpush.bf16.msra.mxu0 0
  %2109 = vmatpush.bf16.msra.mxu0 0
  %2110 = vmatpush.bf16.msra.mxu0 0
  %2111 = vmatpush.bf16.msra.mxu0 0
  %2112 = vmatpush.bf16.msra.mxu0 0
  %2113 = vmatpush.bf16.msra.mxu0 0
  %2114 = vmatpush.bf16.msra.mxu0 %v1488
  %2115 = vmatmul.bf16.gmra.mxu0 %v271
  %v2116 = vpop.f32.mrf.mxu0
  %v2117 = vadd.f32 0.0, %v2116
  %v2118 = vpop.f32.mrf.mxu0
  %v2119 = vadd.f32 0.0, %v2118
  %2120 = vdwg.mxu0
  %2121 = vmatpush.bf16.msra.mxu0 0
  %2122 = vmatpush.bf16.msra.mxu0 0
  %2123 = vmatpush.bf16.msra.mxu0 0
  %2124 = vmatpush.bf16.msra.mxu0 0
  %2125 = vmatpush.bf16.msra.mxu0 0
  %2126 = vmatpush.bf16.msra.mxu0 0
  %2127 = vmatpush.bf16.msra.mxu0 0
  %2128 = vmatpush.bf16.msra.mxu0 %v1491
  %2129 = vmatmul.bf16.gmra.mxu0 %v271
  %v2130 = vpop.f32.mrf.mxu0
  %v2131 = vadd.f32 0.0, %v2130
  %v2132 = vpop.f32.mrf.mxu0
  %v2133 = vadd.f32 0.0, %v2132
  %2134 = vdwg.mxu0
  %2135 = vmatpush.bf16.msra.mxu0 0
  %2136 = vmatpush.bf16.msra.mxu0 0
  %2137 = vmatpush.bf16.msra.mxu0 0
  %2138 = vmatpush.bf16.msra.mxu0 0
  %2139 = vmatpush.bf16.msra.mxu0 0
  %2140 = vmatpush.bf16.msra.mxu0 0
  %2141 = vmatpush.bf16.msra.mxu0 0
  %2142 = vmatpush.bf16.msra.mxu0 %v1494
  %2143 = vmatmul.bf16.gmra.mxu0 %v271
  %v2144 = vpop.f32.mrf.mxu0
  %v2145 = vadd.f32 0.0, %v2144
  %v2146 = vpop.f32.mrf.mxu0
  %v2147 = vadd.f32 0.0, %v2146
  %2148 = vdwg.mxu0
  %2149 = vmatpush.bf16.msra.mxu0 0
  %2150 = vmatpush.bf16.msra.mxu0 0
  %2151 = vmatpush.bf16.msra.mxu0 0
  %2152 = vmatpush.bf16.msra.mxu0 0
  %2153 = vmatpush.bf16.msra.mxu0 0
  %2154 = vmatpush.bf16.msra.mxu0 0
  %2155 = vmatpush.bf16.msra.mxu0 0
  %2156 = vmatpush.bf16.msra.mxu0 %v1497
  %2157 = vmatmul.bf16.gmra.mxu0 %v271
  %v2158 = vpop.f32.mrf.mxu0
  %v2159 = vadd.f32 0.0, %v2158
  %v2160 = vpop.f32.mrf.mxu0
  %v2161 = vadd.f32 0.0, %v2160
  %2162 = vdwg.mxu0
  %2163 = vmatpush.bf16.msra.mxu0 0
  %2164 = vmatpush.bf16.msra.mxu0 0
  %2165 = vmatpush.bf16.msra.mxu0 0
  %2166 = vmatpush.bf16.msra.mxu0 0
  %2167 = vmatpush.bf16.msra.mxu0 0
  %2168 = vmatpush.bf16.msra.mxu0 0
  %2169 = vmatpush.bf16.msra.mxu0 0
  %2170 = vmatpush.bf16.msra.mxu0 %v1500
  %2171 = vmatmul.bf16.gmra.mxu0 %v271
  %v2172 = vpop.f32.mrf.mxu0
  %v2173 = vadd.f32 0.0, %v2172
  %v2174 = vpop.f32.mrf.mxu0
  %v2175 = vadd.f32 0.0, %v2174
  %2176 = vdwg.mxu0
  %2177 = vmatpush.bf16.msra.mxu0 0
  %2178 = vmatpush.bf16.msra.mxu0 0
  %2179 = vmatpush.bf16.msra.mxu0 0
  %2180 = vmatpush.bf16.msra.mxu0 0
  %2181 = vmatpush.bf16.msra.mxu0 0
  %2182 = vmatpush.bf16.msra.mxu0 0
  %2183 = vmatpush.bf16.msra.mxu0 0
  %2184 = vmatpush.bf16.msra.mxu0 %v1503
  %2185 = vmatmul.bf16.gmra.mxu0 %v271
  %v2186 = vpop.f32.mrf.mxu0
  %v2187 = vadd.f32 0.0, %v2186
  %v2188 = vpop.f32.mrf.mxu0
  %v2189 = vadd.f32 0.0, %v2188
  %2190 = vdwg.mxu0
  %v2191 = vmax.f32 %v434, %v1515
  %v2192 = vmax.f32 %v448, %v1529
  %v2193 = vmax.f32 %v462, %v1543
  %v2194 = vmax.f32 %v476, %v1557
  %v2195 = vmax.f32 %v490, %v1571
  %v2196 = vmax.f32 %v504, %v1585
  %v2197 = vmax.f32 %v518, %v1599
  %v2198 = vmax.f32 %v532, %v1613
  %v2199 = vmax.f32 %v546, %v1627
  %v2200 = vmax.f32 %v560, %v1641
  %v2201 = vmax.f32 %v574, %v1655
  %v2202 = vmax.f32 %v588, %v1669
  %v2203 = vmax.f32 %v602, %v1683
  %v2204 = vmax.f32 %v616, %v1697
  %v2205 = vmax.f32 %v630, %v1711
  %v2206 = vmax.f32 %v644, %v1725
  %v2207 = vmax.f32 %v658, %v1739
  %v2208 = vmax.f32 %v672, %v1753
  %v2209 = vmax.f32 %v686, %v1767
  %v2210 = vmax.f32 %v700, %v1781
  %v2211 = vmax.f32 %v714, %v1795
  %v2212 = vmax.f32 %v728, %v1809
  %v2213 = vmax.f32 %v742, %v1823
  %v2214 = vmax.f32 %v756, %v1837
  %v2215 = vmax.f32 %v770, %v1851
  %v2216 = vmax.f32 %v784, %v1865
  %v2217 = vmax.f32 %v798, %v1879
  %v2218 = vmax.f32 %v812, %v1893
  %v2219 = vmax.f32 %v826, %v1907
  %v2220 = vmax.f32 %v840, %v1921
  %v2221 = vmax.f32 %v854, %v1935
  %v2222 = vmax.f32 %v868, %v1949
  %v2223 = vmax.f32 %v882, %v1963
  %v2224 = vmax.f32 %v896, %v1977
  %v2225 = vmax.f32 %v910, %v1991
  %v2226 = vmax.f32 %v924, %v2005
  %v2227 = vmax.f32 %v938, %v2019
  %v2228 = vmax.f32 %v952, %v2033
  %v2229 = vmax.f32 %v966, %v2047
  %v2230 = vmax.f32 %v980, %v2061
  %v2231 = vmax.f32 %v994, %v2075
  %v2232 = vmax.f32 %v1008, %v2089
  %v2233 = vmax.f32 %v1022, %v2103
  %v2234 = vmax.f32 %v1036, %v2117
  %v2235 = vmax.f32 %v1050, %v2131
  %v2236 = vmax.f32 %v1064, %v2145
  %v2237 = vmax.f32 %v1078, %v2159
  %v2238 = vmax.f32 %v1092, %v2173
  %v2239 = vmax.f32 %v1106, %v2187
  %v2240 = vmax.f32 %v436, %v1517
  %v2241 = vmax.f32 %v450, %v1531
  %v2242 = vmax.f32 %v464, %v1545
  %v2243 = vmax.f32 %v478, %v1559
  %v2244 = vmax.f32 %v492, %v1573
  %v2245 = vmax.f32 %v506, %v1587
  %v2246 = vmax.f32 %v520, %v1601
  %v2247 = vmax.f32 %v534, %v1615
  %v2248 = vmax.f32 %v548, %v1629
  %v2249 = vmax.f32 %v562, %v1643
  %v2250 = vmax.f32 %v576, %v1657
  %v2251 = vmax.f32 %v590, %v1671
  %v2252 = vmax.f32 %v604, %v1685
  %v2253 = vmax.f32 %v618, %v1699
  %v2254 = vmax.f32 %v632, %v1713
  %v2255 = vmax.f32 %v646, %v1727
  %v2256 = vmax.f32 %v660, %v1741
  %v2257 = vmax.f32 %v674, %v1755
  %v2258 = vmax.f32 %v688, %v1769
  %v2259 = vmax.f32 %v702, %v1783
  %v2260 = vmax.f32 %v716, %v1797
  %v2261 = vmax.f32 %v730, %v1811
  %v2262 = vmax.f32 %v744, %v1825
  %v2263 = vmax.f32 %v758, %v1839
  %v2264 = vmax.f32 %v772, %v1853
  %v2265 = vmax.f32 %v786, %v1867
  %v2266 = vmax.f32 %v800, %v1881
  %v2267 = vmax.f32 %v814, %v1895
  %v2268 = vmax.f32 %v828, %v1909
  %v2269 = vmax.f32 %v842, %v1923
  %v2270 = vmax.f32 %v856, %v1937
  %v2271 = vmax.f32 %v870, %v1951
  %v2272 = vmax.f32 %v884, %v1965
  %v2273 = vmax.f32 %v898, %v1979
  %v2274 = vmax.f32 %v912, %v1993
  %v2275 = vmax.f32 %v926, %v2007
  %v2276 = vmax.f32 %v940, %v2021
  %v2277 = vmax.f32 %v954, %v2035
  %v2278 = vmax.f32 %v968, %v2049
  %v2279 = vmax.f32 %v982, %v2063
  %v2280 = vmax.f32 %v996, %v2077
  %v2281 = vmax.f32 %v1010, %v2091
  %v2282 = vmax.f32 %v1024, %v2105
  %v2283 = vmax.f32 %v1038, %v2119
  %v2284 = vmax.f32 %v1052, %v2133
  %v2285 = vmax.f32 %v1066, %v2147
  %v2286 = vmax.f32 %v1080, %v2161
  %v2287 = vmax.f32 %v1094, %v2175
  %v2288 = vmax.f32 %v1108, %v2189
  %s2289 = scalar_lea.vmem %s0, 784
  %v2290 = vld [vmem:[%s2289] sm:$0xff]
  %v2291 = vld [vmem:[%s2289 + $0x8] sm:$0xff]
  %v2292 = vld [vmem:[%s2289 + $0x10] sm:$0xff]
  %v2293 = vld [vmem:[%s2289 + $0x18] sm:$0xff]
  %v2294 = vld [vmem:[%s2289 + $0x20] sm:$0xff]
  %v2295 = vld [vmem:[%s2289 + $0x28] sm:$0xff]
  %v2296 = vld [vmem:[%s2289 + $0x30] sm:$0xff]
  %v2297 = vld [vmem:[%s2289 + $0x38] sm:$0xff]
  %v2298 = vld [vmem:[%s2289 + $0x40] sm:$0xff]
  %v2299 = vld [vmem:[%s2289 + $0x48] sm:$0xff]
  %v2300 = vld [vmem:[%s2289 + $0x50] sm:$0xff]
  %v2301 = vld [vmem:[%s2289 + $0x58] sm:$0xff]
  %v2302 = vld [vmem:[%s2289 + $0x60] sm:$0xff]
  %v2303 = vld [vmem:[%s2289 + $0x68] sm:$0xff]
  %v2304 = vld [vmem:[%s2289 + $0x70] sm:$0xff]
  %v2305 = vld [vmem:[%s2289 + $0x78] sm:$0xff]
  %v2306 = vld [vmem:[%s2289 + $0x80] sm:$0xff]
  %v2307 = vld [vmem:[%s2289 + $0x88] sm:$0xff]
  %v2308 = vld [vmem:[%s2289 + $0x90] sm:$0xff]
  %v2309 = vld [vmem:[%s2289 + $0x98] sm:$0xff]
  %v2310 = vld [vmem:[%s2289 + $0xa0] sm:$0xff]
  %v2311 = vld [vmem:[%s2289 + $0xa8] sm:$0xff]
  %v2312 = vld [vmem:[%s2289 + $0xb0] sm:$0xff]
  %v2313 = vld [vmem:[%s2289 + $0xb8] sm:$0xff]
  %v2314 = vld [vmem:[%s2289 + $0xc0] sm:$0xf]
  %v2315 = vld [vmem:[%s2289 + $0xc4] sm:$0x11]
  %v2316 = vld [vmem:[%s2289 + $0xcc] sm:$0x11]
  %v2317 = vld [vmem:[%s2289 + $0xd4] sm:$0x11]
  %v2318 = vld [vmem:[%s2289 + $0xdc] sm:$0x11]
  %v2319 = vld [vmem:[%s2289 + $0xe4] sm:$0x11]
  %v2320 = vld [vmem:[%s2289 + $0xec] sm:$0x11]
  %v2321 = vld [vmem:[%s2289 + $0xf4] sm:$0x11]
  %v2322 = vld [vmem:[%s2289 + $0xfc] sm:$0x11]
  %v2323 = vld [vmem:[%s2289 + $0x104] sm:$0x11]
  %v2324 = vld [vmem:[%s2289 + $0x10c] sm:$0x11]
  %v2325 = vld [vmem:[%s2289 + $0x114] sm:$0x11]
  %v2326 = vld [vmem:[%s2289 + $0x11c] sm:$0x11]
  %v2327 = vld [vmem:[%s2289 + $0x124] sm:$0x11]
  %v2328 = vld [vmem:[%s2289 + $0x12c] sm:$0x11]
  %v2329 = vld [vmem:[%s2289 + $0x134] sm:$0x11]
  %v2330 = vld [vmem:[%s2289 + $0x13c] sm:$0x11]
  %v2331 = vld [vmem:[%s2289 + $0x144] sm:$0x11]
  %v2332 = vld [vmem:[%s2289 + $0x14c] sm:$0x11]
  %v2333 = vld [vmem:[%s2289 + $0x154] sm:$0x11]
  %v2334 = vld [vmem:[%s2289 + $0x15c] sm:$0x11]
  %v2335 = vld [vmem:[%s2289 + $0x164] sm:$0x11]
  %v2336 = vld [vmem:[%s2289 + $0x16c] sm:$0x11]
  %v2337 = vld [vmem:[%s2289 + $0x174] sm:$0x11]
  %v2338 = vld [vmem:[%s2289 + $0x17c] sm:$0x11]
  %v2339 = vld [vmem:[%s2289 + $0x184] sm:$0x1]
  %v2390 = vunpack.c.l.b16 %v2290
  %v2391 = vunpack.c.h.b16 %v2290
  %v2392 = vunpack.c.l.b16 %v2291
  %v2393 = vunpack.c.h.b16 %v2291
  %v2394 = vunpack.c.l.b16 %v2292
  %v2395 = vunpack.c.h.b16 %v2292
  %v2396 = vunpack.c.l.b16 %v2293
  %v2397 = vunpack.c.h.b16 %v2293
  %v2398 = vunpack.c.l.b16 %v2294
  %v2399 = vunpack.c.h.b16 %v2294
  %v2400 = vunpack.c.l.b16 %v2295
  %v2401 = vunpack.c.h.b16 %v2295
  %v2402 = vunpack.c.l.b16 %v2296
  %v2403 = vunpack.c.h.b16 %v2296
  %v2404 = vunpack.c.l.b16 %v2297
  %v2405 = vunpack.c.h.b16 %v2297
  %v2406 = vunpack.c.l.b16 %v2298
  %v2407 = vunpack.c.h.b16 %v2298
  %v2408 = vunpack.c.l.b16 %v2299
  %v2409 = vunpack.c.h.b16 %v2299
  %v2410 = vunpack.c.l.b16 %v2300
  %v2411 = vunpack.c.h.b16 %v2300
  %v2412 = vunpack.c.l.b16 %v2301
  %v2413 = vunpack.c.h.b16 %v2301
  %v2414 = vunpack.c.l.b16 %v2302
  %v2415 = vunpack.c.h.b16 %v2302
  %v2416 = vunpack.c.l.b16 %v2303
  %v2417 = vunpack.c.h.b16 %v2303
  %v2418 = vunpack.c.l.b16 %v2304
  %v2419 = vunpack.c.h.b16 %v2304
  %v2420 = vunpack.c.l.b16 %v2305
  %v2421 = vunpack.c.h.b16 %v2305
  %v2422 = vunpack.c.l.b16 %v2306
  %v2423 = vunpack.c.h.b16 %v2306
  %v2424 = vunpack.c.l.b16 %v2307
  %v2425 = vunpack.c.h.b16 %v2307
  %v2426 = vunpack.c.l.b16 %v2308
  %v2427 = vunpack.c.h.b16 %v2308
  %v2428 = vunpack.c.l.b16 %v2309
  %v2429 = vunpack.c.h.b16 %v2309
  %v2430 = vunpack.c.l.b16 %v2310
  %v2431 = vunpack.c.h.b16 %v2310
  %v2432 = vunpack.c.l.b16 %v2311
  %v2433 = vunpack.c.h.b16 %v2311
  %v2434 = vunpack.c.l.b16 %v2312
  %v2435 = vunpack.c.h.b16 %v2312
  %v2436 = vunpack.c.l.b16 %v2313
  %v2437 = vunpack.c.h.b16 %v2313
  %v2438 = vunpack.c.l.b16 %v2314
  %v2439 = vunpack.c.l.b16 %v2315
  %v2440 = vunpack.c.h.b16 %v2315
  %v2441 = vunpack.c.l.b16 %v2316
  %v2442 = vunpack.c.h.b16 %v2316
  %v2443 = vunpack.c.l.b16 %v2317
  %v2444 = vunpack.c.h.b16 %v2317
  %v2445 = vunpack.c.l.b16 %v2318
  %v2446 = vunpack.c.h.b16 %v2318
  %v2447 = vunpack.c.l.b16 %v2319
  %v2448 = vunpack.c.h.b16 %v2319
  %v2449 = vunpack.c.l.b16 %v2320
  %v2450 = vunpack.c.h.b16 %v2320
  %v2451 = vunpack.c.l.b16 %v2321
  %v2452 = vunpack.c.h.b16 %v2321
  %v2453 = vunpack.c.l.b16 %v2322
  %v2454 = vunpack.c.h.b16 %v2322
  %v2455 = vunpack.c.l.b16 %v2323
  %v2456 = vunpack.c.h.b16 %v2323
  %v2457 = vunpack.c.l.b16 %v2324
  %v2458 = vunpack.c.h.b16 %v2324
  %v2459 = vunpack.c.l.b16 %v2325
  %v2460 = vunpack.c.h.b16 %v2325
  %v2461 = vunpack.c.l.b16 %v2326
  %v2462 = vunpack.c.h.b16 %v2326
  %v2463 = vunpack.c.l.b16 %v2327
  %v2464 = vunpack.c.h.b16 %v2327
  %v2465 = vunpack.c.l.b16 %v2328
  %v2466 = vunpack.c.h.b16 %v2328
  %v2467 = vunpack.c.l.b16 %v2329
  %v2468 = vunpack.c.h.b16 %v2329
  %v2469 = vunpack.c.l.b16 %v2330
  %v2470 = vunpack.c.h.b16 %v2330
  %v2471 = vunpack.c.l.b16 %v2331
  %v2472 = vunpack.c.h.b16 %v2331
  %v2473 = vunpack.c.l.b16 %v2332
  %v2474 = vunpack.c.h.b16 %v2332
  %v2475 = vunpack.c.l.b16 %v2333
  %v2476 = vunpack.c.h.b16 %v2333
  %v2477 = vunpack.c.l.b16 %v2334
  %v2478 = vunpack.c.h.b16 %v2334
  %v2479 = vunpack.c.l.b16 %v2335
  %v2480 = vunpack.c.h.b16 %v2335
  %v2481 = vunpack.c.l.b16 %v2336
  %v2482 = vunpack.c.h.b16 %v2336
  %v2483 = vunpack.c.l.b16 %v2337
  %v2484 = vunpack.c.h.b16 %v2337
  %v2485 = vunpack.c.l.b16 %v2338
  %v2486 = vunpack.c.h.b16 %v2338
  %v2487 = vunpack.c.l.b16 %v2339
  %v2488 = vpack.c.b16 %v2439, %v2390
  %v2489 = vpack.c.b16 %v2440, %v2391
  %v2490 = vpack.c.b16 %v2441, %v2392
  %v2491 = vpack.c.b16 %v2442, %v2393
  %v2492 = vpack.c.b16 %v2443, %v2394
  %v2493 = vpack.c.b16 %v2444, %v2395
  %v2494 = vpack.c.b16 %v2445, %v2396
  %v2495 = vpack.c.b16 %v2446, %v2397
  %v2496 = vpack.c.b16 %v2447, %v2398
  %v2497 = vpack.c.b16 %v2448, %v2399
  %v2498 = vpack.c.b16 %v2449, %v2400
  %v2499 = vpack.c.b16 %v2450, %v2401
  %v2500 = vpack.c.b16 %v2451, %v2402
  %v2501 = vpack.c.b16 %v2452, %v2403
  %v2502 = vpack.c.b16 %v2453, %v2404
  %v2503 = vpack.c.b16 %v2454, %v2405
  %v2504 = vpack.c.b16 %v2455, %v2406
  %v2505 = vpack.c.b16 %v2456, %v2407
  %v2506 = vpack.c.b16 %v2457, %v2408
  %v2507 = vpack.c.b16 %v2458, %v2409
  %v2508 = vpack.c.b16 %v2459, %v2410
  %v2509 = vpack.c.b16 %v2460, %v2411
  %v2510 = vpack.c.b16 %v2461, %v2412
  %v2511 = vpack.c.b16 %v2462, %v2413
  %v2512 = vpack.c.b16 %v2463, %v2414
  %v2513 = vpack.c.b16 %v2464, %v2415
  %v2514 = vpack.c.b16 %v2465, %v2416
  %v2515 = vpack.c.b16 %v2466, %v2417
  %v2516 = vpack.c.b16 %v2467, %v2418
  %v2517 = vpack.c.b16 %v2468, %v2419
  %v2518 = vpack.c.b16 %v2469, %v2420
  %v2519 = vpack.c.b16 %v2470, %v2421
  %v2520 = vpack.c.b16 %v2471, %v2422
  %v2521 = vpack.c.b16 %v2472, %v2423
  %v2522 = vpack.c.b16 %v2473, %v2424
  %v2523 = vpack.c.b16 %v2474, %v2425
  %v2524 = vpack.c.b16 %v2475, %v2426
  %v2525 = vpack.c.b16 %v2476, %v2427
  %v2526 = vpack.c.b16 %v2477, %v2428
  %v2527 = vpack.c.b16 %v2478, %v2429
  %v2528 = vpack.c.b16 %v2479, %v2430
  %v2529 = vpack.c.b16 %v2480, %v2431
  %v2530 = vpack.c.b16 %v2481, %v2432
  %v2531 = vpack.c.b16 %v2482, %v2433
  %v2532 = vpack.c.b16 %v2483, %v2434
  %v2533 = vpack.c.b16 %v2484, %v2435
  %v2534 = vpack.c.b16 %v2485, %v2436
  %v2535 = vpack.c.b16 %v2486, %v2437
  %v2536 = vpack.c.b16 %v2487, %v2438
  %v2538 = vand.u32 %v2488, %v276
  %v2541 = vand.u32 %v2489, %v276
  %v2544 = vand.u32 %v2490, %v276
  %v2547 = vand.u32 %v2491, %v276
  %v2550 = vand.u32 %v2492, %v276
  %v2553 = vand.u32 %v2493, %v276
  %v2556 = vand.u32 %v2494, %v276
  %v2559 = vand.u32 %v2495, %v276
  %v2562 = vand.u32 %v2496, %v276
  %v2565 = vand.u32 %v2497, %v276
  %v2568 = vand.u32 %v2498, %v276
  %v2571 = vand.u32 %v2499, %v276
  %v2574 = vand.u32 %v2500, %v276
  %v2577 = vand.u32 %v2501, %v276
  %v2580 = vand.u32 %v2502, %v276
  %v2583 = vand.u32 %v2503, %v276
  %v2586 = vand.u32 %v2504, %v276
  %v2589 = vand.u32 %v2505, %v276
  %v2592 = vand.u32 %v2506, %v276
  %v2595 = vand.u32 %v2507, %v276
  %v2598 = vand.u32 %v2508, %v276
  %v2601 = vand.u32 %v2509, %v276
  %v2604 = vand.u32 %v2510, %v276
  %v2607 = vand.u32 %v2511, %v276
  %v2610 = vand.u32 %v2512, %v276
  %v2613 = vand.u32 %v2513, %v276
  %v2616 = vand.u32 %v2514, %v276
  %v2619 = vand.u32 %v2515, %v276
  %v2622 = vand.u32 %v2516, %v276
  %v2625 = vand.u32 %v2517, %v276
  %v2628 = vand.u32 %v2518, %v276
  %v2631 = vand.u32 %v2519, %v276
  %v2634 = vand.u32 %v2520, %v276
  %v2637 = vand.u32 %v2521, %v276
  %v2640 = vand.u32 %v2522, %v276
  %v2643 = vand.u32 %v2523, %v276
  %v2646 = vand.u32 %v2524, %v276
  %v2649 = vand.u32 %v2525, %v276
  %v2652 = vand.u32 %v2526, %v276
  %v2655 = vand.u32 %v2527, %v276
  %v2658 = vand.u32 %v2528, %v276
  %v2661 = vand.u32 %v2529, %v276
  %v2664 = vand.u32 %v2530, %v276
  %v2667 = vand.u32 %v2531, %v276
  %v2670 = vand.u32 %v2532, %v276
  %v2673 = vand.u32 %v2533, %v276
  %v2676 = vand.u32 %v2534, %v276
  %v2679 = vand.u32 %v2535, %v276
  %v2682 = vand.u32 %v2536, %v276
  %2684 = vmatpush.bf16.msra.mxu0 0
  %2685 = vmatpush.bf16.msra.mxu0 0
  %2686 = vmatpush.bf16.msra.mxu0 0
  %2687 = vmatpush.bf16.msra.mxu0 0
  %2688 = vmatpush.bf16.msra.mxu0 0
  %2689 = vmatpush.bf16.msra.mxu0 0
  %2690 = vmatpush.bf16.msra.mxu0 0
  %2691 = vmatpush.bf16.msra.mxu0 %v2538
  %2692 = vmatmul.bf16.gmra.mxu0 %v271
  %v2693 = vpop.f32.mrf.mxu0
  %v2694 = vadd.f32 0.0, %v2693
  %v2695 = vpop.f32.mrf.mxu0
  %v2696 = vadd.f32 0.0, %v2695
  %2697 = vdwg.mxu0
  %2698 = vmatpush.bf16.msra.mxu0 0
  %2699 = vmatpush.bf16.msra.mxu0 0
  %2700 = vmatpush.bf16.msra.mxu0 0
  %2701 = vmatpush.bf16.msra.mxu0 0
  %2702 = vmatpush.bf16.msra.mxu0 0
  %2703 = vmatpush.bf16.msra.mxu0 0
  %2704 = vmatpush.bf16.msra.mxu0 0
  %2705 = vmatpush.bf16.msra.mxu0 %v2541
  %2706 = vmatmul.bf16.gmra.mxu0 %v271
  %v2707 = vpop.f32.mrf.mxu0
  %v2708 = vadd.f32 0.0, %v2707
  %v2709 = vpop.f32.mrf.mxu0
  %v2710 = vadd.f32 0.0, %v2709
  %2711 = vdwg.mxu0
  %2712 = vmatpush.bf16.msra.mxu0 0
  %2713 = vmatpush.bf16.msra.mxu0 0
  %2714 = vmatpush.bf16.msra.mxu0 0
  %2715 = vmatpush.bf16.msra.mxu0 0
  %2716 = vmatpush.bf16.msra.mxu0 0
  %2717 = vmatpush.bf16.msra.mxu0 0
  %2718 = vmatpush.bf16.msra.mxu0 0
  %2719 = vmatpush.bf16.msra.mxu0 %v2544
  %2720 = vmatmul.bf16.gmra.mxu0 %v271
  %v2721 = vpop.f32.mrf.mxu0
  %v2722 = vadd.f32 0.0, %v2721
  %v2723 = vpop.f32.mrf.mxu0
  %v2724 = vadd.f32 0.0, %v2723
  %2725 = vdwg.mxu0
  %2726 = vmatpush.bf16.msra.mxu0 0
  %2727 = vmatpush.bf16.msra.mxu0 0
  %2728 = vmatpush.bf16.msra.mxu0 0
  %2729 = vmatpush.bf16.msra.mxu0 0
  %2730 = vmatpush.bf16.msra.mxu0 0
  %2731 = vmatpush.bf16.msra.mxu0 0
  %2732 = vmatpush.bf16.msra.mxu0 0
  %2733 = vmatpush.bf16.msra.mxu0 %v2547
  %2734 = vmatmul.bf16.gmra.mxu0 %v271
  %v2735 = vpop.f32.mrf.mxu0
  %v2736 = vadd.f32 0.0, %v2735
  %v2737 = vpop.f32.mrf.mxu0
  %v2738 = vadd.f32 0.0, %v2737
  %2739 = vdwg.mxu0
  %2740 = vmatpush.bf16.msra.mxu0 0
  %2741 = vmatpush.bf16.msra.mxu0 0
  %2742 = vmatpush.bf16.msra.mxu0 0
  %2743 = vmatpush.bf16.msra.mxu0 0
  %2744 = vmatpush.bf16.msra.mxu0 0
  %2745 = vmatpush.bf16.msra.mxu0 0
  %2746 = vmatpush.bf16.msra.mxu0 0
  %2747 = vmatpush.bf16.msra.mxu0 %v2550
  %2748 = vmatmul.bf16.gmra.mxu0 %v271
  %v2749 = vpop.f32.mrf.mxu0
  %v2750 = vadd.f32 0.0, %v2749
  %v2751 = vpop.f32.mrf.mxu0
  %v2752 = vadd.f32 0.0, %v2751
  %2753 = vdwg.mxu0
  %2754 = vmatpush.bf16.msra.mxu0 0
  %2755 = vmatpush.bf16.msra.mxu0 0
  %2756 = vmatpush.bf16.msra.mxu0 0
  %2757 = vmatpush.bf16.msra.mxu0 0
  %2758 = vmatpush.bf16.msra.mxu0 0
  %2759 = vmatpush.bf16.msra.mxu0 0
  %2760 = vmatpush.bf16.msra.mxu0 0
  %2761 = vmatpush.bf16.msra.mxu0 %v2553
  %2762 = vmatmul.bf16.gmra.mxu0 %v271
  %v2763 = vpop.f32.mrf.mxu0
  %v2764 = vadd.f32 0.0, %v2763
  %v2765 = vpop.f32.mrf.mxu0
  %v2766 = vadd.f32 0.0, %v2765
  %2767 = vdwg.mxu0
  %2768 = vmatpush.bf16.msra.mxu0 0
  %2769 = vmatpush.bf16.msra.mxu0 0
  %2770 = vmatpush.bf16.msra.mxu0 0
  %2771 = vmatpush.bf16.msra.mxu0 0
  %2772 = vmatpush.bf16.msra.mxu0 0
  %2773 = vmatpush.bf16.msra.mxu0 0
  %2774 = vmatpush.bf16.msra.mxu0 0
  %2775 = vmatpush.bf16.msra.mxu0 %v2556
  %2776 = vmatmul.bf16.gmra.mxu0 %v271
  %v2777 = vpop.f32.mrf.mxu0
  %v2778 = vadd.f32 0.0, %v2777
  %v2779 = vpop.f32.mrf.mxu0
  %v2780 = vadd.f32 0.0, %v2779
  %2781 = vdwg.mxu0
  %2782 = vmatpush.bf16.msra.mxu0 0
  %2783 = vmatpush.bf16.msra.mxu0 0
  %2784 = vmatpush.bf16.msra.mxu0 0
  %2785 = vmatpush.bf16.msra.mxu0 0
  %2786 = vmatpush.bf16.msra.mxu0 0
  %2787 = vmatpush.bf16.msra.mxu0 0
  %2788 = vmatpush.bf16.msra.mxu0 0
  %2789 = vmatpush.bf16.msra.mxu0 %v2559
  %2790 = vmatmul.bf16.gmra.mxu0 %v271
  %v2791 = vpop.f32.mrf.mxu0
  %v2792 = vadd.f32 0.0, %v2791
  %v2793 = vpop.f32.mrf.mxu0
  %v2794 = vadd.f32 0.0, %v2793
  %2795 = vdwg.mxu0
  %2796 = vmatpush.bf16.msra.mxu0 0
  %2797 = vmatpush.bf16.msra.mxu0 0
  %2798 = vmatpush.bf16.msra.mxu0 0
  %2799 = vmatpush.bf16.msra.mxu0 0
  %2800 = vmatpush.bf16.msra.mxu0 0
  %2801 = vmatpush.bf16.msra.mxu0 0
  %2802 = vmatpush.bf16.msra.mxu0 0
  %2803 = vmatpush.bf16.msra.mxu0 %v2562
  %2804 = vmatmul.bf16.gmra.mxu0 %v271
  %v2805 = vpop.f32.mrf.mxu0
  %v2806 = vadd.f32 0.0, %v2805
  %v2807 = vpop.f32.mrf.mxu0
  %v2808 = vadd.f32 0.0, %v2807
  %2809 = vdwg.mxu0
  %2810 = vmatpush.bf16.msra.mxu0 0
  %2811 = vmatpush.bf16.msra.mxu0 0
  %2812 = vmatpush.bf16.msra.mxu0 0
  %2813 = vmatpush.bf16.msra.mxu0 0
  %2814 = vmatpush.bf16.msra.mxu0 0
  %2815 = vmatpush.bf16.msra.mxu0 0
  %2816 = vmatpush.bf16.msra.mxu0 0
  %2817 = vmatpush.bf16.msra.mxu0 %v2565
  %2818 = vmatmul.bf16.gmra.mxu0 %v271
  %v2819 = vpop.f32.mrf.mxu0
  %v2820 = vadd.f32 0.0, %v2819
  %v2821 = vpop.f32.mrf.mxu0
  %v2822 = vadd.f32 0.0, %v2821
  %2823 = vdwg.mxu0
  %2824 = vmatpush.bf16.msra.mxu0 0
  %2825 = vmatpush.bf16.msra.mxu0 0
  %2826 = vmatpush.bf16.msra.mxu0 0
  %2827 = vmatpush.bf16.msra.mxu0 0
  %2828 = vmatpush.bf16.msra.mxu0 0
  %2829 = vmatpush.bf16.msra.mxu0 0
  %2830 = vmatpush.bf16.msra.mxu0 0
  %2831 = vmatpush.bf16.msra.mxu0 %v2568
  %2832 = vmatmul.bf16.gmra.mxu0 %v271
  %v2833 = vpop.f32.mrf.mxu0
  %v2834 = vadd.f32 0.0, %v2833
  %v2835 = vpop.f32.mrf.mxu0
  %v2836 = vadd.f32 0.0, %v2835
  %2837 = vdwg.mxu0
  %2838 = vmatpush.bf16.msra.mxu0 0
  %2839 = vmatpush.bf16.msra.mxu0 0
  %2840 = vmatpush.bf16.msra.mxu0 0
  %2841 = vmatpush.bf16.msra.mxu0 0
  %2842 = vmatpush.bf16.msra.mxu0 0
  %2843 = vmatpush.bf16.msra.mxu0 0
  %2844 = vmatpush.bf16.msra.mxu0 0
  %2845 = vmatpush.bf16.msra.mxu0 %v2571
  %2846 = vmatmul.bf16.gmra.mxu0 %v271
  %v2847 = vpop.f32.mrf.mxu0
  %v2848 = vadd.f32 0.0, %v2847
  %v2849 = vpop.f32.mrf.mxu0
  %v2850 = vadd.f32 0.0, %v2849
  %2851 = vdwg.mxu0
  %2852 = vmatpush.bf16.msra.mxu0 0
  %2853 = vmatpush.bf16.msra.mxu0 0
  %2854 = vmatpush.bf16.msra.mxu0 0
  %2855 = vmatpush.bf16.msra.mxu0 0
  %2856 = vmatpush.bf16.msra.mxu0 0
  %2857 = vmatpush.bf16.msra.mxu0 0
  %2858 = vmatpush.bf16.msra.mxu0 0
  %2859 = vmatpush.bf16.msra.mxu0 %v2574
  %2860 = vmatmul.bf16.gmra.mxu0 %v271
  %v2861 = vpop.f32.mrf.mxu0
  %v2862 = vadd.f32 0.0, %v2861
  %v2863 = vpop.f32.mrf.mxu0
  %v2864 = vadd.f32 0.0, %v2863
  %2865 = vdwg.mxu0
  %2866 = vmatpush.bf16.msra.mxu0 0
  %2867 = vmatpush.bf16.msra.mxu0 0
  %2868 = vmatpush.bf16.msra.mxu0 0
  %2869 = vmatpush.bf16.msra.mxu0 0
  %2870 = vmatpush.bf16.msra.mxu0 0
  %2871 = vmatpush.bf16.msra.mxu0 0
  %2872 = vmatpush.bf16.msra.mxu0 0
  %2873 = vmatpush.bf16.msra.mxu0 %v2577
  %2874 = vmatmul.bf16.gmra.mxu0 %v271
  %v2875 = vpop.f32.mrf.mxu0
  %v2876 = vadd.f32 0.0, %v2875
  %v2877 = vpop.f32.mrf.mxu0
  %v2878 = vadd.f32 0.0, %v2877
  %2879 = vdwg.mxu0
  %2880 = vmatpush.bf16.msra.mxu0 0
  %2881 = vmatpush.bf16.msra.mxu0 0
  %2882 = vmatpush.bf16.msra.mxu0 0
  %2883 = vmatpush.bf16.msra.mxu0 0
  %2884 = vmatpush.bf16.msra.mxu0 0
  %2885 = vmatpush.bf16.msra.mxu0 0
  %2886 = vmatpush.bf16.msra.mxu0 0
  %2887 = vmatpush.bf16.msra.mxu0 %v2580
  %2888 = vmatmul.bf16.gmra.mxu0 %v271
  %v2889 = vpop.f32.mrf.mxu0
  %v2890 = vadd.f32 0.0, %v2889
  %v2891 = vpop.f32.mrf.mxu0
  %v2892 = vadd.f32 0.0, %v2891
  %2893 = vdwg.mxu0
  %2894 = vmatpush.bf16.msra.mxu0 0
  %2895 = vmatpush.bf16.msra.mxu0 0
  %2896 = vmatpush.bf16.msra.mxu0 0
  %2897 = vmatpush.bf16.msra.mxu0 0
  %2898 = vmatpush.bf16.msra.mxu0 0
  %2899 = vmatpush.bf16.msra.mxu0 0
  %2900 = vmatpush.bf16.msra.mxu0 0
  %2901 = vmatpush.bf16.msra.mxu0 %v2583
  %2902 = vmatmul.bf16.gmra.mxu0 %v271
  %v2903 = vpop.f32.mrf.mxu0
  %v2904 = vadd.f32 0.0, %v2903
  %v2905 = vpop.f32.mrf.mxu0
  %v2906 = vadd.f32 0.0, %v2905
  %2907 = vdwg.mxu0
  %2908 = vmatpush.bf16.msra.mxu0 0
  %2909 = vmatpush.bf16.msra.mxu0 0
  %2910 = vmatpush.bf16.msra.mxu0 0
  %2911 = vmatpush.bf16.msra.mxu0 0
  %2912 = vmatpush.bf16.msra.mxu0 0
  %2913 = vmatpush.bf16.msra.mxu0 0
  %2914 = vmatpush.bf16.msra.mxu0 0
  %2915 = vmatpush.bf16.msra.mxu0 %v2586
  %2916 = vmatmul.bf16.gmra.mxu0 %v271
  %v2917 = vpop.f32.mrf.mxu0
  %v2918 = vadd.f32 0.0, %v2917
  %v2919 = vpop.f32.mrf.mxu0
  %v2920 = vadd.f32 0.0, %v2919
  %2921 = vdwg.mxu0
  %2922 = vmatpush.bf16.msra.mxu0 0
  %2923 = vmatpush.bf16.msra.mxu0 0
  %2924 = vmatpush.bf16.msra.mxu0 0
  %2925 = vmatpush.bf16.msra.mxu0 0
  %2926 = vmatpush.bf16.msra.mxu0 0
  %2927 = vmatpush.bf16.msra.mxu0 0
  %2928 = vmatpush.bf16.msra.mxu0 0
  %2929 = vmatpush.bf16.msra.mxu0 %v2589
  %2930 = vmatmul.bf16.gmra.mxu0 %v271
  %v2931 = vpop.f32.mrf.mxu0
  %v2932 = vadd.f32 0.0, %v2931
  %v2933 = vpop.f32.mrf.mxu0
  %v2934 = vadd.f32 0.0, %v2933
  %2935 = vdwg.mxu0
  %2936 = vmatpush.bf16.msra.mxu0 0
  %2937 = vmatpush.bf16.msra.mxu0 0
  %2938 = vmatpush.bf16.msra.mxu0 0
  %2939 = vmatpush.bf16.msra.mxu0 0
  %2940 = vmatpush.bf16.msra.mxu0 0
  %2941 = vmatpush.bf16.msra.mxu0 0
  %2942 = vmatpush.bf16.msra.mxu0 0
  %2943 = vmatpush.bf16.msra.mxu0 %v2592
  %2944 = vmatmul.bf16.gmra.mxu0 %v271
  %v2945 = vpop.f32.mrf.mxu0
  %v2946 = vadd.f32 0.0, %v2945
  %v2947 = vpop.f32.mrf.mxu0
  %v2948 = vadd.f32 0.0, %v2947
  %2949 = vdwg.mxu0
  %2950 = vmatpush.bf16.msra.mxu0 0
  %2951 = vmatpush.bf16.msra.mxu0 0
  %2952 = vmatpush.bf16.msra.mxu0 0
  %2953 = vmatpush.bf16.msra.mxu0 0
  %2954 = vmatpush.bf16.msra.mxu0 0
  %2955 = vmatpush.bf16.msra.mxu0 0
  %2956 = vmatpush.bf16.msra.mxu0 0
  %2957 = vmatpush.bf16.msra.mxu0 %v2595
  %2958 = vmatmul.bf16.gmra.mxu0 %v271
  %v2959 = vpop.f32.mrf.mxu0
  %v2960 = vadd.f32 0.0, %v2959
  %v2961 = vpop.f32.mrf.mxu0
  %v2962 = vadd.f32 0.0, %v2961
  %2963 = vdwg.mxu0
  %2964 = vmatpush.bf16.msra.mxu0 0
  %2965 = vmatpush.bf16.msra.mxu0 0
  %2966 = vmatpush.bf16.msra.mxu0 0
  %2967 = vmatpush.bf16.msra.mxu0 0
  %2968 = vmatpush.bf16.msra.mxu0 0
  %2969 = vmatpush.bf16.msra.mxu0 0
  %2970 = vmatpush.bf16.msra.mxu0 0
  %2971 = vmatpush.bf16.msra.mxu0 %v2598
  %2972 = vmatmul.bf16.gmra.mxu0 %v271
  %v2973 = vpop.f32.mrf.mxu0
  %v2974 = vadd.f32 0.0, %v2973
  %v2975 = vpop.f32.mrf.mxu0
  %v2976 = vadd.f32 0.0, %v2975
  %2977 = vdwg.mxu0
  %2978 = vmatpush.bf16.msra.mxu0 0
  %2979 = vmatpush.bf16.msra.mxu0 0
  %2980 = vmatpush.bf16.msra.mxu0 0
  %2981 = vmatpush.bf16.msra.mxu0 0
  %2982 = vmatpush.bf16.msra.mxu0 0
  %2983 = vmatpush.bf16.msra.mxu0 0
  %2984 = vmatpush.bf16.msra.mxu0 0
  %2985 = vmatpush.bf16.msra.mxu0 %v2601
  %2986 = vmatmul.bf16.gmra.mxu0 %v271
  %v2987 = vpop.f32.mrf.mxu0
  %v2988 = vadd.f32 0.0, %v2987
  %v2989 = vpop.f32.mrf.mxu0
  %v2990 = vadd.f32 0.0, %v2989
  %2991 = vdwg.mxu0
  %2992 = vmatpush.bf16.msra.mxu0 0
  %2993 = vmatpush.bf16.msra.mxu0 0
  %2994 = vmatpush.bf16.msra.mxu0 0
  %2995 = vmatpush.bf16.msra.mxu0 0
  %2996 = vmatpush.bf16.msra.mxu0 0
  %2997 = vmatpush.bf16.msra.mxu0 0
  %2998 = vmatpush.bf16.msra.mxu0 0
  %2999 = vmatpush.bf16.msra.mxu0 %v2604
  %3000 = vmatmul.bf16.gmra.mxu0 %v271
  %v3001 = vpop.f32.mrf.mxu0
  %v3002 = vadd.f32 0.0, %v3001
  %v3003 = vpop.f32.mrf.mxu0
  %v3004 = vadd.f32 0.0, %v3003
  %3005 = vdwg.mxu0
  %3006 = vmatpush.bf16.msra.mxu0 0
  %3007 = vmatpush.bf16.msra.mxu0 0
  %3008 = vmatpush.bf16.msra.mxu0 0
  %3009 = vmatpush.bf16.msra.mxu0 0
  %3010 = vmatpush.bf16.msra.mxu0 0
  %3011 = vmatpush.bf16.msra.mxu0 0
  %3012 = vmatpush.bf16.msra.mxu0 0
  %3013 = vmatpush.bf16.msra.mxu0 %v2607
  %3014 = vmatmul.bf16.gmra.mxu0 %v271
  %v3015 = vpop.f32.mrf.mxu0
  %v3016 = vadd.f32 0.0, %v3015
  %v3017 = vpop.f32.mrf.mxu0
  %v3018 = vadd.f32 0.0, %v3017
  %3019 = vdwg.mxu0
  %3020 = vmatpush.bf16.msra.mxu0 0
  %3021 = vmatpush.bf16.msra.mxu0 0
  %3022 = vmatpush.bf16.msra.mxu0 0
  %3023 = vmatpush.bf16.msra.mxu0 0
  %3024 = vmatpush.bf16.msra.mxu0 0
  %3025 = vmatpush.bf16.msra.mxu0 0
  %3026 = vmatpush.bf16.msra.mxu0 0
  %3027 = vmatpush.bf16.msra.mxu0 %v2610
  %3028 = vmatmul.bf16.gmra.mxu0 %v271
  %v3029 = vpop.f32.mrf.mxu0
  %v3030 = vadd.f32 0.0, %v3029
  %v3031 = vpop.f32.mrf.mxu0
  %v3032 = vadd.f32 0.0, %v3031
  %3033 = vdwg.mxu0
  %3034 = vmatpush.bf16.msra.mxu0 0
  %3035 = vmatpush.bf16.msra.mxu0 0
  %3036 = vmatpush.bf16.msra.mxu0 0
  %3037 = vmatpush.bf16.msra.mxu0 0
  %3038 = vmatpush.bf16.msra.mxu0 0
  %3039 = vmatpush.bf16.msra.mxu0 0
  %3040 = vmatpush.bf16.msra.mxu0 0
  %3041 = vmatpush.bf16.msra.mxu0 %v2613
  %3042 = vmatmul.bf16.gmra.mxu0 %v271
  %v3043 = vpop.f32.mrf.mxu0
  %v3044 = vadd.f32 0.0, %v3043
  %v3045 = vpop.f32.mrf.mxu0
  %v3046 = vadd.f32 0.0, %v3045
  %3047 = vdwg.mxu0
  %3048 = vmatpush.bf16.msra.mxu0 0
  %3049 = vmatpush.bf16.msra.mxu0 0
  %3050 = vmatpush.bf16.msra.mxu0 0
  %3051 = vmatpush.bf16.msra.mxu0 0
  %3052 = vmatpush.bf16.msra.mxu0 0
  %3053 = vmatpush.bf16.msra.mxu0 0
  %3054 = vmatpush.bf16.msra.mxu0 0
  %3055 = vmatpush.bf16.msra.mxu0 %v2616
  %3056 = vmatmul.bf16.gmra.mxu0 %v271
  %v3057 = vpop.f32.mrf.mxu0
  %v3058 = vadd.f32 0.0, %v3057
  %v3059 = vpop.f32.mrf.mxu0
  %v3060 = vadd.f32 0.0, %v3059
  %3061 = vdwg.mxu0
  %3062 = vmatpush.bf16.msra.mxu0 0
  %3063 = vmatpush.bf16.msra.mxu0 0
  %3064 = vmatpush.bf16.msra.mxu0 0
  %3065 = vmatpush.bf16.msra.mxu0 0
  %3066 = vmatpush.bf16.msra.mxu0 0
  %3067 = vmatpush.bf16.msra.mxu0 0
  %3068 = vmatpush.bf16.msra.mxu0 0
  %3069 = vmatpush.bf16.msra.mxu0 %v2619
  %3070 = vmatmul.bf16.gmra.mxu0 %v271
  %v3071 = vpop.f32.mrf.mxu0
  %v3072 = vadd.f32 0.0, %v3071
  %v3073 = vpop.f32.mrf.mxu0
  %v3074 = vadd.f32 0.0, %v3073
  %3075 = vdwg.mxu0
  %3076 = vmatpush.bf16.msra.mxu0 0
  %3077 = vmatpush.bf16.msra.mxu0 0
  %3078 = vmatpush.bf16.msra.mxu0 0
  %3079 = vmatpush.bf16.msra.mxu0 0
  %3080 = vmatpush.bf16.msra.mxu0 0
  %3081 = vmatpush.bf16.msra.mxu0 0
  %3082 = vmatpush.bf16.msra.mxu0 0
  %3083 = vmatpush.bf16.msra.mxu0 %v2622
  %3084 = vmatmul.bf16.gmra.mxu0 %v271
  %v3085 = vpop.f32.mrf.mxu0
  %v3086 = vadd.f32 0.0, %v3085
  %v3087 = vpop.f32.mrf.mxu0
  %v3088 = vadd.f32 0.0, %v3087
  %3089 = vdwg.mxu0
  %3090 = vmatpush.bf16.msra.mxu0 0
  %3091 = vmatpush.bf16.msra.mxu0 0
  %3092 = vmatpush.bf16.msra.mxu0 0
  %3093 = vmatpush.bf16.msra.mxu0 0
  %3094 = vmatpush.bf16.msra.mxu0 0
  %3095 = vmatpush.bf16.msra.mxu0 0
  %3096 = vmatpush.bf16.msra.mxu0 0
  %3097 = vmatpush.bf16.msra.mxu0 %v2625
  %3098 = vmatmul.bf16.gmra.mxu0 %v271
  %v3099 = vpop.f32.mrf.mxu0
  %v3100 = vadd.f32 0.0, %v3099
  %v3101 = vpop.f32.mrf.mxu0
  %v3102 = vadd.f32 0.0, %v3101
  %3103 = vdwg.mxu0
  %3104 = vmatpush.bf16.msra.mxu0 0
  %3105 = vmatpush.bf16.msra.mxu0 0
  %3106 = vmatpush.bf16.msra.mxu0 0
  %3107 = vmatpush.bf16.msra.mxu0 0
  %3108 = vmatpush.bf16.msra.mxu0 0
  %3109 = vmatpush.bf16.msra.mxu0 0
  %3110 = vmatpush.bf16.msra.mxu0 0
  %3111 = vmatpush.bf16.msra.mxu0 %v2628
  %3112 = vmatmul.bf16.gmra.mxu0 %v271
  %v3113 = vpop.f32.mrf.mxu0
  %v3114 = vadd.f32 0.0, %v3113
  %v3115 = vpop.f32.mrf.mxu0
  %v3116 = vadd.f32 0.0, %v3115
  %3117 = vdwg.mxu0
  %3118 = vmatpush.bf16.msra.mxu0 0
  %3119 = vmatpush.bf16.msra.mxu0 0
  %3120 = vmatpush.bf16.msra.mxu0 0
  %3121 = vmatpush.bf16.msra.mxu0 0
  %3122 = vmatpush.bf16.msra.mxu0 0
  %3123 = vmatpush.bf16.msra.mxu0 0
  %3124 = vmatpush.bf16.msra.mxu0 0
  %3125 = vmatpush.bf16.msra.mxu0 %v2631
  %3126 = vmatmul.bf16.gmra.mxu0 %v271
  %v3127 = vpop.f32.mrf.mxu0
  %v3128 = vadd.f32 0.0, %v3127
  %v3129 = vpop.f32.mrf.mxu0
  %v3130 = vadd.f32 0.0, %v3129
  %3131 = vdwg.mxu0
  %3132 = vmatpush.bf16.msra.mxu0 0
  %3133 = vmatpush.bf16.msra.mxu0 0
  %3134 = vmatpush.bf16.msra.mxu0 0
  %3135 = vmatpush.bf16.msra.mxu0 0
  %3136 = vmatpush.bf16.msra.mxu0 0
  %3137 = vmatpush.bf16.msra.mxu0 0
  %3138 = vmatpush.bf16.msra.mxu0 0
  %3139 = vmatpush.bf16.msra.mxu0 %v2634
  %3140 = vmatmul.bf16.gmra.mxu0 %v271
  %v3141 = vpop.f32.mrf.mxu0
  %v3142 = vadd.f32 0.0, %v3141
  %v3143 = vpop.f32.mrf.mxu0
  %v3144 = vadd.f32 0.0, %v3143
  %3145 = vdwg.mxu0
  %3146 = vmatpush.bf16.msra.mxu0 0
  %3147 = vmatpush.bf16.msra.mxu0 0
  %3148 = vmatpush.bf16.msra.mxu0 0
  %3149 = vmatpush.bf16.msra.mxu0 0
  %3150 = vmatpush.bf16.msra.mxu0 0
  %3151 = vmatpush.bf16.msra.mxu0 0
  %3152 = vmatpush.bf16.msra.mxu0 0
  %3153 = vmatpush.bf16.msra.mxu0 %v2637
  %3154 = vmatmul.bf16.gmra.mxu0 %v271
  %v3155 = vpop.f32.mrf.mxu0
  %v3156 = vadd.f32 0.0, %v3155
  %v3157 = vpop.f32.mrf.mxu0
  %v3158 = vadd.f32 0.0, %v3157
  %3159 = vdwg.mxu0
  %3160 = vmatpush.bf16.msra.mxu0 0
  %3161 = vmatpush.bf16.msra.mxu0 0
  %3162 = vmatpush.bf16.msra.mxu0 0
  %3163 = vmatpush.bf16.msra.mxu0 0
  %3164 = vmatpush.bf16.msra.mxu0 0
  %3165 = vmatpush.bf16.msra.mxu0 0
  %3166 = vmatpush.bf16.msra.mxu0 0
  %3167 = vmatpush.bf16.msra.mxu0 %v2640
  %3168 = vmatmul.bf16.gmra.mxu0 %v271
  %v3169 = vpop.f32.mrf.mxu0
  %v3170 = vadd.f32 0.0, %v3169
  %v3171 = vpop.f32.mrf.mxu0
  %v3172 = vadd.f32 0.0, %v3171
  %3173 = vdwg.mxu0
  %3174 = vmatpush.bf16.msra.mxu0 0
  %3175 = vmatpush.bf16.msra.mxu0 0
  %3176 = vmatpush.bf16.msra.mxu0 0
  %3177 = vmatpush.bf16.msra.mxu0 0
  %3178 = vmatpush.bf16.msra.mxu0 0
  %3179 = vmatpush.bf16.msra.mxu0 0
  %3180 = vmatpush.bf16.msra.mxu0 0
  %3181 = vmatpush.bf16.msra.mxu0 %v2643
  %3182 = vmatmul.bf16.gmra.mxu0 %v271
  %v3183 = vpop.f32.mrf.mxu0
  %v3184 = vadd.f32 0.0, %v3183
  %v3185 = vpop.f32.mrf.mxu0
  %v3186 = vadd.f32 0.0, %v3185
  %3187 = vdwg.mxu0
  %3188 = vmatpush.bf16.msra.mxu0 0
  %3189 = vmatpush.bf16.msra.mxu0 0
  %3190 = vmatpush.bf16.msra.mxu0 0
  %3191 = vmatpush.bf16.msra.mxu0 0
  %3192 = vmatpush.bf16.msra.mxu0 0
  %3193 = vmatpush.bf16.msra.mxu0 0
  %3194 = vmatpush.bf16.msra.mxu0 0
  %3195 = vmatpush.bf16.msra.mxu0 %v2646
  %3196 = vmatmul.bf16.gmra.mxu0 %v271
  %v3197 = vpop.f32.mrf.mxu0
  %v3198 = vadd.f32 0.0, %v3197
  %v3199 = vpop.f32.mrf.mxu0
  %v3200 = vadd.f32 0.0, %v3199
  %3201 = vdwg.mxu0
  %3202 = vmatpush.bf16.msra.mxu0 0
  %3203 = vmatpush.bf16.msra.mxu0 0
  %3204 = vmatpush.bf16.msra.mxu0 0
  %3205 = vmatpush.bf16.msra.mxu0 0
  %3206 = vmatpush.bf16.msra.mxu0 0
  %3207 = vmatpush.bf16.msra.mxu0 0
  %3208 = vmatpush.bf16.msra.mxu0 0
  %3209 = vmatpush.bf16.msra.mxu0 %v2649
  %3210 = vmatmul.bf16.gmra.mxu0 %v271
  %v3211 = vpop.f32.mrf.mxu0
  %v3212 = vadd.f32 0.0, %v3211
  %v3213 = vpop.f32.mrf.mxu0
  %v3214 = vadd.f32 0.0, %v3213
  %3215 = vdwg.mxu0
  %3216 = vmatpush.bf16.msra.mxu0 0
  %3217 = vmatpush.bf16.msra.mxu0 0
  %3218 = vmatpush.bf16.msra.mxu0 0
  %3219 = vmatpush.bf16.msra.mxu0 0
  %3220 = vmatpush.bf16.msra.mxu0 0
  %3221 = vmatpush.bf16.msra.mxu0 0
  %3222 = vmatpush.bf16.msra.mxu0 0
  %3223 = vmatpush.bf16.msra.mxu0 %v2652
  %3224 = vmatmul.bf16.gmra.mxu0 %v271
  %v3225 = vpop.f32.mrf.mxu0
  %v3226 = vadd.f32 0.0, %v3225
  %v3227 = vpop.f32.mrf.mxu0
  %v3228 = vadd.f32 0.0, %v3227
  %3229 = vdwg.mxu0
  %3230 = vmatpush.bf16.msra.mxu0 0
  %3231 = vmatpush.bf16.msra.mxu0 0
  %3232 = vmatpush.bf16.msra.mxu0 0
  %3233 = vmatpush.bf16.msra.mxu0 0
  %3234 = vmatpush.bf16.msra.mxu0 0
  %3235 = vmatpush.bf16.msra.mxu0 0
  %3236 = vmatpush.bf16.msra.mxu0 0
  %3237 = vmatpush.bf16.msra.mxu0 %v2655
  %3238 = vmatmul.bf16.gmra.mxu0 %v271
  %v3239 = vpop.f32.mrf.mxu0
  %v3240 = vadd.f32 0.0, %v3239
  %v3241 = vpop.f32.mrf.mxu0
  %v3242 = vadd.f32 0.0, %v3241
  %3243 = vdwg.mxu0
  %3244 = vmatpush.bf16.msra.mxu0 0
  %3245 = vmatpush.bf16.msra.mxu0 0
  %3246 = vmatpush.bf16.msra.mxu0 0
  %3247 = vmatpush.bf16.msra.mxu0 0
  %3248 = vmatpush.bf16.msra.mxu0 0
  %3249 = vmatpush.bf16.msra.mxu0 0
  %3250 = vmatpush.bf16.msra.mxu0 0
  %3251 = vmatpush.bf16.msra.mxu0 %v2658
  %3252 = vmatmul.bf16.gmra.mxu0 %v271
  %v3253 = vpop.f32.mrf.mxu0
  %v3254 = vadd.f32 0.0, %v3253
  %v3255 = vpop.f32.mrf.mxu0
  %v3256 = vadd.f32 0.0, %v3255
  %3257 = vdwg.mxu0
  %3258 = vmatpush.bf16.msra.mxu0 0
  %3259 = vmatpush.bf16.msra.mxu0 0
  %3260 = vmatpush.bf16.msra.mxu0 0
  %3261 = vmatpush.bf16.msra.mxu0 0
  %3262 = vmatpush.bf16.msra.mxu0 0
  %3263 = vmatpush.bf16.msra.mxu0 0
  %3264 = vmatpush.bf16.msra.mxu0 0
  %3265 = vmatpush.bf16.msra.mxu0 %v2661
  %3266 = vmatmul.bf16.gmra.mxu0 %v271
  %v3267 = vpop.f32.mrf.mxu0
  %v3268 = vadd.f32 0.0, %v3267
  %v3269 = vpop.f32.mrf.mxu0
  %v3270 = vadd.f32 0.0, %v3269
  %3271 = vdwg.mxu0
  %3272 = vmatpush.bf16.msra.mxu0 0
  %3273 = vmatpush.bf16.msra.mxu0 0
  %3274 = vmatpush.bf16.msra.mxu0 0
  %3275 = vmatpush.bf16.msra.mxu0 0
  %3276 = vmatpush.bf16.msra.mxu0 0
  %3277 = vmatpush.bf16.msra.mxu0 0
  %3278 = vmatpush.bf16.msra.mxu0 0
  %3279 = vmatpush.bf16.msra.mxu0 %v2664
  %3280 = vmatmul.bf16.gmra.mxu0 %v271
  %v3281 = vpop.f32.mrf.mxu0
  %v3282 = vadd.f32 0.0, %v3281
  %v3283 = vpop.f32.mrf.mxu0
  %v3284 = vadd.f32 0.0, %v3283
  %3285 = vdwg.mxu0
  %3286 = vmatpush.bf16.msra.mxu0 0
  %3287 = vmatpush.bf16.msra.mxu0 0
  %3288 = vmatpush.bf16.msra.mxu0 0
  %3289 = vmatpush.bf16.msra.mxu0 0
  %3290 = vmatpush.bf16.msra.mxu0 0
  %3291 = vmatpush.bf16.msra.mxu0 0
  %3292 = vmatpush.bf16.msra.mxu0 0
  %3293 = vmatpush.bf16.msra.mxu0 %v2667
  %3294 = vmatmul.bf16.gmra.mxu0 %v271
  %v3295 = vpop.f32.mrf.mxu0
  %v3296 = vadd.f32 0.0, %v3295
  %v3297 = vpop.f32.mrf.mxu0
  %v3298 = vadd.f32 0.0, %v3297
  %3299 = vdwg.mxu0
  %3300 = vmatpush.bf16.msra.mxu0 0
  %3301 = vmatpush.bf16.msra.mxu0 0
  %3302 = vmatpush.bf16.msra.mxu0 0
  %3303 = vmatpush.bf16.msra.mxu0 0
  %3304 = vmatpush.bf16.msra.mxu0 0
  %3305 = vmatpush.bf16.msra.mxu0 0
  %3306 = vmatpush.bf16.msra.mxu0 0
  %3307 = vmatpush.bf16.msra.mxu0 %v2670
  %3308 = vmatmul.bf16.gmra.mxu0 %v271
  %v3309 = vpop.f32.mrf.mxu0
  %v3310 = vadd.f32 0.0, %v3309
  %v3311 = vpop.f32.mrf.mxu0
  %v3312 = vadd.f32 0.0, %v3311
  %3313 = vdwg.mxu0
  %3314 = vmatpush.bf16.msra.mxu0 0
  %3315 = vmatpush.bf16.msra.mxu0 0
  %3316 = vmatpush.bf16.msra.mxu0 0
  %3317 = vmatpush.bf16.msra.mxu0 0
  %3318 = vmatpush.bf16.msra.mxu0 0
  %3319 = vmatpush.bf16.msra.mxu0 0
  %3320 = vmatpush.bf16.msra.mxu0 0
  %3321 = vmatpush.bf16.msra.mxu0 %v2673
  %3322 = vmatmul.bf16.gmra.mxu0 %v271
  %v3323 = vpop.f32.mrf.mxu0
  %v3324 = vadd.f32 0.0, %v3323
  %v3325 = vpop.f32.mrf.mxu0
  %v3326 = vadd.f32 0.0, %v3325
  %3327 = vdwg.mxu0
  %3328 = vmatpush.bf16.msra.mxu0 0
  %3329 = vmatpush.bf16.msra.mxu0 0
  %3330 = vmatpush.bf16.msra.mxu0 0
  %3331 = vmatpush.bf16.msra.mxu0 0
  %3332 = vmatpush.bf16.msra.mxu0 0
  %3333 = vmatpush.bf16.msra.mxu0 0
  %3334 = vmatpush.bf16.msra.mxu0 0
  %3335 = vmatpush.bf16.msra.mxu0 %v2676
  %3336 = vmatmul.bf16.gmra.mxu0 %v271
  %v3337 = vpop.f32.mrf.mxu0
  %v3338 = vadd.f32 0.0, %v3337
  %v3339 = vpop.f32.mrf.mxu0
  %v3340 = vadd.f32 0.0, %v3339
  %3341 = vdwg.mxu0
  %3342 = vmatpush.bf16.msra.mxu0 0
  %3343 = vmatpush.bf16.msra.mxu0 0
  %3344 = vmatpush.bf16.msra.mxu0 0
  %3345 = vmatpush.bf16.msra.mxu0 0
  %3346 = vmatpush.bf16.msra.mxu0 0
  %3347 = vmatpush.bf16.msra.mxu0 0
  %3348 = vmatpush.bf16.msra.mxu0 0
  %3349 = vmatpush.bf16.msra.mxu0 %v2679
  %3350 = vmatmul.bf16.gmra.mxu0 %v271
  %v3351 = vpop.f32.mrf.mxu0
  %v3352 = vadd.f32 0.0, %v3351
  %v3353 = vpop.f32.mrf.mxu0
  %v3354 = vadd.f32 0.0, %v3353
  %3355 = vdwg.mxu0
  %3356 = vmatpush.bf16.msra.mxu0 0
  %3357 = vmatpush.bf16.msra.mxu0 0
  %3358 = vmatpush.bf16.msra.mxu0 0
  %3359 = vmatpush.bf16.msra.mxu0 0
  %3360 = vmatpush.bf16.msra.mxu0 0
  %3361 = vmatpush.bf16.msra.mxu0 0
  %3362 = vmatpush.bf16.msra.mxu0 0
  %3363 = vmatpush.bf16.msra.mxu0 %v2682
  %3364 = vmatmul.bf16.gmra.mxu0 %v271
  %v3365 = vpop.f32.mrf.mxu0
  %v3366 = vadd.f32 0.0, %v3365
  %v3367 = vpop.f32.mrf.mxu0
  %v3368 = vadd.f32 0.0, %v3367
  %3369 = vdwg.mxu0
  %v3370 = vmax.f32 %v2191, %v2694
  %v3371 = vmax.f32 %v2192, %v2708
  %v3372 = vmax.f32 %v2193, %v2722
  %v3373 = vmax.f32 %v2194, %v2736
  %v3374 = vmax.f32 %v2195, %v2750
  %v3375 = vmax.f32 %v2196, %v2764
  %v3376 = vmax.f32 %v2197, %v2778
  %v3377 = vmax.f32 %v2198, %v2792
  %v3378 = vmax.f32 %v2199, %v2806
  %v3379 = vmax.f32 %v2200, %v2820
  %v3380 = vmax.f32 %v2201, %v2834
  %v3381 = vmax.f32 %v2202, %v2848
  %v3382 = vmax.f32 %v2203, %v2862
  %v3383 = vmax.f32 %v2204, %v2876
  %v3384 = vmax.f32 %v2205, %v2890
  %v3385 = vmax.f32 %v2206, %v2904
  %v3386 = vmax.f32 %v2207, %v2918
  %v3387 = vmax.f32 %v2208, %v2932
  %v3388 = vmax.f32 %v2209, %v2946
  %v3389 = vmax.f32 %v2210, %v2960
  %v3390 = vmax.f32 %v2211, %v2974
  %v3391 = vmax.f32 %v2212, %v2988
  %v3392 = vmax.f32 %v2213, %v3002
  %v3393 = vmax.f32 %v2214, %v3016
  %v3394 = vmax.f32 %v2215, %v3030
  %v3395 = vmax.f32 %v2216, %v3044
  %v3396 = vmax.f32 %v2217, %v3058
  %v3397 = vmax.f32 %v2218, %v3072
  %v3398 = vmax.f32 %v2219, %v3086
  %v3399 = vmax.f32 %v2220, %v3100
  %v3400 = vmax.f32 %v2221, %v3114
  %v3401 = vmax.f32 %v2222, %v3128
  %v3402 = vmax.f32 %v2223, %v3142
  %v3403 = vmax.f32 %v2224, %v3156
  %v3404 = vmax.f32 %v2225, %v3170
  %v3405 = vmax.f32 %v2226, %v3184
  %v3406 = vmax.f32 %v2227, %v3198
  %v3407 = vmax.f32 %v2228, %v3212
  %v3408 = vmax.f32 %v2229, %v3226
  %v3409 = vmax.f32 %v2230, %v3240
  %v3410 = vmax.f32 %v2231, %v3254
  %v3411 = vmax.f32 %v2232, %v3268
  %v3412 = vmax.f32 %v2233, %v3282
  %v3413 = vmax.f32 %v2234, %v3296
  %v3414 = vmax.f32 %v2235, %v3310
  %v3415 = vmax.f32 %v2236, %v3324
  %v3416 = vmax.f32 %v2237, %v3338
  %v3417 = vmax.f32 %v2238, %v3352
  %v3418 = vmax.f32 %v2239, %v3366
  %v3419 = vmax.f32 %v2240, %v2696
  %v3420 = vmax.f32 %v2241, %v2710
  %v3421 = vmax.f32 %v2242, %v2724
  %v3422 = vmax.f32 %v2243, %v2738
  %v3423 = vmax.f32 %v2244, %v2752
  %v3424 = vmax.f32 %v2245, %v2766
  %v3425 = vmax.f32 %v2246, %v2780
  %v3426 = vmax.f32 %v2247, %v2794
  %v3427 = vmax.f32 %v2248, %v2808
  %v3428 = vmax.f32 %v2249, %v2822
  %v3429 = vmax.f32 %v2250, %v2836
  %v3430 = vmax.f32 %v2251, %v2850
  %v3431 = vmax.f32 %v2252, %v2864
  %v3432 = vmax.f32 %v2253, %v2878
  %v3433 = vmax.f32 %v2254, %v2892
  %v3434 = vmax.f32 %v2255, %v2906
  %v3435 = vmax.f32 %v2256, %v2920
  %v3436 = vmax.f32 %v2257, %v2934
  %v3437 = vmax.f32 %v2258, %v2948
  %v3438 = vmax.f32 %v2259, %v2962
  %v3439 = vmax.f32 %v2260, %v2976
  %v3440 = vmax.f32 %v2261, %v2990
  %v3441 = vmax.f32 %v2262, %v3004
  %v3442 = vmax.f32 %v2263, %v3018
  %v3443 = vmax.f32 %v2264, %v3032
  %v3444 = vmax.f32 %v2265, %v3046
  %v3445 = vmax.f32 %v2266, %v3060
  %v3446 = vmax.f32 %v2267, %v3074
  %v3447 = vmax.f32 %v2268, %v3088
  %v3448 = vmax.f32 %v2269, %v3102
  %v3449 = vmax.f32 %v2270, %v3116
  %v3450 = vmax.f32 %v2271, %v3130
  %v3451 = vmax.f32 %v2272, %v3144
  %v3452 = vmax.f32 %v2273, %v3158
  %v3453 = vmax.f32 %v2274, %v3172
  %v3454 = vmax.f32 %v2275, %v3186
  %v3455 = vmax.f32 %v2276, %v3200
  %v3456 = vmax.f32 %v2277, %v3214
  %v3457 = vmax.f32 %v2278, %v3228
  %v3458 = vmax.f32 %v2279, %v3242
  %v3459 = vmax.f32 %v2280, %v3256
  %v3460 = vmax.f32 %v2281, %v3270
  %v3461 = vmax.f32 %v2282, %v3284
  %v3462 = vmax.f32 %v2283, %v3298
  %v3463 = vmax.f32 %v2284, %v3312
  %v3464 = vmax.f32 %v2285, %v3326
  %v3465 = vmax.f32 %v2286, %v3340
  %v3466 = vmax.f32 %v2287, %v3354
  %v3467 = vmax.f32 %v2288, %v3368
  %s3468 = scalar_lea.vmem %s0, 1176
  %v3469 = vld [vmem:[%s3468] sm:$0xff]
  %v3470 = vld [vmem:[%s3468 + $0x8] sm:$0xff]
  %v3471 = vld [vmem:[%s3468 + $0x10] sm:$0xff]
  %v3472 = vld [vmem:[%s3468 + $0x18] sm:$0xff]
  %v3473 = vld [vmem:[%s3468 + $0x20] sm:$0xff]
  %v3474 = vld [vmem:[%s3468 + $0x28] sm:$0xff]
  %v3475 = vld [vmem:[%s3468 + $0x30] sm:$0xff]
  %v3476 = vld [vmem:[%s3468 + $0x38] sm:$0xff]
  %v3477 = vld [vmem:[%s3468 + $0x40] sm:$0xff]
  %v3478 = vld [vmem:[%s3468 + $0x48] sm:$0xff]
  %v3479 = vld [vmem:[%s3468 + $0x50] sm:$0xff]
  %v3480 = vld [vmem:[%s3468 + $0x58] sm:$0xff]
  %v3481 = vld [vmem:[%s3468 + $0x60] sm:$0xff]
  %v3482 = vld [vmem:[%s3468 + $0x68] sm:$0xff]
  %v3483 = vld [vmem:[%s3468 + $0x70] sm:$0xff]
  %v3484 = vld [vmem:[%s3468 + $0x78] sm:$0xff]
  %v3485 = vld [vmem:[%s3468 + $0x80] sm:$0xff]
  %v3486 = vld [vmem:[%s3468 + $0x88] sm:$0xff]
  %v3487 = vld [vmem:[%s3468 + $0x90] sm:$0xff]
  %v3488 = vld [vmem:[%s3468 + $0x98] sm:$0xff]
  %v3489 = vld [vmem:[%s3468 + $0xa0] sm:$0xff]
  %v3490 = vld [vmem:[%s3468 + $0xa8] sm:$0xff]
  %v3491 = vld [vmem:[%s3468 + $0xb0] sm:$0xff]
  %v3492 = vld [vmem:[%s3468 + $0xb8] sm:$0xff]
  %v3493 = vld [vmem:[%s3468 + $0xc0] sm:$0xf]
  %v3494 = vld [vmem:[%s3468 + $0xc4] sm:$0x11]
  %v3495 = vld [vmem:[%s3468 + $0xcc] sm:$0x11]
  %v3496 = vld [vmem:[%s3468 + $0xd4] sm:$0x11]
  %v3497 = vld [vmem:[%s3468 + $0xdc] sm:$0x11]
  %v3498 = vld [vmem:[%s3468 + $0xe4] sm:$0x11]
  %v3499 = vld [vmem:[%s3468 + $0xec] sm:$0x11]
  %v3500 = vld [vmem:[%s3468 + $0xf4] sm:$0x11]
  %v3501 = vld [vmem:[%s3468 + $0xfc] sm:$0x11]
  %v3502 = vld [vmem:[%s3468 + $0x104] sm:$0x11]
  %v3503 = vld [vmem:[%s3468 + $0x10c] sm:$0x11]
  %v3504 = vld [vmem:[%s3468 + $0x114] sm:$0x11]
  %v3505 = vld [vmem:[%s3468 + $0x11c] sm:$0x11]
  %v3506 = vld [vmem:[%s3468 + $0x124] sm:$0x11]
  %v3507 = vld [vmem:[%s3468 + $0x12c] sm:$0x11]
  %v3508 = vld [vmem:[%s3468 + $0x134] sm:$0x11]
  %v3509 = vld [vmem:[%s3468 + $0x13c] sm:$0x11]
  %v3510 = vld [vmem:[%s3468 + $0x144] sm:$0x11]
  %v3511 = vld [vmem:[%s3468 + $0x14c] sm:$0x11]
  %v3512 = vld [vmem:[%s3468 + $0x154] sm:$0x11]
  %v3513 = vld [vmem:[%s3468 + $0x15c] sm:$0x11]
  %v3514 = vld [vmem:[%s3468 + $0x164] sm:$0x11]
  %v3515 = vld [vmem:[%s3468 + $0x16c] sm:$0x11]
  %v3516 = vld [vmem:[%s3468 + $0x174] sm:$0x11]
  %v3517 = vld [vmem:[%s3468 + $0x17c] sm:$0x11]
  %v3518 = vld [vmem:[%s3468 + $0x184] sm:$0x1]
  %v3569 = vunpack.c.l.b16 %v3469
  %v3570 = vunpack.c.h.b16 %v3469
  %v3571 = vunpack.c.l.b16 %v3470
  %v3572 = vunpack.c.h.b16 %v3470
  %v3573 = vunpack.c.l.b16 %v3471
  %v3574 = vunpack.c.h.b16 %v3471
  %v3575 = vunpack.c.l.b16 %v3472
  %v3576 = vunpack.c.h.b16 %v3472
  %v3577 = vunpack.c.l.b16 %v3473
  %v3578 = vunpack.c.h.b16 %v3473
  %v3579 = vunpack.c.l.b16 %v3474
  %v3580 = vunpack.c.h.b16 %v3474
  %v3581 = vunpack.c.l.b16 %v3475
  %v3582 = vunpack.c.h.b16 %v3475
  %v3583 = vunpack.c.l.b16 %v3476
  %v3584 = vunpack.c.h.b16 %v3476
  %v3585 = vunpack.c.l.b16 %v3477
  %v3586 = vunpack.c.h.b16 %v3477
  %v3587 = vunpack.c.l.b16 %v3478
  %v3588 = vunpack.c.h.b16 %v3478
  %v3589 = vunpack.c.l.b16 %v3479
  %v3590 = vunpack.c.h.b16 %v3479
  %v3591 = vunpack.c.l.b16 %v3480
  %v3592 = vunpack.c.h.b16 %v3480
  %v3593 = vunpack.c.l.b16 %v3481
  %v3594 = vunpack.c.h.b16 %v3481
  %v3595 = vunpack.c.l.b16 %v3482
  %v3596 = vunpack.c.h.b16 %v3482
  %v3597 = vunpack.c.l.b16 %v3483
  %v3598 = vunpack.c.h.b16 %v3483
  %v3599 = vunpack.c.l.b16 %v3484
  %v3600 = vunpack.c.h.b16 %v3484
  %v3601 = vunpack.c.l.b16 %v3485
  %v3602 = vunpack.c.h.b16 %v3485
  %v3603 = vunpack.c.l.b16 %v3486
  %v3604 = vunpack.c.h.b16 %v3486
  %v3605 = vunpack.c.l.b16 %v3487
  %v3606 = vunpack.c.h.b16 %v3487
  %v3607 = vunpack.c.l.b16 %v3488
  %v3608 = vunpack.c.h.b16 %v3488
  %v3609 = vunpack.c.l.b16 %v3489
  %v3610 = vunpack.c.h.b16 %v3489
  %v3611 = vunpack.c.l.b16 %v3490
  %v3612 = vunpack.c.h.b16 %v3490
  %v3613 = vunpack.c.l.b16 %v3491
  %v3614 = vunpack.c.h.b16 %v3491
  %v3615 = vunpack.c.l.b16 %v3492
  %v3616 = vunpack.c.h.b16 %v3492
  %v3617 = vunpack.c.l.b16 %v3493
  %v3618 = vunpack.c.l.b16 %v3494
  %v3619 = vunpack.c.h.b16 %v3494
  %v3620 = vunpack.c.l.b16 %v3495
  %v3621 = vunpack.c.h.b16 %v3495
  %v3622 = vunpack.c.l.b16 %v3496
  %v3623 = vunpack.c.h.b16 %v3496
  %v3624 = vunpack.c.l.b16 %v3497
  %v3625 = vunpack.c.h.b16 %v3497
  %v3626 = vunpack.c.l.b16 %v3498
  %v3627 = vunpack.c.h.b16 %v3498
  %v3628 = vunpack.c.l.b16 %v3499
  %v3629 = vunpack.c.h.b16 %v3499
  %v3630 = vunpack.c.l.b16 %v3500
  %v3631 = vunpack.c.h.b16 %v3500
  %v3632 = vunpack.c.l.b16 %v3501
  %v3633 = vunpack.c.h.b16 %v3501
  %v3634 = vunpack.c.l.b16 %v3502
  %v3635 = vunpack.c.h.b16 %v3502
  %v3636 = vunpack.c.l.b16 %v3503
  %v3637 = vunpack.c.h.b16 %v3503
  %v3638 = vunpack.c.l.b16 %v3504
  %v3639 = vunpack.c.h.b16 %v3504
  %v3640 = vunpack.c.l.b16 %v3505
  %v3641 = vunpack.c.h.b16 %v3505
  %v3642 = vunpack.c.l.b16 %v3506
  %v3643 = vunpack.c.h.b16 %v3506
  %v3644 = vunpack.c.l.b16 %v3507
  %v3645 = vunpack.c.h.b16 %v3507
  %v3646 = vunpack.c.l.b16 %v3508
  %v3647 = vunpack.c.h.b16 %v3508
  %v3648 = vunpack.c.l.b16 %v3509
  %v3649 = vunpack.c.h.b16 %v3509
  %v3650 = vunpack.c.l.b16 %v3510
  %v3651 = vunpack.c.h.b16 %v3510
  %v3652 = vunpack.c.l.b16 %v3511
  %v3653 = vunpack.c.h.b16 %v3511
  %v3654 = vunpack.c.l.b16 %v3512
  %v3655 = vunpack.c.h.b16 %v3512
  %v3656 = vunpack.c.l.b16 %v3513
  %v3657 = vunpack.c.h.b16 %v3513
  %v3658 = vunpack.c.l.b16 %v3514
  %v3659 = vunpack.c.h.b16 %v3514
  %v3660 = vunpack.c.l.b16 %v3515
  %v3661 = vunpack.c.h.b16 %v3515
  %v3662 = vunpack.c.l.b16 %v3516
  %v3663 = vunpack.c.h.b16 %v3516
  %v3664 = vunpack.c.l.b16 %v3517
  %v3665 = vunpack.c.h.b16 %v3517
  %v3666 = vunpack.c.l.b16 %v3518
  %v3667 = vpack.c.b16 %v3618, %v3569
  %v3668 = vpack.c.b16 %v3619, %v3570
  %v3669 = vpack.c.b16 %v3620, %v3571
  %v3670 = vpack.c.b16 %v3621, %v3572
  %v3671 = vpack.c.b16 %v3622, %v3573
  %v3672 = vpack.c.b16 %v3623, %v3574
  %v3673 = vpack.c.b16 %v3624, %v3575
  %v3674 = vpack.c.b16 %v3625, %v3576
  %v3675 = vpack.c.b16 %v3626, %v3577
  %v3676 = vpack.c.b16 %v3627, %v3578
  %v3677 = vpack.c.b16 %v3628, %v3579
  %v3678 = vpack.c.b16 %v3629, %v3580
  %v3679 = vpack.c.b16 %v3630, %v3581
  %v3680 = vpack.c.b16 %v3631, %v3582
  %v3681 = vpack.c.b16 %v3632, %v3583
  %v3682 = vpack.c.b16 %v3633, %v3584
  %v3683 = vpack.c.b16 %v3634, %v3585
  %v3684 = vpack.c.b16 %v3635, %v3586
  %v3685 = vpack.c.b16 %v3636, %v3587
  %v3686 = vpack.c.b16 %v3637, %v3588
  %v3687 = vpack.c.b16 %v3638, %v3589
  %v3688 = vpack.c.b16 %v3639, %v3590
  %v3689 = vpack.c.b16 %v3640, %v3591
  %v3690 = vpack.c.b16 %v3641, %v3592
  %v3691 = vpack.c.b16 %v3642, %v3593
  %v3692 = vpack.c.b16 %v3643, %v3594
  %v3693 = vpack.c.b16 %v3644, %v3595
  %v3694 = vpack.c.b16 %v3645, %v3596
  %v3695 = vpack.c.b16 %v3646, %v3597
  %v3696 = vpack.c.b16 %v3647, %v3598
  %v3697 = vpack.c.b16 %v3648, %v3599
  %v3698 = vpack.c.b16 %v3649, %v3600
  %v3699 = vpack.c.b16 %v3650, %v3601
  %v3700 = vpack.c.b16 %v3651, %v3602
  %v3701 = vpack.c.b16 %v3652, %v3603
  %v3702 = vpack.c.b16 %v3653, %v3604
  %v3703 = vpack.c.b16 %v3654, %v3605
  %v3704 = vpack.c.b16 %v3655, %v3606
  %v3705 = vpack.c.b16 %v3656, %v3607
  %v3706 = vpack.c.b16 %v3657, %v3608
  %v3707 = vpack.c.b16 %v3658, %v3609
  %v3708 = vpack.c.b16 %v3659, %v3610
  %v3709 = vpack.c.b16 %v3660, %v3611
  %v3710 = vpack.c.b16 %v3661, %v3612
  %v3711 = vpack.c.b16 %v3662, %v3613
  %v3712 = vpack.c.b16 %v3663, %v3614
  %v3713 = vpack.c.b16 %v3664, %v3615
  %v3714 = vpack.c.b16 %v3665, %v3616
  %v3715 = vpack.c.b16 %v3666, %v3617
  %v3717 = vand.u32 %v3667, %v276
  %v3720 = vand.u32 %v3668, %v276
  %v3723 = vand.u32 %v3669, %v276
  %v3726 = vand.u32 %v3670, %v276
  %v3729 = vand.u32 %v3671, %v276
  %v3732 = vand.u32 %v3672, %v276
  %v3735 = vand.u32 %v3673, %v276
  %v3738 = vand.u32 %v3674, %v276
  %v3741 = vand.u32 %v3675, %v276
  %v3744 = vand.u32 %v3676, %v276
  %v3747 = vand.u32 %v3677, %v276
  %v3750 = vand.u32 %v3678, %v276
  %v3753 = vand.u32 %v3679, %v276
  %v3756 = vand.u32 %v3680, %v276
  %v3759 = vand.u32 %v3681, %v276
  %v3762 = vand.u32 %v3682, %v276
  %v3765 = vand.u32 %v3683, %v276
  %v3768 = vand.u32 %v3684, %v276
  %v3771 = vand.u32 %v3685, %v276
  %v3774 = vand.u32 %v3686, %v276
  %v3777 = vand.u32 %v3687, %v276
  %v3780 = vand.u32 %v3688, %v276
  %v3783 = vand.u32 %v3689, %v276
  %v3786 = vand.u32 %v3690, %v276
  %v3789 = vand.u32 %v3691, %v276
  %v3792 = vand.u32 %v3692, %v276
  %v3795 = vand.u32 %v3693, %v276
  %v3798 = vand.u32 %v3694, %v276
  %v3801 = vand.u32 %v3695, %v276
  %v3804 = vand.u32 %v3696, %v276
  %v3807 = vand.u32 %v3697, %v276
  %v3810 = vand.u32 %v3698, %v276
  %v3813 = vand.u32 %v3699, %v276
  %v3816 = vand.u32 %v3700, %v276
  %v3819 = vand.u32 %v3701, %v276
  %v3822 = vand.u32 %v3702, %v276
  %v3825 = vand.u32 %v3703, %v276
  %v3828 = vand.u32 %v3704, %v276
  %v3831 = vand.u32 %v3705, %v276
  %v3834 = vand.u32 %v3706, %v276
  %v3837 = vand.u32 %v3707, %v276
  %v3840 = vand.u32 %v3708, %v276
  %v3843 = vand.u32 %v3709, %v276
  %v3846 = vand.u32 %v3710, %v276
  %v3849 = vand.u32 %v3711, %v276
  %v3852 = vand.u32 %v3712, %v276
  %v3855 = vand.u32 %v3713, %v276
  %v3858 = vand.u32 %v3714, %v276
  %v3861 = vand.u32 %v3715, %v276
  %3863 = vmatpush.bf16.msra.mxu0 0
  %3864 = vmatpush.bf16.msra.mxu0 0
  %3865 = vmatpush.bf16.msra.mxu0 0
  %3866 = vmatpush.bf16.msra.mxu0 0
  %3867 = vmatpush.bf16.msra.mxu0 0
  %3868 = vmatpush.bf16.msra.mxu0 0
  %3869 = vmatpush.bf16.msra.mxu0 0
  %3870 = vmatpush.bf16.msra.mxu0 %v3717
  %3871 = vmatmul.bf16.gmra.mxu0 %v271
  %v3872 = vpop.f32.mrf.mxu0
  %v3873 = vadd.f32 0.0, %v3872
  %v3874 = vpop.f32.mrf.mxu0
  %v3875 = vadd.f32 0.0, %v3874
  %3876 = vdwg.mxu0
  %3877 = vmatpush.bf16.msra.mxu0 0
  %3878 = vmatpush.bf16.msra.mxu0 0
  %3879 = vmatpush.bf16.msra.mxu0 0
  %3880 = vmatpush.bf16.msra.mxu0 0
  %3881 = vmatpush.bf16.msra.mxu0 0
  %3882 = vmatpush.bf16.msra.mxu0 0
  %3883 = vmatpush.bf16.msra.mxu0 0
  %3884 = vmatpush.bf16.msra.mxu0 %v3720
  %3885 = vmatmul.bf16.gmra.mxu0 %v271
  %v3886 = vpop.f32.mrf.mxu0
  %v3887 = vadd.f32 0.0, %v3886
  %v3888 = vpop.f32.mrf.mxu0
  %v3889 = vadd.f32 0.0, %v3888
  %3890 = vdwg.mxu0
  %3891 = vmatpush.bf16.msra.mxu0 0
  %3892 = vmatpush.bf16.msra.mxu0 0
  %3893 = vmatpush.bf16.msra.mxu0 0
  %3894 = vmatpush.bf16.msra.mxu0 0
  %3895 = vmatpush.bf16.msra.mxu0 0
  %3896 = vmatpush.bf16.msra.mxu0 0
  %3897 = vmatpush.bf16.msra.mxu0 0
  %3898 = vmatpush.bf16.msra.mxu0 %v3723
  %3899 = vmatmul.bf16.gmra.mxu0 %v271
  %v3900 = vpop.f32.mrf.mxu0
  %v3901 = vadd.f32 0.0, %v3900
  %v3902 = vpop.f32.mrf.mxu0
  %v3903 = vadd.f32 0.0, %v3902
  %3904 = vdwg.mxu0
  %3905 = vmatpush.bf16.msra.mxu0 0
  %3906 = vmatpush.bf16.msra.mxu0 0
  %3907 = vmatpush.bf16.msra.mxu0 0
  %3908 = vmatpush.bf16.msra.mxu0 0
  %3909 = vmatpush.bf16.msra.mxu0 0
  %3910 = vmatpush.bf16.msra.mxu0 0
  %3911 = vmatpush.bf16.msra.mxu0 0
  %3912 = vmatpush.bf16.msra.mxu0 %v3726
  %3913 = vmatmul.bf16.gmra.mxu0 %v271
  %v3914 = vpop.f32.mrf.mxu0
  %v3915 = vadd.f32 0.0, %v3914
  %v3916 = vpop.f32.mrf.mxu0
  %v3917 = vadd.f32 0.0, %v3916
  %3918 = vdwg.mxu0
  %3919 = vmatpush.bf16.msra.mxu0 0
  %3920 = vmatpush.bf16.msra.mxu0 0
  %3921 = vmatpush.bf16.msra.mxu0 0
  %3922 = vmatpush.bf16.msra.mxu0 0
  %3923 = vmatpush.bf16.msra.mxu0 0
  %3924 = vmatpush.bf16.msra.mxu0 0
  %3925 = vmatpush.bf16.msra.mxu0 0
  %3926 = vmatpush.bf16.msra.mxu0 %v3729
  %3927 = vmatmul.bf16.gmra.mxu0 %v271
  %v3928 = vpop.f32.mrf.mxu0
  %v3929 = vadd.f32 0.0, %v3928
  %v3930 = vpop.f32.mrf.mxu0
  %v3931 = vadd.f32 0.0, %v3930
  %3932 = vdwg.mxu0
  %3933 = vmatpush.bf16.msra.mxu0 0
  %3934 = vmatpush.bf16.msra.mxu0 0
  %3935 = vmatpush.bf16.msra.mxu0 0
  %3936 = vmatpush.bf16.msra.mxu0 0
  %3937 = vmatpush.bf16.msra.mxu0 0
  %3938 = vmatpush.bf16.msra.mxu0 0
  %3939 = vmatpush.bf16.msra.mxu0 0
  %3940 = vmatpush.bf16.msra.mxu0 %v3732
  %3941 = vmatmul.bf16.gmra.mxu0 %v271
  %v3942 = vpop.f32.mrf.mxu0
  %v3943 = vadd.f32 0.0, %v3942
  %v3944 = vpop.f32.mrf.mxu0
  %v3945 = vadd.f32 0.0, %v3944
  %3946 = vdwg.mxu0
  %3947 = vmatpush.bf16.msra.mxu0 0
  %3948 = vmatpush.bf16.msra.mxu0 0
  %3949 = vmatpush.bf16.msra.mxu0 0
  %3950 = vmatpush.bf16.msra.mxu0 0
  %3951 = vmatpush.bf16.msra.mxu0 0
  %3952 = vmatpush.bf16.msra.mxu0 0
  %3953 = vmatpush.bf16.msra.mxu0 0
  %3954 = vmatpush.bf16.msra.mxu0 %v3735
  %3955 = vmatmul.bf16.gmra.mxu0 %v271
  %v3956 = vpop.f32.mrf.mxu0
  %v3957 = vadd.f32 0.0, %v3956
  %v3958 = vpop.f32.mrf.mxu0
  %v3959 = vadd.f32 0.0, %v3958
  %3960 = vdwg.mxu0
  %3961 = vmatpush.bf16.msra.mxu0 0
  %3962 = vmatpush.bf16.msra.mxu0 0
  %3963 = vmatpush.bf16.msra.mxu0 0
  %3964 = vmatpush.bf16.msra.mxu0 0
  %3965 = vmatpush.bf16.msra.mxu0 0
  %3966 = vmatpush.bf16.msra.mxu0 0
  %3967 = vmatpush.bf16.msra.mxu0 0
  %3968 = vmatpush.bf16.msra.mxu0 %v3738
  %3969 = vmatmul.bf16.gmra.mxu0 %v271
  %v3970 = vpop.f32.mrf.mxu0
  %v3971 = vadd.f32 0.0, %v3970
  %v3972 = vpop.f32.mrf.mxu0
  %v3973 = vadd.f32 0.0, %v3972
  %3974 = vdwg.mxu0
  %3975 = vmatpush.bf16.msra.mxu0 0
  %3976 = vmatpush.bf16.msra.mxu0 0
  %3977 = vmatpush.bf16.msra.mxu0 0
  %3978 = vmatpush.bf16.msra.mxu0 0
  %3979 = vmatpush.bf16.msra.mxu0 0
  %3980 = vmatpush.bf16.msra.mxu0 0
  %3981 = vmatpush.bf16.msra.mxu0 0
  %3982 = vmatpush.bf16.msra.mxu0 %v3741
  %3983 = vmatmul.bf16.gmra.mxu0 %v271
  %v3984 = vpop.f32.mrf.mxu0
  %v3985 = vadd.f32 0.0, %v3984
  %v3986 = vpop.f32.mrf.mxu0
  %v3987 = vadd.f32 0.0, %v3986
  %3988 = vdwg.mxu0
  %3989 = vmatpush.bf16.msra.mxu0 0
  %3990 = vmatpush.bf16.msra.mxu0 0
  %3991 = vmatpush.bf16.msra.mxu0 0
  %3992 = vmatpush.bf16.msra.mxu0 0
  %3993 = vmatpush.bf16.msra.mxu0 0
  %3994 = vmatpush.bf16.msra.mxu0 0
  %3995 = vmatpush.bf16.msra.mxu0 0
  %3996 = vmatpush.bf16.msra.mxu0 %v3744
  %3997 = vmatmul.bf16.gmra.mxu0 %v271
  %v3998 = vpop.f32.mrf.mxu0
  %v3999 = vadd.f32 0.0, %v3998
  %v4000 = vpop.f32.mrf.mxu0
  %v4001 = vadd.f32 0.0, %v4000
  %4002 = vdwg.mxu0
  %4003 = vmatpush.bf16.msra.mxu0 0
  %4004 = vmatpush.bf16.msra.mxu0 0
  %4005 = vmatpush.bf16.msra.mxu0 0
  %4006 = vmatpush.bf16.msra.mxu0 0
  %4007 = vmatpush.bf16.msra.mxu0 0
  %4008 = vmatpush.bf16.msra.mxu0 0
  %4009 = vmatpush.bf16.msra.mxu0 0
  %4010 = vmatpush.bf16.msra.mxu0 %v3747
  %4011 = vmatmul.bf16.gmra.mxu0 %v271
  %v4012 = vpop.f32.mrf.mxu0
  %v4013 = vadd.f32 0.0, %v4012
  %v4014 = vpop.f32.mrf.mxu0
  %v4015 = vadd.f32 0.0, %v4014
  %4016 = vdwg.mxu0
  %4017 = vmatpush.bf16.msra.mxu0 0
  %4018 = vmatpush.bf16.msra.mxu0 0
  %4019 = vmatpush.bf16.msra.mxu0 0
  %4020 = vmatpush.bf16.msra.mxu0 0
  %4021 = vmatpush.bf16.msra.mxu0 0
  %4022 = vmatpush.bf16.msra.mxu0 0
  %4023 = vmatpush.bf16.msra.mxu0 0
  %4024 = vmatpush.bf16.msra.mxu0 %v3750
  %4025 = vmatmul.bf16.gmra.mxu0 %v271
  %v4026 = vpop.f32.mrf.mxu0
  %v4027 = vadd.f32 0.0, %v4026
  %v4028 = vpop.f32.mrf.mxu0
  %v4029 = vadd.f32 0.0, %v4028
  %4030 = vdwg.mxu0
  %4031 = vmatpush.bf16.msra.mxu0 0
  %4032 = vmatpush.bf16.msra.mxu0 0
  %4033 = vmatpush.bf16.msra.mxu0 0
  %4034 = vmatpush.bf16.msra.mxu0 0
  %4035 = vmatpush.bf16.msra.mxu0 0
  %4036 = vmatpush.bf16.msra.mxu0 0
  %4037 = vmatpush.bf16.msra.mxu0 0
  %4038 = vmatpush.bf16.msra.mxu0 %v3753
  %4039 = vmatmul.bf16.gmra.mxu0 %v271
  %v4040 = vpop.f32.mrf.mxu0
  %v4041 = vadd.f32 0.0, %v4040
  %v4042 = vpop.f32.mrf.mxu0
  %v4043 = vadd.f32 0.0, %v4042
  %4044 = vdwg.mxu0
  %4045 = vmatpush.bf16.msra.mxu0 0
  %4046 = vmatpush.bf16.msra.mxu0 0
  %4047 = vmatpush.bf16.msra.mxu0 0
  %4048 = vmatpush.bf16.msra.mxu0 0
  %4049 = vmatpush.bf16.msra.mxu0 0
  %4050 = vmatpush.bf16.msra.mxu0 0
  %4051 = vmatpush.bf16.msra.mxu0 0
  %4052 = vmatpush.bf16.msra.mxu0 %v3756
  %4053 = vmatmul.bf16.gmra.mxu0 %v271
  %v4054 = vpop.f32.mrf.mxu0
  %v4055 = vadd.f32 0.0, %v4054
  %v4056 = vpop.f32.mrf.mxu0
  %v4057 = vadd.f32 0.0, %v4056
  %4058 = vdwg.mxu0
  %4059 = vmatpush.bf16.msra.mxu0 0
  %4060 = vmatpush.bf16.msra.mxu0 0
  %4061 = vmatpush.bf16.msra.mxu0 0
  %4062 = vmatpush.bf16.msra.mxu0 0
  %4063 = vmatpush.bf16.msra.mxu0 0
  %4064 = vmatpush.bf16.msra.mxu0 0
  %4065 = vmatpush.bf16.msra.mxu0 0
  %4066 = vmatpush.bf16.msra.mxu0 %v3759
  %4067 = vmatmul.bf16.gmra.mxu0 %v271
  %v4068 = vpop.f32.mrf.mxu0
  %v4069 = vadd.f32 0.0, %v4068
  %v4070 = vpop.f32.mrf.mxu0
  %v4071 = vadd.f32 0.0, %v4070
  %4072 = vdwg.mxu0
  %4073 = vmatpush.bf16.msra.mxu0 0
  %4074 = vmatpush.bf16.msra.mxu0 0
  %4075 = vmatpush.bf16.msra.mxu0 0
  %4076 = vmatpush.bf16.msra.mxu0 0
  %4077 = vmatpush.bf16.msra.mxu0 0
  %4078 = vmatpush.bf16.msra.mxu0 0
  %4079 = vmatpush.bf16.msra.mxu0 0
  %4080 = vmatpush.bf16.msra.mxu0 %v3762
  %4081 = vmatmul.bf16.gmra.mxu0 %v271
  %v4082 = vpop.f32.mrf.mxu0
  %v4083 = vadd.f32 0.0, %v4082
  %v4084 = vpop.f32.mrf.mxu0
  %v4085 = vadd.f32 0.0, %v4084
  %4086 = vdwg.mxu0
  %4087 = vmatpush.bf16.msra.mxu0 0
  %4088 = vmatpush.bf16.msra.mxu0 0
  %4089 = vmatpush.bf16.msra.mxu0 0
  %4090 = vmatpush.bf16.msra.mxu0 0
  %4091 = vmatpush.bf16.msra.mxu0 0
  %4092 = vmatpush.bf16.msra.mxu0 0
  %4093 = vmatpush.bf16.msra.mxu0 0
  %4094 = vmatpush.bf16.msra.mxu0 %v3765
  %4095 = vmatmul.bf16.gmra.mxu0 %v271
  %v4096 = vpop.f32.mrf.mxu0
  %v4097 = vadd.f32 0.0, %v4096
  %v4098 = vpop.f32.mrf.mxu0
  %v4099 = vadd.f32 0.0, %v4098
  %4100 = vdwg.mxu0
  %4101 = vmatpush.bf16.msra.mxu0 0
  %4102 = vmatpush.bf16.msra.mxu0 0
  %4103 = vmatpush.bf16.msra.mxu0 0
  %4104 = vmatpush.bf16.msra.mxu0 0
  %4105 = vmatpush.bf16.msra.mxu0 0
  %4106 = vmatpush.bf16.msra.mxu0 0
  %4107 = vmatpush.bf16.msra.mxu0 0
  %4108 = vmatpush.bf16.msra.mxu0 %v3768
  %4109 = vmatmul.bf16.gmra.mxu0 %v271
  %v4110 = vpop.f32.mrf.mxu0
  %v4111 = vadd.f32 0.0, %v4110
  %v4112 = vpop.f32.mrf.mxu0
  %v4113 = vadd.f32 0.0, %v4112
  %4114 = vdwg.mxu0
  %4115 = vmatpush.bf16.msra.mxu0 0
  %4116 = vmatpush.bf16.msra.mxu0 0
  %4117 = vmatpush.bf16.msra.mxu0 0
  %4118 = vmatpush.bf16.msra.mxu0 0
  %4119 = vmatpush.bf16.msra.mxu0 0
  %4120 = vmatpush.bf16.msra.mxu0 0
  %4121 = vmatpush.bf16.msra.mxu0 0
  %4122 = vmatpush.bf16.msra.mxu0 %v3771
  %4123 = vmatmul.bf16.gmra.mxu0 %v271
  %v4124 = vpop.f32.mrf.mxu0
  %v4125 = vadd.f32 0.0, %v4124
  %v4126 = vpop.f32.mrf.mxu0
  %v4127 = vadd.f32 0.0, %v4126
  %4128 = vdwg.mxu0
  %4129 = vmatpush.bf16.msra.mxu0 0
  %4130 = vmatpush.bf16.msra.mxu0 0
  %4131 = vmatpush.bf16.msra.mxu0 0
  %4132 = vmatpush.bf16.msra.mxu0 0
  %4133 = vmatpush.bf16.msra.mxu0 0
  %4134 = vmatpush.bf16.msra.mxu0 0
  %4135 = vmatpush.bf16.msra.mxu0 0
  %4136 = vmatpush.bf16.msra.mxu0 %v3774
  %4137 = vmatmul.bf16.gmra.mxu0 %v271
  %v4138 = vpop.f32.mrf.mxu0
  %v4139 = vadd.f32 0.0, %v4138
  %v4140 = vpop.f32.mrf.mxu0
  %v4141 = vadd.f32 0.0, %v4140
  %4142 = vdwg.mxu0
  %4143 = vmatpush.bf16.msra.mxu0 0
  %4144 = vmatpush.bf16.msra.mxu0 0
  %4145 = vmatpush.bf16.msra.mxu0 0
  %4146 = vmatpush.bf16.msra.mxu0 0
  %4147 = vmatpush.bf16.msra.mxu0 0
  %4148 = vmatpush.bf16.msra.mxu0 0
  %4149 = vmatpush.bf16.msra.mxu0 0
  %4150 = vmatpush.bf16.msra.mxu0 %v3777
  %4151 = vmatmul.bf16.gmra.mxu0 %v271
  %v4152 = vpop.f32.mrf.mxu0
  %v4153 = vadd.f32 0.0, %v4152
  %v4154 = vpop.f32.mrf.mxu0
  %v4155 = vadd.f32 0.0, %v4154
  %4156 = vdwg.mxu0
  %4157 = vmatpush.bf16.msra.mxu0 0
  %4158 = vmatpush.bf16.msra.mxu0 0
  %4159 = vmatpush.bf16.msra.mxu0 0
  %4160 = vmatpush.bf16.msra.mxu0 0
  %4161 = vmatpush.bf16.msra.mxu0 0
  %4162 = vmatpush.bf16.msra.mxu0 0
  %4163 = vmatpush.bf16.msra.mxu0 0
  %4164 = vmatpush.bf16.msra.mxu0 %v3780
  %4165 = vmatmul.bf16.gmra.mxu0 %v271
  %v4166 = vpop.f32.mrf.mxu0
  %v4167 = vadd.f32 0.0, %v4166
  %v4168 = vpop.f32.mrf.mxu0
  %v4169 = vadd.f32 0.0, %v4168
  %4170 = vdwg.mxu0
  %4171 = vmatpush.bf16.msra.mxu0 0
  %4172 = vmatpush.bf16.msra.mxu0 0
  %4173 = vmatpush.bf16.msra.mxu0 0
  %4174 = vmatpush.bf16.msra.mxu0 0
  %4175 = vmatpush.bf16.msra.mxu0 0
  %4176 = vmatpush.bf16.msra.mxu0 0
  %4177 = vmatpush.bf16.msra.mxu0 0
  %4178 = vmatpush.bf16.msra.mxu0 %v3783
  %4179 = vmatmul.bf16.gmra.mxu0 %v271
  %v4180 = vpop.f32.mrf.mxu0
  %v4181 = vadd.f32 0.0, %v4180
  %v4182 = vpop.f32.mrf.mxu0
  %v4183 = vadd.f32 0.0, %v4182
  %4184 = vdwg.mxu0
  %4185 = vmatpush.bf16.msra.mxu0 0
  %4186 = vmatpush.bf16.msra.mxu0 0
  %4187 = vmatpush.bf16.msra.mxu0 0
  %4188 = vmatpush.bf16.msra.mxu0 0
  %4189 = vmatpush.bf16.msra.mxu0 0
  %4190 = vmatpush.bf16.msra.mxu0 0
  %4191 = vmatpush.bf16.msra.mxu0 0
  %4192 = vmatpush.bf16.msra.mxu0 %v3786
  %4193 = vmatmul.bf16.gmra.mxu0 %v271
  %v4194 = vpop.f32.mrf.mxu0
  %v4195 = vadd.f32 0.0, %v4194
  %v4196 = vpop.f32.mrf.mxu0
  %v4197 = vadd.f32 0.0, %v4196
  %4198 = vdwg.mxu0
  %4199 = vmatpush.bf16.msra.mxu0 0
  %4200 = vmatpush.bf16.msra.mxu0 0
  %4201 = vmatpush.bf16.msra.mxu0 0
  %4202 = vmatpush.bf16.msra.mxu0 0
  %4203 = vmatpush.bf16.msra.mxu0 0
  %4204 = vmatpush.bf16.msra.mxu0 0
  %4205 = vmatpush.bf16.msra.mxu0 0
  %4206 = vmatpush.bf16.msra.mxu0 %v3789
  %4207 = vmatmul.bf16.gmra.mxu0 %v271
  %v4208 = vpop.f32.mrf.mxu0
  %v4209 = vadd.f32 0.0, %v4208
  %v4210 = vpop.f32.mrf.mxu0
  %v4211 = vadd.f32 0.0, %v4210
  %4212 = vdwg.mxu0
  %4213 = vmatpush.bf16.msra.mxu0 0
  %4214 = vmatpush.bf16.msra.mxu0 0
  %4215 = vmatpush.bf16.msra.mxu0 0
  %4216 = vmatpush.bf16.msra.mxu0 0
  %4217 = vmatpush.bf16.msra.mxu0 0
  %4218 = vmatpush.bf16.msra.mxu0 0
  %4219 = vmatpush.bf16.msra.mxu0 0
  %4220 = vmatpush.bf16.msra.mxu0 %v3792
  %4221 = vmatmul.bf16.gmra.mxu0 %v271
  %v4222 = vpop.f32.mrf.mxu0
  %v4223 = vadd.f32 0.0, %v4222
  %v4224 = vpop.f32.mrf.mxu0
  %v4225 = vadd.f32 0.0, %v4224
  %4226 = vdwg.mxu0
  %4227 = vmatpush.bf16.msra.mxu0 0
  %4228 = vmatpush.bf16.msra.mxu0 0
  %4229 = vmatpush.bf16.msra.mxu0 0
  %4230 = vmatpush.bf16.msra.mxu0 0
  %4231 = vmatpush.bf16.msra.mxu0 0
  %4232 = vmatpush.bf16.msra.mxu0 0
  %4233 = vmatpush.bf16.msra.mxu0 0
  %4234 = vmatpush.bf16.msra.mxu0 %v3795
  %4235 = vmatmul.bf16.gmra.mxu0 %v271
  %v4236 = vpop.f32.mrf.mxu0
  %v4237 = vadd.f32 0.0, %v4236
  %v4238 = vpop.f32.mrf.mxu0
  %v4239 = vadd.f32 0.0, %v4238
  %4240 = vdwg.mxu0
  %4241 = vmatpush.bf16.msra.mxu0 0
  %4242 = vmatpush.bf16.msra.mxu0 0
  %4243 = vmatpush.bf16.msra.mxu0 0
  %4244 = vmatpush.bf16.msra.mxu0 0
  %4245 = vmatpush.bf16.msra.mxu0 0
  %4246 = vmatpush.bf16.msra.mxu0 0
  %4247 = vmatpush.bf16.msra.mxu0 0
  %4248 = vmatpush.bf16.msra.mxu0 %v3798
  %4249 = vmatmul.bf16.gmra.mxu0 %v271
  %v4250 = vpop.f32.mrf.mxu0
  %v4251 = vadd.f32 0.0, %v4250
  %v4252 = vpop.f32.mrf.mxu0
  %v4253 = vadd.f32 0.0, %v4252
  %4254 = vdwg.mxu0
  %4255 = vmatpush.bf16.msra.mxu0 0
  %4256 = vmatpush.bf16.msra.mxu0 0
  %4257 = vmatpush.bf16.msra.mxu0 0
  %4258 = vmatpush.bf16.msra.mxu0 0
  %4259 = vmatpush.bf16.msra.mxu0 0
  %4260 = vmatpush.bf16.msra.mxu0 0
  %4261 = vmatpush.bf16.msra.mxu0 0
  %4262 = vmatpush.bf16.msra.mxu0 %v3801
  %4263 = vmatmul.bf16.gmra.mxu0 %v271
  %v4264 = vpop.f32.mrf.mxu0
  %v4265 = vadd.f32 0.0, %v4264
  %v4266 = vpop.f32.mrf.mxu0
  %v4267 = vadd.f32 0.0, %v4266
  %4268 = vdwg.mxu0
  %4269 = vmatpush.bf16.msra.mxu0 0
  %4270 = vmatpush.bf16.msra.mxu0 0
  %4271 = vmatpush.bf16.msra.mxu0 0
  %4272 = vmatpush.bf16.msra.mxu0 0
  %4273 = vmatpush.bf16.msra.mxu0 0
  %4274 = vmatpush.bf16.msra.mxu0 0
  %4275 = vmatpush.bf16.msra.mxu0 0
  %4276 = vmatpush.bf16.msra.mxu0 %v3804
  %4277 = vmatmul.bf16.gmra.mxu0 %v271
  %v4278 = vpop.f32.mrf.mxu0
  %v4279 = vadd.f32 0.0, %v4278
  %v4280 = vpop.f32.mrf.mxu0
  %v4281 = vadd.f32 0.0, %v4280
  %4282 = vdwg.mxu0
  %4283 = vmatpush.bf16.msra.mxu0 0
  %4284 = vmatpush.bf16.msra.mxu0 0
  %4285 = vmatpush.bf16.msra.mxu0 0
  %4286 = vmatpush.bf16.msra.mxu0 0
  %4287 = vmatpush.bf16.msra.mxu0 0
  %4288 = vmatpush.bf16.msra.mxu0 0
  %4289 = vmatpush.bf16.msra.mxu0 0
  %4290 = vmatpush.bf16.msra.mxu0 %v3807
  %4291 = vmatmul.bf16.gmra.mxu0 %v271
  %v4292 = vpop.f32.mrf.mxu0
  %v4293 = vadd.f32 0.0, %v4292
  %v4294 = vpop.f32.mrf.mxu0
  %v4295 = vadd.f32 0.0, %v4294
  %4296 = vdwg.mxu0
  %4297 = vmatpush.bf16.msra.mxu0 0
  %4298 = vmatpush.bf16.msra.mxu0 0
  %4299 = vmatpush.bf16.msra.mxu0 0
  %4300 = vmatpush.bf16.msra.mxu0 0
  %4301 = vmatpush.bf16.msra.mxu0 0
  %4302 = vmatpush.bf16.msra.mxu0 0
  %4303 = vmatpush.bf16.msra.mxu0 0
  %4304 = vmatpush.bf16.msra.mxu0 %v3810
  %4305 = vmatmul.bf16.gmra.mxu0 %v271
  %v4306 = vpop.f32.mrf.mxu0
  %v4307 = vadd.f32 0.0, %v4306
  %v4308 = vpop.f32.mrf.mxu0
  %v4309 = vadd.f32 0.0, %v4308
  %4310 = vdwg.mxu0
  %4311 = vmatpush.bf16.msra.mxu0 0
  %4312 = vmatpush.bf16.msra.mxu0 0
  %4313 = vmatpush.bf16.msra.mxu0 0
  %4314 = vmatpush.bf16.msra.mxu0 0
  %4315 = vmatpush.bf16.msra.mxu0 0
  %4316 = vmatpush.bf16.msra.mxu0 0
  %4317 = vmatpush.bf16.msra.mxu0 0
  %4318 = vmatpush.bf16.msra.mxu0 %v3813
  %4319 = vmatmul.bf16.gmra.mxu0 %v271
  %v4320 = vpop.f32.mrf.mxu0
  %v4321 = vadd.f32 0.0, %v4320
  %v4322 = vpop.f32.mrf.mxu0
  %v4323 = vadd.f32 0.0, %v4322
  %4324 = vdwg.mxu0
  %4325 = vmatpush.bf16.msra.mxu0 0
  %4326 = vmatpush.bf16.msra.mxu0 0
  %4327 = vmatpush.bf16.msra.mxu0 0
  %4328 = vmatpush.bf16.msra.mxu0 0
  %4329 = vmatpush.bf16.msra.mxu0 0
  %4330 = vmatpush.bf16.msra.mxu0 0
  %4331 = vmatpush.bf16.msra.mxu0 0
  %4332 = vmatpush.bf16.msra.mxu0 %v3816
  %4333 = vmatmul.bf16.gmra.mxu0 %v271
  %v4334 = vpop.f32.mrf.mxu0
  %v4335 = vadd.f32 0.0, %v4334
  %v4336 = vpop.f32.mrf.mxu0
  %v4337 = vadd.f32 0.0, %v4336
  %4338 = vdwg.mxu0
  %4339 = vmatpush.bf16.msra.mxu0 0
  %4340 = vmatpush.bf16.msra.mxu0 0
  %4341 = vmatpush.bf16.msra.mxu0 0
  %4342 = vmatpush.bf16.msra.mxu0 0
  %4343 = vmatpush.bf16.msra.mxu0 0
  %4344 = vmatpush.bf16.msra.mxu0 0
  %4345 = vmatpush.bf16.msra.mxu0 0
  %4346 = vmatpush.bf16.msra.mxu0 %v3819
  %4347 = vmatmul.bf16.gmra.mxu0 %v271
  %v4348 = vpop.f32.mrf.mxu0
  %v4349 = vadd.f32 0.0, %v4348
  %v4350 = vpop.f32.mrf.mxu0
  %v4351 = vadd.f32 0.0, %v4350
  %4352 = vdwg.mxu0
  %4353 = vmatpush.bf16.msra.mxu0 0
  %4354 = vmatpush.bf16.msra.mxu0 0
  %4355 = vmatpush.bf16.msra.mxu0 0
  %4356 = vmatpush.bf16.msra.mxu0 0
  %4357 = vmatpush.bf16.msra.mxu0 0
  %4358 = vmatpush.bf16.msra.mxu0 0
  %4359 = vmatpush.bf16.msra.mxu0 0
  %4360 = vmatpush.bf16.msra.mxu0 %v3822
  %4361 = vmatmul.bf16.gmra.mxu0 %v271
  %v4362 = vpop.f32.mrf.mxu0
  %v4363 = vadd.f32 0.0, %v4362
  %v4364 = vpop.f32.mrf.mxu0
  %v4365 = vadd.f32 0.0, %v4364
  %4366 = vdwg.mxu0
  %4367 = vmatpush.bf16.msra.mxu0 0
  %4368 = vmatpush.bf16.msra.mxu0 0
  %4369 = vmatpush.bf16.msra.mxu0 0
  %4370 = vmatpush.bf16.msra.mxu0 0
  %4371 = vmatpush.bf16.msra.mxu0 0
  %4372 = vmatpush.bf16.msra.mxu0 0
  %4373 = vmatpush.bf16.msra.mxu0 0
  %4374 = vmatpush.bf16.msra.mxu0 %v3825
  %4375 = vmatmul.bf16.gmra.mxu0 %v271
  %v4376 = vpop.f32.mrf.mxu0
  %v4377 = vadd.f32 0.0, %v4376
  %v4378 = vpop.f32.mrf.mxu0
  %v4379 = vadd.f32 0.0, %v4378
  %4380 = vdwg.mxu0
  %4381 = vmatpush.bf16.msra.mxu0 0
  %4382 = vmatpush.bf16.msra.mxu0 0
  %4383 = vmatpush.bf16.msra.mxu0 0
  %4384 = vmatpush.bf16.msra.mxu0 0
  %4385 = vmatpush.bf16.msra.mxu0 0
  %4386 = vmatpush.bf16.msra.mxu0 0
  %4387 = vmatpush.bf16.msra.mxu0 0
  %4388 = vmatpush.bf16.msra.mxu0 %v3828
  %4389 = vmatmul.bf16.gmra.mxu0 %v271
  %v4390 = vpop.f32.mrf.mxu0
  %v4391 = vadd.f32 0.0, %v4390
  %v4392 = vpop.f32.mrf.mxu0
  %v4393 = vadd.f32 0.0, %v4392
  %4394 = vdwg.mxu0
  %4395 = vmatpush.bf16.msra.mxu0 0
  %4396 = vmatpush.bf16.msra.mxu0 0
  %4397 = vmatpush.bf16.msra.mxu0 0
  %4398 = vmatpush.bf16.msra.mxu0 0
  %4399 = vmatpush.bf16.msra.mxu0 0
  %4400 = vmatpush.bf16.msra.mxu0 0
  %4401 = vmatpush.bf16.msra.mxu0 0
  %4402 = vmatpush.bf16.msra.mxu0 %v3831
  %4403 = vmatmul.bf16.gmra.mxu0 %v271
  %v4404 = vpop.f32.mrf.mxu0
  %v4405 = vadd.f32 0.0, %v4404
  %v4406 = vpop.f32.mrf.mxu0
  %v4407 = vadd.f32 0.0, %v4406
  %4408 = vdwg.mxu0
  %4409 = vmatpush.bf16.msra.mxu0 0
  %4410 = vmatpush.bf16.msra.mxu0 0
  %4411 = vmatpush.bf16.msra.mxu0 0
  %4412 = vmatpush.bf16.msra.mxu0 0
  %4413 = vmatpush.bf16.msra.mxu0 0
  %4414 = vmatpush.bf16.msra.mxu0 0
  %4415 = vmatpush.bf16.msra.mxu0 0
  %4416 = vmatpush.bf16.msra.mxu0 %v3834
  %4417 = vmatmul.bf16.gmra.mxu0 %v271
  %v4418 = vpop.f32.mrf.mxu0
  %v4419 = vadd.f32 0.0, %v4418
  %v4420 = vpop.f32.mrf.mxu0
  %v4421 = vadd.f32 0.0, %v4420
  %4422 = vdwg.mxu0
  %4423 = vmatpush.bf16.msra.mxu0 0
  %4424 = vmatpush.bf16.msra.mxu0 0
  %4425 = vmatpush.bf16.msra.mxu0 0
  %4426 = vmatpush.bf16.msra.mxu0 0
  %4427 = vmatpush.bf16.msra.mxu0 0
  %4428 = vmatpush.bf16.msra.mxu0 0
  %4429 = vmatpush.bf16.msra.mxu0 0
  %4430 = vmatpush.bf16.msra.mxu0 %v3837
  %4431 = vmatmul.bf16.gmra.mxu0 %v271
  %v4432 = vpop.f32.mrf.mxu0
  %v4433 = vadd.f32 0.0, %v4432
  %v4434 = vpop.f32.mrf.mxu0
  %v4435 = vadd.f32 0.0, %v4434
  %4436 = vdwg.mxu0
  %4437 = vmatpush.bf16.msra.mxu0 0
  %4438 = vmatpush.bf16.msra.mxu0 0
  %4439 = vmatpush.bf16.msra.mxu0 0
  %4440 = vmatpush.bf16.msra.mxu0 0
  %4441 = vmatpush.bf16.msra.mxu0 0
  %4442 = vmatpush.bf16.msra.mxu0 0
  %4443 = vmatpush.bf16.msra.mxu0 0
  %4444 = vmatpush.bf16.msra.mxu0 %v3840
  %4445 = vmatmul.bf16.gmra.mxu0 %v271
  %v4446 = vpop.f32.mrf.mxu0
  %v4447 = vadd.f32 0.0, %v4446
  %v4448 = vpop.f32.mrf.mxu0
  %v4449 = vadd.f32 0.0, %v4448
  %4450 = vdwg.mxu0
  %4451 = vmatpush.bf16.msra.mxu0 0
  %4452 = vmatpush.bf16.msra.mxu0 0
  %4453 = vmatpush.bf16.msra.mxu0 0
  %4454 = vmatpush.bf16.msra.mxu0 0
  %4455 = vmatpush.bf16.msra.mxu0 0
  %4456 = vmatpush.bf16.msra.mxu0 0
  %4457 = vmatpush.bf16.msra.mxu0 0
  %4458 = vmatpush.bf16.msra.mxu0 %v3843
  %4459 = vmatmul.bf16.gmra.mxu0 %v271
  %v4460 = vpop.f32.mrf.mxu0
  %v4461 = vadd.f32 0.0, %v4460
  %v4462 = vpop.f32.mrf.mxu0
  %v4463 = vadd.f32 0.0, %v4462
  %4464 = vdwg.mxu0
  %4465 = vmatpush.bf16.msra.mxu0 0
  %4466 = vmatpush.bf16.msra.mxu0 0
  %4467 = vmatpush.bf16.msra.mxu0 0
  %4468 = vmatpush.bf16.msra.mxu0 0
  %4469 = vmatpush.bf16.msra.mxu0 0
  %4470 = vmatpush.bf16.msra.mxu0 0
  %4471 = vmatpush.bf16.msra.mxu0 0
  %4472 = vmatpush.bf16.msra.mxu0 %v3846
  %4473 = vmatmul.bf16.gmra.mxu0 %v271
  %v4474 = vpop.f32.mrf.mxu0
  %v4475 = vadd.f32 0.0, %v4474
  %v4476 = vpop.f32.mrf.mxu0
  %v4477 = vadd.f32 0.0, %v4476
  %4478 = vdwg.mxu0
  %4479 = vmatpush.bf16.msra.mxu0 0
  %4480 = vmatpush.bf16.msra.mxu0 0
  %4481 = vmatpush.bf16.msra.mxu0 0
  %4482 = vmatpush.bf16.msra.mxu0 0
  %4483 = vmatpush.bf16.msra.mxu0 0
  %4484 = vmatpush.bf16.msra.mxu0 0
  %4485 = vmatpush.bf16.msra.mxu0 0
  %4486 = vmatpush.bf16.msra.mxu0 %v3849
  %4487 = vmatmul.bf16.gmra.mxu0 %v271
  %v4488 = vpop.f32.mrf.mxu0
  %v4489 = vadd.f32 0.0, %v4488
  %v4490 = vpop.f32.mrf.mxu0
  %v4491 = vadd.f32 0.0, %v4490
  %4492 = vdwg.mxu0
  %4493 = vmatpush.bf16.msra.mxu0 0
  %4494 = vmatpush.bf16.msra.mxu0 0
  %4495 = vmatpush.bf16.msra.mxu0 0
  %4496 = vmatpush.bf16.msra.mxu0 0
  %4497 = vmatpush.bf16.msra.mxu0 0
  %4498 = vmatpush.bf16.msra.mxu0 0
  %4499 = vmatpush.bf16.msra.mxu0 0
  %4500 = vmatpush.bf16.msra.mxu0 %v3852
  %4501 = vmatmul.bf16.gmra.mxu0 %v271
  %v4502 = vpop.f32.mrf.mxu0
  %v4503 = vadd.f32 0.0, %v4502
  %v4504 = vpop.f32.mrf.mxu0
  %v4505 = vadd.f32 0.0, %v4504
  %4506 = vdwg.mxu0
  %4507 = vmatpush.bf16.msra.mxu0 0
  %4508 = vmatpush.bf16.msra.mxu0 0
  %4509 = vmatpush.bf16.msra.mxu0 0
  %4510 = vmatpush.bf16.msra.mxu0 0
  %4511 = vmatpush.bf16.msra.mxu0 0
  %4512 = vmatpush.bf16.msra.mxu0 0
  %4513 = vmatpush.bf16.msra.mxu0 0
  %4514 = vmatpush.bf16.msra.mxu0 %v3855
  %4515 = vmatmul.bf16.gmra.mxu0 %v271
  %v4516 = vpop.f32.mrf.mxu0
  %v4517 = vadd.f32 0.0, %v4516
  %v4518 = vpop.f32.mrf.mxu0
  %v4519 = vadd.f32 0.0, %v4518
  %4520 = vdwg.mxu0
  %4521 = vmatpush.bf16.msra.mxu0 0
  %4522 = vmatpush.bf16.msra.mxu0 0
  %4523 = vmatpush.bf16.msra.mxu0 0
  %4524 = vmatpush.bf16.msra.mxu0 0
  %4525 = vmatpush.bf16.msra.mxu0 0
  %4526 = vmatpush.bf16.msra.mxu0 0
  %4527 = vmatpush.bf16.msra.mxu0 0
  %4528 = vmatpush.bf16.msra.mxu0 %v3858
  %4529 = vmatmul.bf16.gmra.mxu0 %v271
  %v4530 = vpop.f32.mrf.mxu0
  %v4531 = vadd.f32 0.0, %v4530
  %v4532 = vpop.f32.mrf.mxu0
  %v4533 = vadd.f32 0.0, %v4532
  %4534 = vdwg.mxu0
  %4535 = vmatpush.bf16.msra.mxu0 0
  %4536 = vmatpush.bf16.msra.mxu0 0
  %4537 = vmatpush.bf16.msra.mxu0 0
  %4538 = vmatpush.bf16.msra.mxu0 0
  %4539 = vmatpush.bf16.msra.mxu0 0
  %4540 = vmatpush.bf16.msra.mxu0 0
  %4541 = vmatpush.bf16.msra.mxu0 0
  %4542 = vmatpush.bf16.msra.mxu0 %v3861
  %4543 = vmatmul.bf16.gmra.mxu0 %v271
  %v4544 = vpop.f32.mrf.mxu0
  %v4545 = vadd.f32 0.0, %v4544
  %v4546 = vpop.f32.mrf.mxu0
  %v4547 = vadd.f32 0.0, %v4546
  %4548 = vdwg.mxu0
  %v4549 = vmax.f32 %v3370, %v3873
  %v4550 = vmax.f32 %v3371, %v3887
  %v4551 = vmax.f32 %v3372, %v3901
  %v4552 = vmax.f32 %v3373, %v3915
  %v4553 = vmax.f32 %v3374, %v3929
  %v4554 = vmax.f32 %v3375, %v3943
  %v4555 = vmax.f32 %v3376, %v3957
  %v4556 = vmax.f32 %v3377, %v3971
  %v4557 = vmax.f32 %v3378, %v3985
  %v4558 = vmax.f32 %v3379, %v3999
  %v4559 = vmax.f32 %v3380, %v4013
  %v4560 = vmax.f32 %v3381, %v4027
  %v4561 = vmax.f32 %v3382, %v4041
  %v4562 = vmax.f32 %v3383, %v4055
  %v4563 = vmax.f32 %v3384, %v4069
  %v4564 = vmax.f32 %v3385, %v4083
  %v4565 = vmax.f32 %v3386, %v4097
  %v4566 = vmax.f32 %v3387, %v4111
  %v4567 = vmax.f32 %v3388, %v4125
  %v4568 = vmax.f32 %v3389, %v4139
  %v4569 = vmax.f32 %v3390, %v4153
  %v4570 = vmax.f32 %v3391, %v4167
  %v4571 = vmax.f32 %v3392, %v4181
  %v4572 = vmax.f32 %v3393, %v4195
  %v4573 = vmax.f32 %v3394, %v4209
  %v4574 = vmax.f32 %v3395, %v4223
  %v4575 = vmax.f32 %v3396, %v4237
  %v4576 = vmax.f32 %v3397, %v4251
  %v4577 = vmax.f32 %v3398, %v4265
  %v4578 = vmax.f32 %v3399, %v4279
  %v4579 = vmax.f32 %v3400, %v4293
  %v4580 = vmax.f32 %v3401, %v4307
  %v4581 = vmax.f32 %v3402, %v4321
  %v4582 = vmax.f32 %v3403, %v4335
  %v4583 = vmax.f32 %v3404, %v4349
  %v4584 = vmax.f32 %v3405, %v4363
  %v4585 = vmax.f32 %v3406, %v4377
  %v4586 = vmax.f32 %v3407, %v4391
  %v4587 = vmax.f32 %v3408, %v4405
  %v4588 = vmax.f32 %v3409, %v4419
  %v4589 = vmax.f32 %v3410, %v4433
  %v4590 = vmax.f32 %v3411, %v4447
  %v4591 = vmax.f32 %v3412, %v4461
  %v4592 = vmax.f32 %v3413, %v4475
  %v4593 = vmax.f32 %v3414, %v4489
  %v4594 = vmax.f32 %v3415, %v4503
  %v4595 = vmax.f32 %v3416, %v4517
  %v4596 = vmax.f32 %v3417, %v4531
  %v4597 = vmax.f32 %v3418, %v4545
  %v4598 = vmax.f32 %v3419, %v3875
  %v4599 = vmax.f32 %v3420, %v3889
  %v4600 = vmax.f32 %v3421, %v3903
  %v4601 = vmax.f32 %v3422, %v3917
  %v4602 = vmax.f32 %v3423, %v3931
  %v4603 = vmax.f32 %v3424, %v3945
  %v4604 = vmax.f32 %v3425, %v3959
  %v4605 = vmax.f32 %v3426, %v3973
  %v4606 = vmax.f32 %v3427, %v3987
  %v4607 = vmax.f32 %v3428, %v4001
  %v4608 = vmax.f32 %v3429, %v4015
  %v4609 = vmax.f32 %v3430, %v4029
  %v4610 = vmax.f32 %v3431, %v4043
  %v4611 = vmax.f32 %v3432, %v4057
  %v4612 = vmax.f32 %v3433, %v4071
  %v4613 = vmax.f32 %v3434, %v4085
  %v4614 = vmax.f32 %v3435, %v4099
  %v4615 = vmax.f32 %v3436, %v4113
  %v4616 = vmax.f32 %v3437, %v4127
  %v4617 = vmax.f32 %v3438, %v4141
  %v4618 = vmax.f32 %v3439, %v4155
  %v4619 = vmax.f32 %v3440, %v4169
  %v4620 = vmax.f32 %v3441, %v4183
  %v4621 = vmax.f32 %v3442, %v4197
  %v4622 = vmax.f32 %v3443, %v4211
  %v4623 = vmax.f32 %v3444, %v4225
  %v4624 = vmax.f32 %v3445, %v4239
  %v4625 = vmax.f32 %v3446, %v4253
  %v4626 = vmax.f32 %v3447, %v4267
  %v4627 = vmax.f32 %v3448, %v4281
  %v4628 = vmax.f32 %v3449, %v4295
  %v4629 = vmax.f32 %v3450, %v4309
  %v4630 = vmax.f32 %v3451, %v4323
  %v4631 = vmax.f32 %v3452, %v4337
  %v4632 = vmax.f32 %v3453, %v4351
  %v4633 = vmax.f32 %v3454, %v4365
  %v4634 = vmax.f32 %v3455, %v4379
  %v4635 = vmax.f32 %v3456, %v4393
  %v4636 = vmax.f32 %v3457, %v4407
  %v4637 = vmax.f32 %v3458, %v4421
  %v4638 = vmax.f32 %v3459, %v4435
  %v4639 = vmax.f32 %v3460, %v4449
  %v4640 = vmax.f32 %v3461, %v4463
  %v4641 = vmax.f32 %v3462, %v4477
  %v4642 = vmax.f32 %v3463, %v4491
  %v4643 = vmax.f32 %v3464, %v4505
  %v4644 = vmax.f32 %v3465, %v4519
  %v4645 = vmax.f32 %v3466, %v4533
  %v4646 = vmax.f32 %v3467, %v4547
  %v4647 = vld [vmem:[%s2] sm:$0xff]
  %v4648 = vld [vmem:[%s2 + $0x8] sm:$0x3]
  %4650 = vset.pattern.permute.xlu0 0
  %4651 = vperm.xlu0 %4650, %v4647
  %v4652 = vpop.permute.xlu0 %4651
  %4655 = vset.pattern.permute.xlu0 0
  %4656 = vperm.xlu0 %4655, %v4648
  %v4657 = vpop.permute.xlu0 %4656
  %v4659 = vadd.f32 %v4549, %v4652
  %v4660 = vadd.f32 %v4550, %v4652
  %v4661 = vadd.f32 %v4551, %v4652
  %v4662 = vadd.f32 %v4552, %v4652
  %v4663 = vadd.f32 %v4553, %v4652
  %v4664 = vadd.f32 %v4554, %v4652
  %v4665 = vadd.f32 %v4555, %v4652
  %v4666 = vadd.f32 %v4556, %v4652
  %v4667 = vadd.f32 %v4557, %v4652
  %v4668 = vadd.f32 %v4558, %v4652
  %v4669 = vadd.f32 %v4559, %v4652
  %v4670 = vadd.f32 %v4560, %v4652
  %v4671 = vadd.f32 %v4561, %v4652
  %v4672 = vadd.f32 %v4562, %v4652
  %v4673 = vadd.f32 %v4563, %v4652
  %v4674 = vadd.f32 %v4564, %v4652
  %v4675 = vadd.f32 %v4565, %v4652
  %v4676 = vadd.f32 %v4566, %v4652
  %v4677 = vadd.f32 %v4567, %v4652
  %v4678 = vadd.f32 %v4568, %v4652
  %v4679 = vadd.f32 %v4569, %v4652
  %v4680 = vadd.f32 %v4570, %v4652
  %v4681 = vadd.f32 %v4571, %v4652
  %v4682 = vadd.f32 %v4572, %v4652
  %v4683 = vadd.f32 %v4573, %v4652
  %v4684 = vadd.f32 %v4574, %v4652
  %v4685 = vadd.f32 %v4575, %v4652
  %v4686 = vadd.f32 %v4576, %v4652
  %v4687 = vadd.f32 %v4577, %v4652
  %v4688 = vadd.f32 %v4578, %v4652
  %v4689 = vadd.f32 %v4579, %v4652
  %v4690 = vadd.f32 %v4580, %v4652
  %v4691 = vadd.f32 %v4581, %v4652
  %v4692 = vadd.f32 %v4582, %v4652
  %v4693 = vadd.f32 %v4583, %v4652
  %v4694 = vadd.f32 %v4584, %v4652
  %v4695 = vadd.f32 %v4585, %v4652
  %v4696 = vadd.f32 %v4586, %v4652
  %v4697 = vadd.f32 %v4587, %v4652
  %v4698 = vadd.f32 %v4588, %v4652
  %v4699 = vadd.f32 %v4589, %v4652
  %v4700 = vadd.f32 %v4590, %v4652
  %v4701 = vadd.f32 %v4591, %v4652
  %v4702 = vadd.f32 %v4592, %v4652
  %v4703 = vadd.f32 %v4593, %v4652
  %v4704 = vadd.f32 %v4594, %v4652
  %v4705 = vadd.f32 %v4595, %v4652
  %v4706 = vadd.f32 %v4596, %v4652
  %v4707 = vadd.f32 %v4597, %v4652
  %v4708 = vadd.f32 %v4598, %v4657
  %v4709 = vadd.f32 %v4599, %v4657
  %v4710 = vadd.f32 %v4600, %v4657
  %v4711 = vadd.f32 %v4601, %v4657
  %v4712 = vadd.f32 %v4602, %v4657
  %v4713 = vadd.f32 %v4603, %v4657
  %v4714 = vadd.f32 %v4604, %v4657
  %v4715 = vadd.f32 %v4605, %v4657
  %v4716 = vadd.f32 %v4606, %v4657
  %v4717 = vadd.f32 %v4607, %v4657
  %v4718 = vadd.f32 %v4608, %v4657
  %v4719 = vadd.f32 %v4609, %v4657
  %v4720 = vadd.f32 %v4610, %v4657
  %v4721 = vadd.f32 %v4611, %v4657
  %v4722 = vadd.f32 %v4612, %v4657
  %v4723 = vadd.f32 %v4613, %v4657
  %v4724 = vadd.f32 %v4614, %v4657
  %v4725 = vadd.f32 %v4615, %v4657
  %v4726 = vadd.f32 %v4616, %v4657
  %v4727 = vadd.f32 %v4617, %v4657
  %v4728 = vadd.f32 %v4618, %v4657
  %v4729 = vadd.f32 %v4619, %v4657
  %v4730 = vadd.f32 %v4620, %v4657
  %v4731 = vadd.f32 %v4621, %v4657
  %v4732 = vadd.f32 %v4622, %v4657
  %v4733 = vadd.f32 %v4623, %v4657
  %v4734 = vadd.f32 %v4624, %v4657
  %v4735 = vadd.f32 %v4625, %v4657
  %v4736 = vadd.f32 %v4626, %v4657
  %v4737 = vadd.f32 %v4627, %v4657
  %v4738 = vadd.f32 %v4628, %v4657
  %v4739 = vadd.f32 %v4629, %v4657
  %v4740 = vadd.f32 %v4630, %v4657
  %v4741 = vadd.f32 %v4631, %v4657
  %v4742 = vadd.f32 %v4632, %v4657
  %v4743 = vadd.f32 %v4633, %v4657
  %v4744 = vadd.f32 %v4634, %v4657
  %v4745 = vadd.f32 %v4635, %v4657
  %v4746 = vadd.f32 %v4636, %v4657
  %v4747 = vadd.f32 %v4637, %v4657
  %v4748 = vadd.f32 %v4638, %v4657
  %v4749 = vadd.f32 %v4639, %v4657
  %v4750 = vadd.f32 %v4640, %v4657
  %v4751 = vadd.f32 %v4641, %v4657
  %v4752 = vadd.f32 %v4642, %v4657
  %v4753 = vadd.f32 %v4643, %v4657
  %v4754 = vadd.f32 %v4644, %v4657
  %v4755 = vadd.f32 %v4645, %v4657
  %v4756 = vadd.f32 %v4646, %v4657
  %v4757 = vtanh.pop %v4659
  %v4758 = vtanh.pop %v4660
  %v4759 = vtanh.pop %v4661
  %v4760 = vtanh.pop %v4662
  %v4761 = vtanh.pop %v4663
  %v4762 = vtanh.pop %v4664
  %v4763 = vtanh.pop %v4665
  %v4764 = vtanh.pop %v4666
  %v4765 = vtanh.pop %v4667
  %v4766 = vtanh.pop %v4668
  %v4767 = vtanh.pop %v4669
  %v4768 = vtanh.pop %v4670
  %v4769 = vtanh.pop %v4671
  %v4770 = vtanh.pop %v4672
  %v4771 = vtanh.pop %v4673
  %v4772 = vtanh.pop %v4674
  %v4773 = vtanh.pop %v4675
  %v4774 = vtanh.pop %v4676
  %v4775 = vtanh.pop %v4677
  %v4776 = vtanh.pop %v4678
  %v4777 = vtanh.pop %v4679
  %v4778 = vtanh.pop %v4680
  %v4779 = vtanh.pop %v4681
  %v4780 = vtanh.pop %v4682
  %v4781 = vtanh.pop %v4683
  %v4782 = vtanh.pop %v4684
  %v4783 = vtanh.pop %v4685
  %v4784 = vtanh.pop %v4686
  %v4785 = vtanh.pop %v4687
  %v4786 = vtanh.pop %v4688
  %v4787 = vtanh.pop %v4689
  %v4788 = vtanh.pop %v4690
  %v4789 = vtanh.pop %v4691
  %v4790 = vtanh.pop %v4692
  %v4791 = vtanh.pop %v4693
  %v4792 = vtanh.pop %v4694
  %v4793 = vtanh.pop %v4695
  %v4794 = vtanh.pop %v4696
  %v4795 = vtanh.pop %v4697
  %v4796 = vtanh.pop %v4698
  %v4797 = vtanh.pop %v4699
  %v4798 = vtanh.pop %v4700
  %v4799 = vtanh.pop %v4701
  %v4800 = vtanh.pop %v4702
  %v4801 = vtanh.pop %v4703
  %v4802 = vtanh.pop %v4704
  %v4803 = vtanh.pop %v4705
  %v4804 = vtanh.pop %v4706
  %v4805 = vtanh.pop %v4707
  %v4806 = vtanh.pop %v4708
  %v4807 = vtanh.pop %v4709
  %v4808 = vtanh.pop %v4710
  %v4809 = vtanh.pop %v4711
  %v4810 = vtanh.pop %v4712
  %v4811 = vtanh.pop %v4713
  %v4812 = vtanh.pop %v4714
  %v4813 = vtanh.pop %v4715
  %v4814 = vtanh.pop %v4716
  %v4815 = vtanh.pop %v4717
  %v4816 = vtanh.pop %v4718
  %v4817 = vtanh.pop %v4719
  %v4818 = vtanh.pop %v4720
  %v4819 = vtanh.pop %v4721
  %v4820 = vtanh.pop %v4722
  %v4821 = vtanh.pop %v4723
  %v4822 = vtanh.pop %v4724
  %v4823 = vtanh.pop %v4725
  %v4824 = vtanh.pop %v4726
  %v4825 = vtanh.pop %v4727
  %v4826 = vtanh.pop %v4728
  %v4827 = vtanh.pop %v4729
  %v4828 = vtanh.pop %v4730
  %v4829 = vtanh.pop %v4731
  %v4830 = vtanh.pop %v4732
  %v4831 = vtanh.pop %v4733
  %v4832 = vtanh.pop %v4734
  %v4833 = vtanh.pop %v4735
  %v4834 = vtanh.pop %v4736
  %v4835 = vtanh.pop %v4737
  %v4836 = vtanh.pop %v4738
  %v4837 = vtanh.pop %v4739
  %v4838 = vtanh.pop %v4740
  %v4839 = vtanh.pop %v4741
  %v4840 = vtanh.pop %v4742
  %v4841 = vtanh.pop %v4743
  %v4842 = vtanh.pop %v4744
  %v4843 = vtanh.pop %v4745
  %v4844 = vtanh.pop %v4746
  %v4845 = vtanh.pop %v4747
  %v4846 = vtanh.pop %v4748
  %v4847 = vtanh.pop %v4749
  %v4848 = vtanh.pop %v4750
  %v4849 = vtanh.pop %v4751
  %v4850 = vtanh.pop %v4752
  %v4851 = vtanh.pop %v4753
  %v4852 = vtanh.pop %v4754
  %v4853 = vtanh.pop %v4755
  %v4854 = vtanh.pop %v4756
  %4855 = vst [vmem:[%s3] sm:$0xff] %v4757
  %4856 = vst [vmem:[%s3 + $0x8] sm:$0xff] %v4758
  %4857 = vst [vmem:[%s3 + $0x10] sm:$0xff] %v4759
  %4858 = vst [vmem:[%s3 + $0x18] sm:$0xff] %v4760
  %4859 = vst [vmem:[%s3 + $0x20] sm:$0xff] %v4761
  %4860 = vst [vmem:[%s3 + $0x28] sm:$0xff] %v4762
  %4861 = vst [vmem:[%s3 + $0x30] sm:$0xff] %v4763
  %4862 = vst [vmem:[%s3 + $0x38] sm:$0xff] %v4764
  %4863 = vst [vmem:[%s3 + $0x40] sm:$0xff] %v4765
  %4864 = vst [vmem:[%s3 + $0x48] sm:$0xff] %v4766
  %4865 = vst [vmem:[%s3 + $0x50] sm:$0xff] %v4767
  %4866 = vst [vmem:[%s3 + $0x58] sm:$0xff] %v4768
  %4867 = vst [vmem:[%s3 + $0x60] sm:$0xff] %v4769
  %4868 = vst [vmem:[%s3 + $0x68] sm:$0xff] %v4770
  %4869 = vst [vmem:[%s3 + $0x70] sm:$0xff] %v4771
  %4870 = vst [vmem:[%s3 + $0x78] sm:$0xff] %v4772
  %4871 = vst [vmem:[%s3 + $0x80] sm:$0xff] %v4773
  %4872 = vst [vmem:[%s3 + $0x88] sm:$0xff] %v4774
  %4873 = vst [vmem:[%s3 + $0x90] sm:$0xff] %v4775
  %4874 = vst [vmem:[%s3 + $0x98] sm:$0xff] %v4776
  %4875 = vst [vmem:[%s3 + $0xa0] sm:$0xff] %v4777
  %4876 = vst [vmem:[%s3 + $0xa8] sm:$0xff] %v4778
  %4877 = vst [vmem:[%s3 + $0xb0] sm:$0xff] %v4779
  %4878 = vst [vmem:[%s3 + $0xb8] sm:$0xff] %v4780
  %4879 = vst [vmem:[%s3 + $0xc0] sm:$0xff] %v4781
  %4880 = vst [vmem:[%s3 + $0xc8] sm:$0xff] %v4782
  %4881 = vst [vmem:[%s3 + $0xd0] sm:$0xff] %v4783
  %4882 = vst [vmem:[%s3 + $0xd8] sm:$0xff] %v4784
  %4883 = vst [vmem:[%s3 + $0xe0] sm:$0xff] %v4785
  %4884 = vst [vmem:[%s3 + $0xe8] sm:$0xff] %v4786
  %4885 = vst [vmem:[%s3 + $0xf0] sm:$0xff] %v4787
  %4886 = vst [vmem:[%s3 + $0xf8] sm:$0xff] %v4788
  %4887 = vst [vmem:[%s3 + $0x100] sm:$0xff] %v4789
  %4888 = vst [vmem:[%s3 + $0x108] sm:$0xff] %v4790
  %4889 = vst [vmem:[%s3 + $0x110] sm:$0xff] %v4791
  %4890 = vst [vmem:[%s3 + $0x118] sm:$0xff] %v4792
  %4891 = vst [vmem:[%s3 + $0x120] sm:$0xff] %v4793
  %4892 = vst [vmem:[%s3 + $0x128] sm:$0xff] %v4794
  %4893 = vst [vmem:[%s3 + $0x130] sm:$0xff] %v4795
  %4894 = vst [vmem:[%s3 + $0x138] sm:$0xff] %v4796
  %4895 = vst [vmem:[%s3 + $0x140] sm:$0xff] %v4797
  %4896 = vst [vmem:[%s3 + $0x148] sm:$0xff] %v4798
  %4897 = vst [vmem:[%s3 + $0x150] sm:$0xff] %v4799
  %4898 = vst [vmem:[%s3 + $0x158] sm:$0xff] %v4800
  %4899 = vst [vmem:[%s3 + $0x160] sm:$0xff] %v4801
  %4900 = vst [vmem:[%s3 + $0x168] sm:$0xff] %v4802
  %4901 = vst [vmem:[%s3 + $0x170] sm:$0xff] %v4803
  %4902 = vst [vmem:[%s3 + $0x178] sm:$0xff] %v4804
  %4903 = vst [vmem:[%s3 + $0x180] sm:$0xff] %v4805
  %4904 = vst [vmem:[%s3 + $0x188] sm:$0x3] %v4806
  %4905 = vst [vmem:[%s3 + $0x190] sm:$0x3] %v4807
  %4906 = vst [vmem:[%s3 + $0x198] sm:$0x3] %v4808
  %4907 = vst [vmem:[%s3 + $0x1a0] sm:$0x3] %v4809
  %4908 = vst [vmem:[%s3 + $0x1a8] sm:$0x3] %v4810
  %4909 = vst [vmem:[%s3 + $0x1b0] sm:$0x3] %v4811
  %4910 = vst [vmem:[%s3 + $0x1b8] sm:$0x3] %v4812
  %4911 = vst [vmem:[%s3 + $0x1c0] sm:$0x3] %v4813
  %4912 = vst [vmem:[%s3 + $0x1c8] sm:$0x3] %v4814
  %4913 = vst [vmem:[%s3 + $0x1d0] sm:$0x3] %v4815
  %4914 = vst [vmem:[%s3 + $0x1d8] sm:$0x3] %v4816
  %4915 = vst [vmem:[%s3 + $0x1e0] sm:$0x3] %v4817
  %4916 = vst [vmem:[%s3 + $0x1e8] sm:$0x3] %v4818
  %4917 = vst [vmem:[%s3 + $0x1f0] sm:$0x3] %v4819
  %4918 = vst [vmem:[%s3 + $0x1f8] sm:$0x3] %v4820
  %4919 = vst [vmem:[%s3 + $0x200] sm:$0x3] %v4821
  %4920 = vst [vmem:[%s3 + $0x208] sm:$0x3] %v4822
  %4921 = vst [vmem:[%s3 + $0x210] sm:$0x3] %v4823
  %4922 = vst [vmem:[%s3 + $0x218] sm:$0x3] %v4824
  %4923 = vst [vmem:[%s3 + $0x220] sm:$0x3] %v4825
  %4924 = vst [vmem:[%s3 + $0x228] sm:$0x3] %v4826
  %4925 = vst [vmem:[%s3 + $0x230] sm:$0x3] %v4827
  %4926 = vst [vmem:[%s3 + $0x238] sm:$0x3] %v4828
  %4927 = vst [vmem:[%s3 + $0x240] sm:$0x3] %v4829
  %4928 = vst [vmem:[%s3 + $0x248] sm:$0x3] %v4830
  %4929 = vst [vmem:[%s3 + $0x250] sm:$0x3] %v4831
  %4930 = vst [vmem:[%s3 + $0x258] sm:$0x3] %v4832
  %4931 = vst [vmem:[%s3 + $0x260] sm:$0x3] %v4833
  %4932 = vst [vmem:[%s3 + $0x268] sm:$0x3] %v4834
  %4933 = vst [vmem:[%s3 + $0x270] sm:$0x3] %v4835
  %4934 = vst [vmem:[%s3 + $0x278] sm:$0x3] %v4836
  %4935 = vst [vmem:[%s3 + $0x280] sm:$0x3] %v4837
  %4936 = vst [vmem:[%s3 + $0x288] sm:$0x3] %v4838
  %4937 = vst [vmem:[%s3 + $0x290] sm:$0x3] %v4839
  %4938 = vst [vmem:[%s3 + $0x298] sm:$0x3] %v4840
  %4939 = vst [vmem:[%s3 + $0x2a0] sm:$0x3] %v4841
  %4940 = vst [vmem:[%s3 + $0x2a8] sm:$0x3] %v4842
  %4941 = vst [vmem:[%s3 + $0x2b0] sm:$0x3] %v4843
  %4942 = vst [vmem:[%s3 + $0x2b8] sm:$0x3] %v4844
  %4943 = vst [vmem:[%s3 + $0x2c0] sm:$0x3] %v4845
  %4944 = vst [vmem:[%s3 + $0x2c8] sm:$0x3] %v4846
  %4945 = vst [vmem:[%s3 + $0x2d0] sm:$0x3] %v4847
  %4946 = vst [vmem:[%s3 + $0x2d8] sm:$0x3] %v4848
  %4947 = vst [vmem:[%s3 + $0x2e0] sm:$0x3] %v4849
  %4948 = vst [vmem:[%s3 + $0x2e8] sm:$0x3] %v4850
  %4949 = vst [vmem:[%s3 + $0x2f0] sm:$0x3] %v4851
  %4950 = vst [vmem:[%s3 + $0x2f8] sm:$0x3] %v4852
  %4951 = vst [vmem:[%s3 + $0x300] sm:$0x3] %v4853
  %4952 = vst [vmem:[%s3 + $0x308] sm:$0x3] %v4854
  // Predicated region
  $region14: #{tiny_lateral_net_forward.2} parent=0 // pred_check
    _
  $region15: #{tiny_lateral_net_forward.2} parent=0 // pred_check_branch
    %4954 = sbr.rel (0) target = $region17
  $region16: #{tiny_lateral_net_forward.2} parent=0 // pred_region
    _
  $region17: #{tiny_lateral_net_forward.2} parent=0 // pred_fallthru
    _
  // Predicated region
  $region18: #{tiny_lateral_net_forward.2} parent=0 // pred_check
    _
  $region19: #{tiny_lateral_net_forward.2} parent=0 // pred_check_branch
    %4956 = sbr.rel (0) target = $region21
  $region20: #{tiny_lateral_net_forward.2} parent=0 // pred_region
    _
  $region21: #{tiny_lateral_net_forward.2} parent=0 // pred_fallthru
    _

// kernel: tiny_lateral_net_forward.3
$region0: #{tiny_lateral_net_forward.3}
  #allocation0 [shape = 'u32[]', space=smem, size = 0x4, offset = 0x4, fixed_abs, tag = 'smem constant byte address 0x4 - core index']
  #allocation1 [shape = 'u32[72,128]{1,0:T(1,128)}', space=vmem, size = 0x9000, scoped, tag = 'internal scratch']
  %s0 = inlined_call_operand.vmem [shape: f32[10,32,196], index: 0, kind: input, shape index: {}]
  %s1 = inlined_call_operand.vmem [shape: f32[10,196,128], index: 1, kind: input, shape index: {}]
  %s2 = inlined_call_operand.vmem [shape: f32[1,128], index: 2, kind: input, shape index: {}]
  %s3 = inlined_call_operand.vmem [shape: f32[128,128], index: 3, kind: input, shape index: {}]
  %s4 = inlined_call_operand.vmem [shape: f32[1,128], index: 4, kind: input, shape index: {}]
  %s5 = inlined_call_operand.vmem [shape: f32[32,128], index: 5, kind: output, shape index: {}]
  %s6 = sld [smem:[#allocation0]]
  $region30: #{tiny_lateral_net_forward.3} parent=0
    _
  %s8 = ssub.s32 1, %s6
  %s9 = scalar_select 0, %s8, %s6
  // Predicated region
  $region2: #{tiny_lateral_net_forward.3} parent=0 // pred_check
    _
  $region3: #{tiny_lateral_net_forward.3} parent=0 // pred_check_branch
    %11 = sbr.rel (0) target = $region5
  $region4: #{tiny_lateral_net_forward.3} parent=0 // pred_region
    _
  $region5: #{tiny_lateral_net_forward.3} parent=0 // pred_fallthru
    _
  // Predicated region
  $region6: #{tiny_lateral_net_forward.3} parent=0 // pred_check
    _
  $region7: #{tiny_lateral_net_forward.3} parent=0 // pred_check_branch
    %13 = sbr.rel (0) target = $region9
  $region8: #{tiny_lateral_net_forward.3} parent=0 // pred_region
    _
  $region9: #{tiny_lateral_net_forward.3} parent=0 // pred_fallthru
    _
  // Predicated region
  $region10: #{tiny_lateral_net_forward.3} parent=0 // pred_check
    _
  $region11: #{tiny_lateral_net_forward.3} parent=0 // pred_check_branch
    %15 = sbr.rel (0) target = $region13
  $region12: #{tiny_lateral_net_forward.3} parent=0 // pred_region
    _
  $region13: #{tiny_lateral_net_forward.3} parent=0 // pred_fallthru
    _
  // Predicated region
  $region14: #{tiny_lateral_net_forward.3} parent=0 // pred_check
    _
  $region15: #{tiny_lateral_net_forward.3} parent=0 // pred_check_branch
    %17 = sbr.rel (0) target = $region17
  $region16: #{tiny_lateral_net_forward.3} parent=0 // pred_region
    _
  $region17: #{tiny_lateral_net_forward.3} parent=0 // pred_fallthru
    _
  // Predicated region
  $region18: #{tiny_lateral_net_forward.3} parent=0 // pred_check
    _
  $region19: #{tiny_lateral_net_forward.3} parent=0 // pred_check_branch
    %19 = sbr.rel (0) target = $region21
  $region20: #{tiny_lateral_net_forward.3} parent=0 // pred_region
    _
  $region21: #{tiny_lateral_net_forward.3} parent=0 // pred_fallthru
    _
  %v20 = vld [vmem:[%s0] sm:$0xff]
  %v21 = vld [vmem:[%s0 + $0x8] sm:$0xff]
  %v22 = vld [vmem:[%s0 + $0x10] sm:$0xff]
  %v23 = vld [vmem:[%s0 + $0x18] sm:$0xff]
  %v24 = vld [vmem:[%s0 + $0x20] sm:$0xff]
  %v25 = vld [vmem:[%s0 + $0x28] sm:$0xff]
  %v26 = vld [vmem:[%s0 + $0x30] sm:$0xff]
  %v27 = vld [vmem:[%s0 + $0x38] sm:$0xff]
  %v28 = vld [vmem:[%s1] sm:$0xff]
  %v29 = vld [vmem:[%s1 + $0x8] sm:$0xff]
  %v30 = vld [vmem:[%s1 + $0x10] sm:$0xff]
  %v31 = vld [vmem:[%s1 + $0x18] sm:$0xff]
  %v32 = vld [vmem:[%s1 + $0x20] sm:$0xff]
  %v33 = vld [vmem:[%s1 + $0x28] sm:$0xff]
  %v34 = vld [vmem:[%s1 + $0x30] sm:$0xff]
  %v35 = vld [vmem:[%s1 + $0x38] sm:$0xff]
  %v36 = vld [vmem:[%s1 + $0x40] sm:$0xff]
  %v37 = vld [vmem:[%s1 + $0x48] sm:$0xff]
  %v38 = vld [vmem:[%s1 + $0x50] sm:$0xff]
  %v39 = vld [vmem:[%s1 + $0x58] sm:$0xff]
  %v40 = vld [vmem:[%s1 + $0x60] sm:$0xff]
  %v41 = vld [vmem:[%s1 + $0x68] sm:$0xff]
  %v42 = vld [vmem:[%s1 + $0x70] sm:$0xff]
  %v43 = vld [vmem:[%s1 + $0x78] sm:$0xff]
  %v44 = vld [vmem:[%s1 + $0x80] sm:$0xff]
  %v45 = vld [vmem:[%s1 + $0x88] sm:$0xff]
  %v46 = vld [vmem:[%s1 + $0x90] sm:$0xff]
  %v47 = vld [vmem:[%s1 + $0x98] sm:$0xff]
  %v48 = vld [vmem:[%s1 + $0xa0] sm:$0xff]
  %v49 = vld [vmem:[%s1 + $0xa8] sm:$0xff]
  %v50 = vld [vmem:[%s1 + $0xb0] sm:$0xff]
  %v51 = vld [vmem:[%s1 + $0xb8] sm:$0xff]
  %v52 = vld [vmem:[%s1 + $0xc0] sm:$0xf]
  %s53 = scalar_lea.vmem %s0, 64
  %v54 = vld [vmem:[%s53] sm:$0xff]
  %v55 = vld [vmem:[%s53 + $0x8] sm:$0xff]
  %v56 = vld [vmem:[%s53 + $0x10] sm:$0xff]
  %v57 = vld [vmem:[%s53 + $0x18] sm:$0xff]
  %v58 = vld [vmem:[%s53 + $0x20] sm:$0xff]
  %v59 = vld [vmem:[%s53 + $0x28] sm:$0xff]
  %v60 = vld [vmem:[%s53 + $0x30] sm:$0xff]
  %v61 = vld [vmem:[%s53 + $0x38] sm:$0xff]
  %s62 = scalar_lea.vmem %s1, 200
  %v63 = vld [vmem:[%s62] sm:$0xff]
  %v64 = vld [vmem:[%s62 + $0x8] sm:$0xff]
  %v65 = vld [vmem:[%s62 + $0x10] sm:$0xff]
  %v66 = vld [vmem:[%s62 + $0x18] sm:$0xff]
  %v67 = vld [vmem:[%s62 + $0x20] sm:$0xff]
  %v68 = vld [vmem:[%s62 + $0x28] sm:$0xff]
  %v69 = vld [vmem:[%s62 + $0x30] sm:$0xff]
  %v70 = vld [vmem:[%s62 + $0x38] sm:$0xff]
  %v71 = vld [vmem:[%s62 + $0x40] sm:$0xff]
  %v72 = vld [vmem:[%s62 + $0x48] sm:$0xff]
  %v73 = vld [vmem:[%s62 + $0x50] sm:$0xff]
  %v74 = vld [vmem:[%s62 + $0x58] sm:$0xff]
  %v75 = vld [vmem:[%s62 + $0x60] sm:$0xff]
  %v76 = vld [vmem:[%s62 + $0x68] sm:$0xff]
  %v77 = vld [vmem:[%s62 + $0x70] sm:$0xff]
  %v78 = vld [vmem:[%s62 + $0x78] sm:$0xff]
  %v79 = vld [vmem:[%s62 + $0x80] sm:$0xff]
  %v80 = vld [vmem:[%s62 + $0x88] sm:$0xff]
  %v81 = vld [vmem:[%s62 + $0x90] sm:$0xff]
  %v82 = vld [vmem:[%s62 + $0x98] sm:$0xff]
  %v83 = vld [vmem:[%s62 + $0xa0] sm:$0xff]
  %v84 = vld [vmem:[%s62 + $0xa8] sm:$0xff]
  %v85 = vld [vmem:[%s62 + $0xb0] sm:$0xff]
  %v86 = vld [vmem:[%s62 + $0xb8] sm:$0xff]
  %v87 = vld [vmem:[%s62 + $0xc0] sm:$0xf]
  %vm88 = vcmask 556032
  %v90 = vsel %vm88, %v55, 0
  %v93 = vsel %vm88, %v57, 0
  %v96 = vsel %vm88, %v59, 0
  %v99 = vsel %vm88, %v61, 0
  %vm101 = vcmask 1043456
  %v103 = vsel %vm101, %v87, 0
  %105 = vmatpush.msra.mxu0 %v78
  %106 = vmatpush.msra.mxu0 %v77
  %107 = vmatpush.msra.mxu0 %v76
  %108 = vmatpush.msra.mxu0 %v75
  %109 = vmatpush.msra.mxu0 %v74
  %110 = vmatpush.msra.mxu0 %v73
  %111 = vmatpush.msra.mxu0 %v72
  %112 = vmatpush.msra.mxu0 %v71
  %113 = vmatpush.msra.mxu0 %v70
  %114 = vmatpush.msra.mxu0 %v69
  %115 = vmatpush.msra.mxu0 %v68
  %116 = vmatpush.msra.mxu0 %v67
  %117 = vmatpush.msra.mxu0 %v66
  %118 = vmatpush.msra.mxu0 %v65
  %119 = vmatpush.msra.mxu0 %v64
  %120 = vmatpush.msra.mxu0 %v63
  %121 = vmatmul.f32.gmra.mxu0 %v54
  %v122 = vpop.f32.mrf.mxu0
  %v123 = vadd.f32 0.0, %v122
  %124 = vmatmul.f32.gmra.mxu0 %v56
  %v125 = vpop.f32.mrf.mxu0
  %v126 = vadd.f32 0.0, %v125
  %127 = vmatmul.f32.gmra.mxu0 %v58
  %v128 = vpop.f32.mrf.mxu0
  %v129 = vadd.f32 0.0, %v128
  %130 = vmatmul.f32.gmra.mxu0 %v60
  %v131 = vpop.f32.mrf.mxu0
  %v132 = vadd.f32 0.0, %v131
  %133 = vdwg.mxu0
  %134 = vmatpush.msra.mxu0 0.0
  %135 = vmatpush.msra.mxu0 0.0
  %136 = vmatpush.msra.mxu0 0.0
  %137 = vmatpush.msra.mxu0 0.0
  %138 = vmatpush.msra.mxu0 0.0
  %139 = vmatpush.msra.mxu0 0.0
  %140 = vmatpush.msra.mxu0 0.0
  %141 = vmatpush.msra.mxu0 %v103
  %142 = vmatpush.msra.mxu0 %v86
  %143 = vmatpush.msra.mxu0 %v85
  %144 = vmatpush.msra.mxu0 %v84
  %145 = vmatpush.msra.mxu0 %v83
  %146 = vmatpush.msra.mxu0 %v82
  %147 = vmatpush.msra.mxu0 %v81
  %148 = vmatpush.msra.mxu0 %v80
  %149 = vmatpush.msra.mxu0 %v79
  %150 = vmatmul.f32.gmra.mxu0 %v90
  %v151 = vpop.f32.mrf.mxu0
  %v152 = vadd.f32 %v123, %v151
  %153 = vmatmul.f32.gmra.mxu0 %v93
  %v154 = vpop.f32.mrf.mxu0
  %v155 = vadd.f32 %v126, %v154
  %156 = vmatmul.f32.gmra.mxu0 %v96
  %v157 = vpop.f32.mrf.mxu0
  %v158 = vadd.f32 %v129, %v157
  %159 = vmatmul.f32.gmra.mxu0 %v99
  %v160 = vpop.f32.mrf.mxu0
  %v161 = vadd.f32 %v132, %v160
  %162 = vdwg.mxu0
  %v164 = vsel %vm88, %v21, 0
  %v167 = vsel %vm88, %v23, 0
  %v170 = vsel %vm88, %v25, 0
  %v173 = vsel %vm88, %v27, 0
  %v176 = vsel %vm101, %v52, 0
  %178 = vmatpush.msra.mxu0 %v43
  %179 = vmatpush.msra.mxu0 %v42
  %180 = vmatpush.msra.mxu0 %v41
  %181 = vmatpush.msra.mxu0 %v40
  %182 = vmatpush.msra.mxu0 %v39
  %183 = vmatpush.msra.mxu0 %v38
  %184 = vmatpush.msra.mxu0 %v37
  %185 = vmatpush.msra.mxu0 %v36
  %186 = vmatpush.msra.mxu0 %v35
  %187 = vmatpush.msra.mxu0 %v34
  %188 = vmatpush.msra.mxu0 %v33
  %189 = vmatpush.msra.mxu0 %v32
  %190 = vmatpush.msra.mxu0 %v31
  %191 = vmatpush.msra.mxu0 %v30
  %192 = vmatpush.msra.mxu0 %v29
  %193 = vmatpush.msra.mxu0 %v28
  %194 = vmatmul.f32.gmra.mxu0 %v20
  %v195 = vpop.f32.mrf.mxu0
  %v196 = vadd.f32 %v152, %v195
  %197 = vmatmul.f32.gmra.mxu0 %v22
  %v198 = vpop.f32.mrf.mxu0
  %v199 = vadd.f32 %v155, %v198
  %200 = vmatmul.f32.gmra.mxu0 %v24
  %v201 = vpop.f32.mrf.mxu0
  %v202 = vadd.f32 %v158, %v201
  %203 = vmatmul.f32.gmra.mxu0 %v26
  %v204 = vpop.f32.mrf.mxu0
  %v205 = vadd.f32 %v161, %v204
  %206 = vdwg.mxu0
  %207 = vmatpush.msra.mxu0 0.0
  %208 = vmatpush.msra.mxu0 0.0
  %209 = vmatpush.msra.mxu0 0.0
  %210 = vmatpush.msra.mxu0 0.0
  %211 = vmatpush.msra.mxu0 0.0
  %212 = vmatpush.msra.mxu0 0.0
  %213 = vmatpush.msra.mxu0 0.0
  %214 = vmatpush.msra.mxu0 %v176
  %215 = vmatpush.msra.mxu0 %v51
  %216 = vmatpush.msra.mxu0 %v50
  %217 = vmatpush.msra.mxu0 %v49
  %218 = vmatpush.msra.mxu0 %v48
  %219 = vmatpush.msra.mxu0 %v47
  %220 = vmatpush.msra.mxu0 %v46
  %221 = vmatpush.msra.mxu0 %v45
  %222 = vmatpush.msra.mxu0 %v44
  %223 = vmatmul.f32.gmra.mxu0 %v164
  %v224 = vpop.f32.mrf.mxu0
  %v225 = vadd.f32 %v196, %v224
  %226 = vmatmul.f32.gmra.mxu0 %v167
  %v227 = vpop.f32.mrf.mxu0
  %v228 = vadd.f32 %v199, %v227
  %229 = vmatmul.f32.gmra.mxu0 %v170
  %v230 = vpop.f32.mrf.mxu0
  %v231 = vadd.f32 %v202, %v230
  %232 = vmatmul.f32.gmra.mxu0 %v173
  %v233 = vpop.f32.mrf.mxu0
  %v234 = vadd.f32 %v205, %v233
  %235 = vdwg.mxu0
  %s236 = scalar_lea.vmem %s0, 128
  %v237 = vld [vmem:[%s236] sm:$0xff]
  %v238 = vld [vmem:[%s236 + $0x8] sm:$0xff]
  %v239 = vld [vmem:[%s236 + $0x10] sm:$0xff]
  %v240 = vld [vmem:[%s236 + $0x18] sm:$0xff]
  %v241 = vld [vmem:[%s236 + $0x20] sm:$0xff]
  %v242 = vld [vmem:[%s236 + $0x28] sm:$0xff]
  %v243 = vld [vmem:[%s236 + $0x30] sm:$0xff]
  %v244 = vld [vmem:[%s236 + $0x38] sm:$0xff]
  %s245 = scalar_lea.vmem %s1, 400
  %v246 = vld [vmem:[%s245] sm:$0xff]
  %v247 = vld [vmem:[%s245 + $0x8] sm:$0xff]
  %v248 = vld [vmem:[%s245 + $0x10] sm:$0xff]
  %v249 = vld [vmem:[%s245 + $0x18] sm:$0xff]
  %v250 = vld [vmem:[%s245 + $0x20] sm:$0xff]
  %v251 = vld [vmem:[%s245 + $0x28] sm:$0xff]
  %v252 = vld [vmem:[%s245 + $0x30] sm:$0xff]
  %v253 = vld [vmem:[%s245 + $0x38] sm:$0xff]
  %v254 = vld [vmem:[%s245 + $0x40] sm:$0xff]
  %v255 = vld [vmem:[%s245 + $0x48] sm:$0xff]
  %v256 = vld [vmem:[%s245 + $0x50] sm:$0xff]
  %v257 = vld [vmem:[%s245 + $0x58] sm:$0xff]
  %v258 = vld [vmem:[%s245 + $0x60] sm:$0xff]
  %v259 = vld [vmem:[%s245 + $0x68] sm:$0xff]
  %v260 = vld [vmem:[%s245 + $0x70] sm:$0xff]
  %v261 = vld [vmem:[%s245 + $0x78] sm:$0xff]
  %v262 = vld [vmem:[%s245 + $0x80] sm:$0xff]
  %v263 = vld [vmem:[%s245 + $0x88] sm:$0xff]
  %v264 = vld [vmem:[%s245 + $0x90] sm:$0xff]
  %v265 = vld [vmem:[%s245 + $0x98] sm:$0xff]
  %v266 = vld [vmem:[%s245 + $0xa0] sm:$0xff]
  %v267 = vld [vmem:[%s245 + $0xa8] sm:$0xff]
  %v268 = vld [vmem:[%s245 + $0xb0] sm:$0xff]
  %v269 = vld [vmem:[%s245 + $0xb8] sm:$0xff]
  %v270 = vld [vmem:[%s245 + $0xc0] sm:$0xf]
  %v272 = vsel %vm88, %v238, 0
  %v275 = vsel %vm88, %v240, 0
  %v278 = vsel %vm88, %v242, 0
  %v281 = vsel %vm88, %v244, 0
  %v284 = vsel %vm101, %v270, 0
  %286 = vmatpush.msra.mxu0 %v261
  %287 = vmatpush.msra.mxu0 %v260
  %288 = vmatpush.msra.mxu0 %v259
  %289 = vmatpush.msra.mxu0 %v258
  %290 = vmatpush.msra.mxu0 %v257
  %291 = vmatpush.msra.mxu0 %v256
  %292 = vmatpush.msra.mxu0 %v255
  %293 = vmatpush.msra.mxu0 %v254
  %294 = vmatpush.msra.mxu0 %v253
  %295 = vmatpush.msra.mxu0 %v252
  %296 = vmatpush.msra.mxu0 %v251
  %297 = vmatpush.msra.mxu0 %v250
  %298 = vmatpush.msra.mxu0 %v249
  %299 = vmatpush.msra.mxu0 %v248
  %300 = vmatpush.msra.mxu0 %v247
  %301 = vmatpush.msra.mxu0 %v246
  %302 = vmatmul.f32.gmra.mxu0 %v237
  %v303 = vpop.f32.mrf.mxu0
  %v304 = vadd.f32 0.0, %v303
  %305 = vmatmul.f32.gmra.mxu0 %v239
  %v306 = vpop.f32.mrf.mxu0
  %v307 = vadd.f32 0.0, %v306
  %308 = vmatmul.f32.gmra.mxu0 %v241
  %v309 = vpop.f32.mrf.mxu0
  %v310 = vadd.f32 0.0, %v309
  %311 = vmatmul.f32.gmra.mxu0 %v243
  %v312 = vpop.f32.mrf.mxu0
  %v313 = vadd.f32 0.0, %v312
  %314 = vdwg.mxu0
  %315 = vmatpush.msra.mxu0 0.0
  %316 = vmatpush.msra.mxu0 0.0
  %317 = vmatpush.msra.mxu0 0.0
  %318 = vmatpush.msra.mxu0 0.0
  %319 = vmatpush.msra.mxu0 0.0
  %320 = vmatpush.msra.mxu0 0.0
  %321 = vmatpush.msra.mxu0 0.0
  %322 = vmatpush.msra.mxu0 %v284
  %323 = vmatpush.msra.mxu0 %v269
  %324 = vmatpush.msra.mxu0 %v268
  %325 = vmatpush.msra.mxu0 %v267
  %326 = vmatpush.msra.mxu0 %v266
  %327 = vmatpush.msra.mxu0 %v265
  %328 = vmatpush.msra.mxu0 %v264
  %329 = vmatpush.msra.mxu0 %v263
  %330 = vmatpush.msra.mxu0 %v262
  %331 = vmatmul.f32.gmra.mxu0 %v272
  %v332 = vpop.f32.mrf.mxu0
  %v333 = vadd.f32 %v304, %v332
  %334 = vmatmul.f32.gmra.mxu0 %v275
  %v335 = vpop.f32.mrf.mxu0
  %v336 = vadd.f32 %v307, %v335
  %337 = vmatmul.f32.gmra.mxu0 %v278
  %v338 = vpop.f32.mrf.mxu0
  %v339 = vadd.f32 %v310, %v338
  %340 = vmatmul.f32.gmra.mxu0 %v281
  %v341 = vpop.f32.mrf.mxu0
  %v342 = vadd.f32 %v313, %v341
  %343 = vdwg.mxu0
  %v344 = vadd.f32 %v225, %v333
  %v345 = vadd.f32 %v228, %v336
  %v346 = vadd.f32 %v231, %v339
  %v347 = vadd.f32 %v234, %v342
  %s348 = scalar_lea.vmem %s0, 192
  %v349 = vld [vmem:[%s348] sm:$0xff]
  %v350 = vld [vmem:[%s348 + $0x8] sm:$0xff]
  %v351 = vld [vmem:[%s348 + $0x10] sm:$0xff]
  %v352 = vld [vmem:[%s348 + $0x18] sm:$0xff]
  %v353 = vld [vmem:[%s348 + $0x20] sm:$0xff]
  %v354 = vld [vmem:[%s348 + $0x28] sm:$0xff]
  %v355 = vld [vmem:[%s348 + $0x30] sm:$0xff]
  %v356 = vld [vmem:[%s348 + $0x38] sm:$0xff]
  %s357 = scalar_lea.vmem %s1, 600
  %v358 = vld [vmem:[%s357] sm:$0xff]
  %v359 = vld [vmem:[%s357 + $0x8] sm:$0xff]
  %v360 = vld [vmem:[%s357 + $0x10] sm:$0xff]
  %v361 = vld [vmem:[%s357 + $0x18] sm:$0xff]
  %v362 = vld [vmem:[%s357 + $0x20] sm:$0xff]
  %v363 = vld [vmem:[%s357 + $0x28] sm:$0xff]
  %v364 = vld [vmem:[%s357 + $0x30] sm:$0xff]
  %v365 = vld [vmem:[%s357 + $0x38] sm:$0xff]
  %v366 = vld [vmem:[%s357 + $0x40] sm:$0xff]
  %v367 = vld [vmem:[%s357 + $0x48] sm:$0xff]
  %v368 = vld [vmem:[%s357 + $0x50] sm:$0xff]
  %v369 = vld [vmem:[%s357 + $0x58] sm:$0xff]
  %v370 = vld [vmem:[%s357 + $0x60] sm:$0xff]
  %v371 = vld [vmem:[%s357 + $0x68] sm:$0xff]
  %v372 = vld [vmem:[%s357 + $0x70] sm:$0xff]
  %v373 = vld [vmem:[%s357 + $0x78] sm:$0xff]
  %v374 = vld [vmem:[%s357 + $0x80] sm:$0xff]
  %v375 = vld [vmem:[%s357 + $0x88] sm:$0xff]
  %v376 = vld [vmem:[%s357 + $0x90] sm:$0xff]
  %v377 = vld [vmem:[%s357 + $0x98] sm:$0xff]
  %v378 = vld [vmem:[%s357 + $0xa0] sm:$0xff]
  %v379 = vld [vmem:[%s357 + $0xa8] sm:$0xff]
  %v380 = vld [vmem:[%s357 + $0xb0] sm:$0xff]
  %v381 = vld [vmem:[%s357 + $0xb8] sm:$0xff]
  %v382 = vld [vmem:[%s357 + $0xc0] sm:$0xf]
  %v384 = vsel %vm88, %v350, 0
  %v387 = vsel %vm88, %v352, 0
  %v390 = vsel %vm88, %v354, 0
  %v393 = vsel %vm88, %v356, 0
  %v396 = vsel %vm101, %v382, 0
  %398 = vmatpush.msra.mxu0 %v373
  %399 = vmatpush.msra.mxu0 %v372
  %400 = vmatpush.msra.mxu0 %v371
  %401 = vmatpush.msra.mxu0 %v370
  %402 = vmatpush.msra.mxu0 %v369
  %403 = vmatpush.msra.mxu0 %v368
  %404 = vmatpush.msra.mxu0 %v367
  %405 = vmatpush.msra.mxu0 %v366
  %406 = vmatpush.msra.mxu0 %v365
  %407 = vmatpush.msra.mxu0 %v364
  %408 = vmatpush.msra.mxu0 %v363
  %409 = vmatpush.msra.mxu0 %v362
  %410 = vmatpush.msra.mxu0 %v361
  %411 = vmatpush.msra.mxu0 %v360
  %412 = vmatpush.msra.mxu0 %v359
  %413 = vmatpush.msra.mxu0 %v358
  %414 = vmatmul.f32.gmra.mxu0 %v349
  %v415 = vpop.f32.mrf.mxu0
  %v416 = vadd.f32 0.0, %v415
  %417 = vmatmul.f32.gmra.mxu0 %v351
  %v418 = vpop.f32.mrf.mxu0
  %v419 = vadd.f32 0.0, %v418
  %420 = vmatmul.f32.gmra.mxu0 %v353
  %v421 = vpop.f32.mrf.mxu0
  %v422 = vadd.f32 0.0, %v421
  %423 = vmatmul.f32.gmra.mxu0 %v355
  %v424 = vpop.f32.mrf.mxu0
  %v425 = vadd.f32 0.0, %v424
  %426 = vdwg.mxu0
  %427 = vmatpush.msra.mxu0 0.0
  %428 = vmatpush.msra.mxu0 0.0
  %429 = vmatpush.msra.mxu0 0.0
  %430 = vmatpush.msra.mxu0 0.0
  %431 = vmatpush.msra.mxu0 0.0
  %432 = vmatpush.msra.mxu0 0.0
  %433 = vmatpush.msra.mxu0 0.0
  %434 = vmatpush.msra.mxu0 %v396
  %435 = vmatpush.msra.mxu0 %v381
  %436 = vmatpush.msra.mxu0 %v380
  %437 = vmatpush.msra.mxu0 %v379
  %438 = vmatpush.msra.mxu0 %v378
  %439 = vmatpush.msra.mxu0 %v377
  %440 = vmatpush.msra.mxu0 %v376
  %441 = vmatpush.msra.mxu0 %v375
  %442 = vmatpush.msra.mxu0 %v374
  %443 = vmatmul.f32.gmra.mxu0 %v384
  %v444 = vpop.f32.mrf.mxu0
  %v445 = vadd.f32 %v416, %v444
  %446 = vmatmul.f32.gmra.mxu0 %v387
  %v447 = vpop.f32.mrf.mxu0
  %v448 = vadd.f32 %v419, %v447
  %449 = vmatmul.f32.gmra.mxu0 %v390
  %v450 = vpop.f32.mrf.mxu0
  %v451 = vadd.f32 %v422, %v450
  %452 = vmatmul.f32.gmra.mxu0 %v393
  %v453 = vpop.f32.mrf.mxu0
  %v454 = vadd.f32 %v425, %v453
  %455 = vdwg.mxu0
  %v456 = vadd.f32 %v344, %v445
  %v457 = vadd.f32 %v345, %v448
  %v458 = vadd.f32 %v346, %v451
  %v459 = vadd.f32 %v347, %v454
  %s460 = scalar_lea.vmem %s0, 256
  %v461 = vld [vmem:[%s460] sm:$0xff]
  %v462 = vld [vmem:[%s460 + $0x8] sm:$0xff]
  %v463 = vld [vmem:[%s460 + $0x10] sm:$0xff]
  %v464 = vld [vmem:[%s460 + $0x18] sm:$0xff]
  %v465 = vld [vmem:[%s460 + $0x20] sm:$0xff]
  %v466 = vld [vmem:[%s460 + $0x28] sm:$0xff]
  %v467 = vld [vmem:[%s460 + $0x30] sm:$0xff]
  %v468 = vld [vmem:[%s460 + $0x38] sm:$0xff]
  %s469 = scalar_lea.vmem %s1, 800
  %v470 = vld [vmem:[%s469] sm:$0xff]
  %v471 = vld [vmem:[%s469 + $0x8] sm:$0xff]
  %v472 = vld [vmem:[%s469 + $0x10] sm:$0xff]
  %v473 = vld [vmem:[%s469 + $0x18] sm:$0xff]
  %v474 = vld [vmem:[%s469 + $0x20] sm:$0xff]
  %v475 = vld [vmem:[%s469 + $0x28] sm:$0xff]
  %v476 = vld [vmem:[%s469 + $0x30] sm:$0xff]
  %v477 = vld [vmem:[%s469 + $0x38] sm:$0xff]
  %v478 = vld [vmem:[%s469 + $0x40] sm:$0xff]
  %v479 = vld [vmem:[%s469 + $0x48] sm:$0xff]
  %v480 = vld [vmem:[%s469 + $0x50] sm:$0xff]
  %v481 = vld [vmem:[%s469 + $0x58] sm:$0xff]
  %v482 = vld [vmem:[%s469 + $0x60] sm:$0xff]
  %v483 = vld [vmem:[%s469 + $0x68] sm:$0xff]
  %v484 = vld [vmem:[%s469 + $0x70] sm:$0xff]
  %v485 = vld [vmem:[%s469 + $0x78] sm:$0xff]
  %v486 = vld [vmem:[%s469 + $0x80] sm:$0xff]
  %v487 = vld [vmem:[%s469 + $0x88] sm:$0xff]
  %v488 = vld [vmem:[%s469 + $0x90] sm:$0xff]
  %v489 = vld [vmem:[%s469 + $0x98] sm:$0xff]
  %v490 = vld [vmem:[%s469 + $0xa0] sm:$0xff]
  %v491 = vld [vmem:[%s469 + $0xa8] sm:$0xff]
  %v492 = vld [vmem:[%s469 + $0xb0] sm:$0xff]
  %v493 = vld [vmem:[%s469 + $0xb8] sm:$0xff]
  %v494 = vld [vmem:[%s469 + $0xc0] sm:$0xf]
  %v496 = vsel %vm88, %v462, 0
  %v499 = vsel %vm88, %v464, 0
  %v502 = vsel %vm88, %v466, 0
  %v505 = vsel %vm88, %v468, 0
  %v508 = vsel %vm101, %v494, 0
  %510 = vmatpush.msra.mxu0 %v485
  %511 = vmatpush.msra.mxu0 %v484
  %512 = vmatpush.msra.mxu0 %v483
  %513 = vmatpush.msra.mxu0 %v482
  %514 = vmatpush.msra.mxu0 %v481
  %515 = vmatpush.msra.mxu0 %v480
  %516 = vmatpush.msra.mxu0 %v479
  %517 = vmatpush.msra.mxu0 %v478
  %518 = vmatpush.msra.mxu0 %v477
  %519 = vmatpush.msra.mxu0 %v476
  %520 = vmatpush.msra.mxu0 %v475
  %521 = vmatpush.msra.mxu0 %v474
  %522 = vmatpush.msra.mxu0 %v473
  %523 = vmatpush.msra.mxu0 %v472
  %524 = vmatpush.msra.mxu0 %v471
  %525 = vmatpush.msra.mxu0 %v470
  %526 = vmatmul.f32.gmra.mxu0 %v461
  %v527 = vpop.f32.mrf.mxu0
  %v528 = vadd.f32 0.0, %v527
  %529 = vmatmul.f32.gmra.mxu0 %v463
  %v530 = vpop.f32.mrf.mxu0
  %v531 = vadd.f32 0.0, %v530
  %532 = vmatmul.f32.gmra.mxu0 %v465
  %v533 = vpop.f32.mrf.mxu0
  %v534 = vadd.f32 0.0, %v533
  %535 = vmatmul.f32.gmra.mxu0 %v467
  %v536 = vpop.f32.mrf.mxu0
  %v537 = vadd.f32 0.0, %v536
  %538 = vdwg.mxu0
  %539 = vmatpush.msra.mxu0 0.0
  %540 = vmatpush.msra.mxu0 0.0
  %541 = vmatpush.msra.mxu0 0.0
  %542 = vmatpush.msra.mxu0 0.0
  %543 = vmatpush.msra.mxu0 0.0
  %544 = vmatpush.msra.mxu0 0.0
  %545 = vmatpush.msra.mxu0 0.0
  %546 = vmatpush.msra.mxu0 %v508
  %547 = vmatpush.msra.mxu0 %v493
  %548 = vmatpush.msra.mxu0 %v492
  %549 = vmatpush.msra.mxu0 %v491
  %550 = vmatpush.msra.mxu0 %v490
  %551 = vmatpush.msra.mxu0 %v489
  %552 = vmatpush.msra.mxu0 %v488
  %553 = vmatpush.msra.mxu0 %v487
  %554 = vmatpush.msra.mxu0 %v486
  %555 = vmatmul.f32.gmra.mxu0 %v496
  %v556 = vpop.f32.mrf.mxu0
  %v557 = vadd.f32 %v528, %v556
  %558 = vmatmul.f32.gmra.mxu0 %v499
  %v559 = vpop.f32.mrf.mxu0
  %v560 = vadd.f32 %v531, %v559
  %561 = vmatmul.f32.gmra.mxu0 %v502
  %v562 = vpop.f32.mrf.mxu0
  %v563 = vadd.f32 %v534, %v562
  %564 = vmatmul.f32.gmra.mxu0 %v505
  %v565 = vpop.f32.mrf.mxu0
  %v566 = vadd.f32 %v537, %v565
  %567 = vdwg.mxu0
  %v568 = vadd.f32 %v456, %v557
  %v569 = vadd.f32 %v457, %v560
  %v570 = vadd.f32 %v458, %v563
  %v571 = vadd.f32 %v459, %v566
  %s572 = scalar_lea.vmem %s0, 320
  %v573 = vld [vmem:[%s572] sm:$0xff]
  %v574 = vld [vmem:[%s572 + $0x8] sm:$0xff]
  %v575 = vld [vmem:[%s572 + $0x10] sm:$0xff]
  %v576 = vld [vmem:[%s572 + $0x18] sm:$0xff]
  %v577 = vld [vmem:[%s572 + $0x20] sm:$0xff]
  %v578 = vld [vmem:[%s572 + $0x28] sm:$0xff]
  %v579 = vld [vmem:[%s572 + $0x30] sm:$0xff]
  %v580 = vld [vmem:[%s572 + $0x38] sm:$0xff]
  %s581 = scalar_lea.vmem %s1, 1000
  %v582 = vld [vmem:[%s581] sm:$0xff]
  %v583 = vld [vmem:[%s581 + $0x8] sm:$0xff]
  %v584 = vld [vmem:[%s581 + $0x10] sm:$0xff]
  %v585 = vld [vmem:[%s581 + $0x18] sm:$0xff]
  %v586 = vld [vmem:[%s581 + $0x20] sm:$0xff]
  %v587 = vld [vmem:[%s581 + $0x28] sm:$0xff]
  %v588 = vld [vmem:[%s581 + $0x30] sm:$0xff]
  %v589 = vld [vmem:[%s581 + $0x38] sm:$0xff]
  %v590 = vld [vmem:[%s581 + $0x40] sm:$0xff]
  %v591 = vld [vmem:[%s581 + $0x48] sm:$0xff]
  %v592 = vld [vmem:[%s581 + $0x50] sm:$0xff]
  %v593 = vld [vmem:[%s581 + $0x58] sm:$0xff]
  %v594 = vld [vmem:[%s581 + $0x60] sm:$0xff]
  %v595 = vld [vmem:[%s581 + $0x68] sm:$0xff]
  %v596 = vld [vmem:[%s581 + $0x70] sm:$0xff]
  %v597 = vld [vmem:[%s581 + $0x78] sm:$0xff]
  %v598 = vld [vmem:[%s581 + $0x80] sm:$0xff]
  %v599 = vld [vmem:[%s581 + $0x88] sm:$0xff]
  %v600 = vld [vmem:[%s581 + $0x90] sm:$0xff]
  %v601 = vld [vmem:[%s581 + $0x98] sm:$0xff]
  %v602 = vld [vmem:[%s581 + $0xa0] sm:$0xff]
  %v603 = vld [vmem:[%s581 + $0xa8] sm:$0xff]
  %v604 = vld [vmem:[%s581 + $0xb0] sm:$0xff]
  %v605 = vld [vmem:[%s581 + $0xb8] sm:$0xff]
  %v606 = vld [vmem:[%s581 + $0xc0] sm:$0xf]
  %v608 = vsel %vm88, %v574, 0
  %v611 = vsel %vm88, %v576, 0
  %v614 = vsel %vm88, %v578, 0
  %v617 = vsel %vm88, %v580, 0
  %v620 = vsel %vm101, %v606, 0
  %622 = vmatpush.msra.mxu0 %v597
  %623 = vmatpush.msra.mxu0 %v596
  %624 = vmatpush.msra.mxu0 %v595
  %625 = vmatpush.msra.mxu0 %v594
  %626 = vmatpush.msra.mxu0 %v593
  %627 = vmatpush.msra.mxu0 %v592
  %628 = vmatpush.msra.mxu0 %v591
  %629 = vmatpush.msra.mxu0 %v590
  %630 = vmatpush.msra.mxu0 %v589
  %631 = vmatpush.msra.mxu0 %v588
  %632 = vmatpush.msra.mxu0 %v587
  %633 = vmatpush.msra.mxu0 %v586
  %634 = vmatpush.msra.mxu0 %v585
  %635 = vmatpush.msra.mxu0 %v584
  %636 = vmatpush.msra.mxu0 %v583
  %637 = vmatpush.msra.mxu0 %v582
  %638 = vmatmul.f32.gmra.mxu0 %v573
  %v639 = vpop.f32.mrf.mxu0
  %v640 = vadd.f32 0.0, %v639
  %641 = vmatmul.f32.gmra.mxu0 %v575
  %v642 = vpop.f32.mrf.mxu0
  %v643 = vadd.f32 0.0, %v642
  %644 = vmatmul.f32.gmra.mxu0 %v577
  %v645 = vpop.f32.mrf.mxu0
  %v646 = vadd.f32 0.0, %v645
  %647 = vmatmul.f32.gmra.mxu0 %v579
  %v648 = vpop.f32.mrf.mxu0
  %v649 = vadd.f32 0.0, %v648
  %650 = vdwg.mxu0
  %651 = vmatpush.msra.mxu0 0.0
  %652 = vmatpush.msra.mxu0 0.0
  %653 = vmatpush.msra.mxu0 0.0
  %654 = vmatpush.msra.mxu0 0.0
  %655 = vmatpush.msra.mxu0 0.0
  %656 = vmatpush.msra.mxu0 0.0
  %657 = vmatpush.msra.mxu0 0.0
  %658 = vmatpush.msra.mxu0 %v620
  %659 = vmatpush.msra.mxu0 %v605
  %660 = vmatpush.msra.mxu0 %v604
  %661 = vmatpush.msra.mxu0 %v603
  %662 = vmatpush.msra.mxu0 %v602
  %663 = vmatpush.msra.mxu0 %v601
  %664 = vmatpush.msra.mxu0 %v600
  %665 = vmatpush.msra.mxu0 %v599
  %666 = vmatpush.msra.mxu0 %v598
  %667 = vmatmul.f32.gmra.mxu0 %v608
  %v668 = vpop.f32.mrf.mxu0
  %v669 = vadd.f32 %v640, %v668
  %670 = vmatmul.f32.gmra.mxu0 %v611
  %v671 = vpop.f32.mrf.mxu0
  %v672 = vadd.f32 %v643, %v671
  %673 = vmatmul.f32.gmra.mxu0 %v614
  %v674 = vpop.f32.mrf.mxu0
  %v675 = vadd.f32 %v646, %v674
  %676 = vmatmul.f32.gmra.mxu0 %v617
  %v677 = vpop.f32.mrf.mxu0
  %v678 = vadd.f32 %v649, %v677
  %679 = vdwg.mxu0
  %v680 = vadd.f32 %v568, %v669
  %v681 = vadd.f32 %v569, %v672
  %v682 = vadd.f32 %v570, %v675
  %v683 = vadd.f32 %v571, %v678
  %s684 = scalar_lea.vmem %s0, 384
  %v685 = vld [vmem:[%s684] sm:$0xff]
  %v686 = vld [vmem:[%s684 + $0x8] sm:$0xff]
  %v687 = vld [vmem:[%s684 + $0x10] sm:$0xff]
  %v688 = vld [vmem:[%s684 + $0x18] sm:$0xff]
  %v689 = vld [vmem:[%s684 + $0x20] sm:$0xff]
  %v690 = vld [vmem:[%s684 + $0x28] sm:$0xff]
  %v691 = vld [vmem:[%s684 + $0x30] sm:$0xff]
  %v692 = vld [vmem:[%s684 + $0x38] sm:$0xff]
  %s693 = scalar_lea.vmem %s1, 1200
  %v694 = vld [vmem:[%s693] sm:$0xff]
  %v695 = vld [vmem:[%s693 + $0x8] sm:$0xff]
  %v696 = vld [vmem:[%s693 + $0x10] sm:$0xff]
  %v697 = vld [vmem:[%s693 + $0x18] sm:$0xff]
  %v698 = vld [vmem:[%s693 + $0x20] sm:$0xff]
  %v699 = vld [vmem:[%s693 + $0x28] sm:$0xff]
  %v700 = vld [vmem:[%s693 + $0x30] sm:$0xff]
  %v701 = vld [vmem:[%s693 + $0x38] sm:$0xff]
  %v702 = vld [vmem:[%s693 + $0x40] sm:$0xff]
  %v703 = vld [vmem:[%s693 + $0x48] sm:$0xff]
  %v704 = vld [vmem:[%s693 + $0x50] sm:$0xff]
  %v705 = vld [vmem:[%s693 + $0x58] sm:$0xff]
  %v706 = vld [vmem:[%s693 + $0x60] sm:$0xff]
  %v707 = vld [vmem:[%s693 + $0x68] sm:$0xff]
  %v708 = vld [vmem:[%s693 + $0x70] sm:$0xff]
  %v709 = vld [vmem:[%s693 + $0x78] sm:$0xff]
  %v710 = vld [vmem:[%s693 + $0x80] sm:$0xff]
  %v711 = vld [vmem:[%s693 + $0x88] sm:$0xff]
  %v712 = vld [vmem:[%s693 + $0x90] sm:$0xff]
  %v713 = vld [vmem:[%s693 + $0x98] sm:$0xff]
  %v714 = vld [vmem:[%s693 + $0xa0] sm:$0xff]
  %v715 = vld [vmem:[%s693 + $0xa8] sm:$0xff]
  %v716 = vld [vmem:[%s693 + $0xb0] sm:$0xff]
  %v717 = vld [vmem:[%s693 + $0xb8] sm:$0xff]
  %v718 = vld [vmem:[%s693 + $0xc0] sm:$0xf]
  %v720 = vsel %vm88, %v686, 0
  %v723 = vsel %vm88, %v688, 0
  %v726 = vsel %vm88, %v690, 0
  %v729 = vsel %vm88, %v692, 0
  %v732 = vsel %vm101, %v718, 0
  %734 = vmatpush.msra.mxu0 %v709
  %735 = vmatpush.msra.mxu0 %v708
  %736 = vmatpush.msra.mxu0 %v707
  %737 = vmatpush.msra.mxu0 %v706
  %738 = vmatpush.msra.mxu0 %v705
  %739 = vmatpush.msra.mxu0 %v704
  %740 = vmatpush.msra.mxu0 %v703
  %741 = vmatpush.msra.mxu0 %v702
  %742 = vmatpush.msra.mxu0 %v701
  %743 = vmatpush.msra.mxu0 %v700
  %744 = vmatpush.msra.mxu0 %v699
  %745 = vmatpush.msra.mxu0 %v698
  %746 = vmatpush.msra.mxu0 %v697
  %747 = vmatpush.msra.mxu0 %v696
  %748 = vmatpush.msra.mxu0 %v695
  %749 = vmatpush.msra.mxu0 %v694
  %750 = vmatmul.f32.gmra.mxu0 %v685
  %v751 = vpop.f32.mrf.mxu0
  %v752 = vadd.f32 0.0, %v751
  %753 = vmatmul.f32.gmra.mxu0 %v687
  %v754 = vpop.f32.mrf.mxu0
  %v755 = vadd.f32 0.0, %v754
  %756 = vmatmul.f32.gmra.mxu0 %v689
  %v757 = vpop.f32.mrf.mxu0
  %v758 = vadd.f32 0.0, %v757
  %759 = vmatmul.f32.gmra.mxu0 %v691
  %v760 = vpop.f32.mrf.mxu0
  %v761 = vadd.f32 0.0, %v760
  %762 = vdwg.mxu0
  %763 = vmatpush.msra.mxu0 0.0
  %764 = vmatpush.msra.mxu0 0.0
  %765 = vmatpush.msra.mxu0 0.0
  %766 = vmatpush.msra.mxu0 0.0
  %767 = vmatpush.msra.mxu0 0.0
  %768 = vmatpush.msra.mxu0 0.0
  %769 = vmatpush.msra.mxu0 0.0
  %770 = vmatpush.msra.mxu0 %v732
  %771 = vmatpush.msra.mxu0 %v717
  %772 = vmatpush.msra.mxu0 %v716
  %773 = vmatpush.msra.mxu0 %v715
  %774 = vmatpush.msra.mxu0 %v714
  %775 = vmatpush.msra.mxu0 %v713
  %776 = vmatpush.msra.mxu0 %v712
  %777 = vmatpush.msra.mxu0 %v711
  %778 = vmatpush.msra.mxu0 %v710
  %779 = vmatmul.f32.gmra.mxu0 %v720
  %v780 = vpop.f32.mrf.mxu0
  %v781 = vadd.f32 %v752, %v780
  %782 = vmatmul.f32.gmra.mxu0 %v723
  %v783 = vpop.f32.mrf.mxu0
  %v784 = vadd.f32 %v755, %v783
  %785 = vmatmul.f32.gmra.mxu0 %v726
  %v786 = vpop.f32.mrf.mxu0
  %v787 = vadd.f32 %v758, %v786
  %788 = vmatmul.f32.gmra.mxu0 %v729
  %v789 = vpop.f32.mrf.mxu0
  %v790 = vadd.f32 %v761, %v789
  %791 = vdwg.mxu0
  %v792 = vadd.f32 %v680, %v781
  %v793 = vadd.f32 %v681, %v784
  %v794 = vadd.f32 %v682, %v787
  %v795 = vadd.f32 %v683, %v790
  %s796 = scalar_lea.vmem %s0, 448
  %v797 = vld [vmem:[%s796] sm:$0xff]
  %v798 = vld [vmem:[%s796 + $0x8] sm:$0xff]
  %v799 = vld [vmem:[%s796 + $0x10] sm:$0xff]
  %v800 = vld [vmem:[%s796 + $0x18] sm:$0xff]
  %v801 = vld [vmem:[%s796 + $0x20] sm:$0xff]
  %v802 = vld [vmem:[%s796 + $0x28] sm:$0xff]
  %v803 = vld [vmem:[%s796 + $0x30] sm:$0xff]
  %v804 = vld [vmem:[%s796 + $0x38] sm:$0xff]
  %s805 = scalar_lea.vmem %s1, 1400
  %v806 = vld [vmem:[%s805] sm:$0xff]
  %v807 = vld [vmem:[%s805 + $0x8] sm:$0xff]
  %v808 = vld [vmem:[%s805 + $0x10] sm:$0xff]
  %v809 = vld [vmem:[%s805 + $0x18] sm:$0xff]
  %v810 = vld [vmem:[%s805 + $0x20] sm:$0xff]
  %v811 = vld [vmem:[%s805 + $0x28] sm:$0xff]
  %v812 = vld [vmem:[%s805 + $0x30] sm:$0xff]
  %v813 = vld [vmem:[%s805 + $0x38] sm:$0xff]
  %v814 = vld [vmem:[%s805 + $0x40] sm:$0xff]
  %v815 = vld [vmem:[%s805 + $0x48] sm:$0xff]
  %v816 = vld [vmem:[%s805 + $0x50] sm:$0xff]
  %v817 = vld [vmem:[%s805 + $0x58] sm:$0xff]
  %v818 = vld [vmem:[%s805 + $0x60] sm:$0xff]
  %v819 = vld [vmem:[%s805 + $0x68] sm:$0xff]
  %v820 = vld [vmem:[%s805 + $0x70] sm:$0xff]
  %v821 = vld [vmem:[%s805 + $0x78] sm:$0xff]
  %v822 = vld [vmem:[%s805 + $0x80] sm:$0xff]
  %v823 = vld [vmem:[%s805 + $0x88] sm:$0xff]
  %v824 = vld [vmem:[%s805 + $0x90] sm:$0xff]
  %v825 = vld [vmem:[%s805 + $0x98] sm:$0xff]
  %v826 = vld [vmem:[%s805 + $0xa0] sm:$0xff]
  %v827 = vld [vmem:[%s805 + $0xa8] sm:$0xff]
  %v828 = vld [vmem:[%s805 + $0xb0] sm:$0xff]
  %v829 = vld [vmem:[%s805 + $0xb8] sm:$0xff]
  %v830 = vld [vmem:[%s805 + $0xc0] sm:$0xf]
  %v832 = vsel %vm88, %v798, 0
  %v835 = vsel %vm88, %v800, 0
  %v838 = vsel %vm88, %v802, 0
  %v841 = vsel %vm88, %v804, 0
  %v844 = vsel %vm101, %v830, 0
  %846 = vmatpush.msra.mxu0 %v821
  %847 = vmatpush.msra.mxu0 %v820
  %848 = vmatpush.msra.mxu0 %v819
  %849 = vmatpush.msra.mxu0 %v818
  %850 = vmatpush.msra.mxu0 %v817
  %851 = vmatpush.msra.mxu0 %v816
  %852 = vmatpush.msra.mxu0 %v815
  %853 = vmatpush.msra.mxu0 %v814
  %854 = vmatpush.msra.mxu0 %v813
  %855 = vmatpush.msra.mxu0 %v812
  %856 = vmatpush.msra.mxu0 %v811
  %857 = vmatpush.msra.mxu0 %v810
  %858 = vmatpush.msra.mxu0 %v809
  %859 = vmatpush.msra.mxu0 %v808
  %860 = vmatpush.msra.mxu0 %v807
  %861 = vmatpush.msra.mxu0 %v806
  %862 = vmatmul.f32.gmra.mxu0 %v797
  %v863 = vpop.f32.mrf.mxu0
  %v864 = vadd.f32 0.0, %v863
  %865 = vmatmul.f32.gmra.mxu0 %v799
  %v866 = vpop.f32.mrf.mxu0
  %v867 = vadd.f32 0.0, %v866
  %868 = vmatmul.f32.gmra.mxu0 %v801
  %v869 = vpop.f32.mrf.mxu0
  %v870 = vadd.f32 0.0, %v869
  %871 = vmatmul.f32.gmra.mxu0 %v803
  %v872 = vpop.f32.mrf.mxu0
  %v873 = vadd.f32 0.0, %v872
  %874 = vdwg.mxu0
  %875 = vmatpush.msra.mxu0 0.0
  %876 = vmatpush.msra.mxu0 0.0
  %877 = vmatpush.msra.mxu0 0.0
  %878 = vmatpush.msra.mxu0 0.0
  %879 = vmatpush.msra.mxu0 0.0
  %880 = vmatpush.msra.mxu0 0.0
  %881 = vmatpush.msra.mxu0 0.0
  %882 = vmatpush.msra.mxu0 %v844
  %883 = vmatpush.msra.mxu0 %v829
  %884 = vmatpush.msra.mxu0 %v828
  %885 = vmatpush.msra.mxu0 %v827
  %886 = vmatpush.msra.mxu0 %v826
  %887 = vmatpush.msra.mxu0 %v825
  %888 = vmatpush.msra.mxu0 %v824
  %889 = vmatpush.msra.mxu0 %v823
  %890 = vmatpush.msra.mxu0 %v822
  %891 = vmatmul.f32.gmra.mxu0 %v832
  %v892 = vpop.f32.mrf.mxu0
  %v893 = vadd.f32 %v864, %v892
  %894 = vmatmul.f32.gmra.mxu0 %v835
  %v895 = vpop.f32.mrf.mxu0
  %v896 = vadd.f32 %v867, %v895
  %897 = vmatmul.f32.gmra.mxu0 %v838
  %v898 = vpop.f32.mrf.mxu0
  %v899 = vadd.f32 %v870, %v898
  %900 = vmatmul.f32.gmra.mxu0 %v841
  %v901 = vpop.f32.mrf.mxu0
  %v902 = vadd.f32 %v873, %v901
  %903 = vdwg.mxu0
  %v904 = vadd.f32 %v792, %v893
  %v905 = vadd.f32 %v793, %v896
  %v906 = vadd.f32 %v794, %v899
  %v907 = vadd.f32 %v795, %v902
  %s908 = scalar_lea.vmem %s0, 512
  %v909 = vld [vmem:[%s908] sm:$0xff]
  %v910 = vld [vmem:[%s908 + $0x8] sm:$0xff]
  %v911 = vld [vmem:[%s908 + $0x10] sm:$0xff]
  %v912 = vld [vmem:[%s908 + $0x18] sm:$0xff]
  %v913 = vld [vmem:[%s908 + $0x20] sm:$0xff]
  %v914 = vld [vmem:[%s908 + $0x28] sm:$0xff]
  %v915 = vld [vmem:[%s908 + $0x30] sm:$0xff]
  %v916 = vld [vmem:[%s908 + $0x38] sm:$0xff]
  %s917 = scalar_lea.vmem %s1, 1600
  %v918 = vld [vmem:[%s917] sm:$0xff]
  %v919 = vld [vmem:[%s917 + $0x8] sm:$0xff]
  %v920 = vld [vmem:[%s917 + $0x10] sm:$0xff]
  %v921 = vld [vmem:[%s917 + $0x18] sm:$0xff]
  %v922 = vld [vmem:[%s917 + $0x20] sm:$0xff]
  %v923 = vld [vmem:[%s917 + $0x28] sm:$0xff]
  %v924 = vld [vmem:[%s917 + $0x30] sm:$0xff]
  %v925 = vld [vmem:[%s917 + $0x38] sm:$0xff]
  %v926 = vld [vmem:[%s917 + $0x40] sm:$0xff]
  %v927 = vld [vmem:[%s917 + $0x48] sm:$0xff]
  %v928 = vld [vmem:[%s917 + $0x50] sm:$0xff]
  %v929 = vld [vmem:[%s917 + $0x58] sm:$0xff]
  %v930 = vld [vmem:[%s917 + $0x60] sm:$0xff]
  %v931 = vld [vmem:[%s917 + $0x68] sm:$0xff]
  %v932 = vld [vmem:[%s917 + $0x70] sm:$0xff]
  %v933 = vld [vmem:[%s917 + $0x78] sm:$0xff]
  %v934 = vld [vmem:[%s917 + $0x80] sm:$0xff]
  %v935 = vld [vmem:[%s917 + $0x88] sm:$0xff]
  %v936 = vld [vmem:[%s917 + $0x90] sm:$0xff]
  %v937 = vld [vmem:[%s917 + $0x98] sm:$0xff]
  %v938 = vld [vmem:[%s917 + $0xa0] sm:$0xff]
  %v939 = vld [vmem:[%s917 + $0xa8] sm:$0xff]
  %v940 = vld [vmem:[%s917 + $0xb0] sm:$0xff]
  %v941 = vld [vmem:[%s917 + $0xb8] sm:$0xff]
  %v942 = vld [vmem:[%s917 + $0xc0] sm:$0xf]
  %v944 = vsel %vm88, %v910, 0
  %v947 = vsel %vm88, %v912, 0
  %v950 = vsel %vm88, %v914, 0
  %v953 = vsel %vm88, %v916, 0
  %v956 = vsel %vm101, %v942, 0
  %958 = vmatpush.msra.mxu0 %v933
  %959 = vmatpush.msra.mxu0 %v932
  %960 = vmatpush.msra.mxu0 %v931
  %961 = vmatpush.msra.mxu0 %v930
  %962 = vmatpush.msra.mxu0 %v929
  %963 = vmatpush.msra.mxu0 %v928
  %964 = vmatpush.msra.mxu0 %v927
  %965 = vmatpush.msra.mxu0 %v926
  %966 = vmatpush.msra.mxu0 %v925
  %967 = vmatpush.msra.mxu0 %v924
  %968 = vmatpush.msra.mxu0 %v923
  %969 = vmatpush.msra.mxu0 %v922
  %970 = vmatpush.msra.mxu0 %v921
  %971 = vmatpush.msra.mxu0 %v920
  %972 = vmatpush.msra.mxu0 %v919
  %973 = vmatpush.msra.mxu0 %v918
  %974 = vmatmul.f32.gmra.mxu0 %v909
  %v975 = vpop.f32.mrf.mxu0
  %v976 = vadd.f32 0.0, %v975
  %977 = vmatmul.f32.gmra.mxu0 %v911
  %v978 = vpop.f32.mrf.mxu0
  %v979 = vadd.f32 0.0, %v978
  %980 = vmatmul.f32.gmra.mxu0 %v913
  %v981 = vpop.f32.mrf.mxu0
  %v982 = vadd.f32 0.0, %v981
  %983 = vmatmul.f32.gmra.mxu0 %v915
  %v984 = vpop.f32.mrf.mxu0
  %v985 = vadd.f32 0.0, %v984
  %986 = vdwg.mxu0
  %987 = vmatpush.msra.mxu0 0.0
  %988 = vmatpush.msra.mxu0 0.0
  %989 = vmatpush.msra.mxu0 0.0
  %990 = vmatpush.msra.mxu0 0.0
  %991 = vmatpush.msra.mxu0 0.0
  %992 = vmatpush.msra.mxu0 0.0
  %993 = vmatpush.msra.mxu0 0.0
  %994 = vmatpush.msra.mxu0 %v956
  %995 = vmatpush.msra.mxu0 %v941
  %996 = vmatpush.msra.mxu0 %v940
  %997 = vmatpush.msra.mxu0 %v939
  %998 = vmatpush.msra.mxu0 %v938
  %999 = vmatpush.msra.mxu0 %v937
  %1000 = vmatpush.msra.mxu0 %v936
  %1001 = vmatpush.msra.mxu0 %v935
  %1002 = vmatpush.msra.mxu0 %v934
  %1003 = vmatmul.f32.gmra.mxu0 %v944
  %v1004 = vpop.f32.mrf.mxu0
  %v1005 = vadd.f32 %v976, %v1004
  %1006 = vmatmul.f32.gmra.mxu0 %v947
  %v1007 = vpop.f32.mrf.mxu0
  %v1008 = vadd.f32 %v979, %v1007
  %1009 = vmatmul.f32.gmra.mxu0 %v950
  %v1010 = vpop.f32.mrf.mxu0
  %v1011 = vadd.f32 %v982, %v1010
  %1012 = vmatmul.f32.gmra.mxu0 %v953
  %v1013 = vpop.f32.mrf.mxu0
  %v1014 = vadd.f32 %v985, %v1013
  %1015 = vdwg.mxu0
  %v1016 = vadd.f32 %v904, %v1005
  %v1017 = vadd.f32 %v905, %v1008
  %v1018 = vadd.f32 %v906, %v1011
  %v1019 = vadd.f32 %v907, %v1014
  %s1020 = scalar_lea.vmem %s0, 576
  %v1021 = vld [vmem:[%s1020] sm:$0xff]
  %v1022 = vld [vmem:[%s1020 + $0x8] sm:$0xff]
  %v1023 = vld [vmem:[%s1020 + $0x10] sm:$0xff]
  %v1024 = vld [vmem:[%s1020 + $0x18] sm:$0xff]
  %v1025 = vld [vmem:[%s1020 + $0x20] sm:$0xff]
  %v1026 = vld [vmem:[%s1020 + $0x28] sm:$0xff]
  %v1027 = vld [vmem:[%s1020 + $0x30] sm:$0xff]
  %v1028 = vld [vmem:[%s1020 + $0x38] sm:$0xff]
  %s1029 = scalar_lea.vmem %s1, 1800
  %v1030 = vld [vmem:[%s1029] sm:$0xff]
  %v1031 = vld [vmem:[%s1029 + $0x8] sm:$0xff]
  %v1032 = vld [vmem:[%s1029 + $0x10] sm:$0xff]
  %v1033 = vld [vmem:[%s1029 + $0x18] sm:$0xff]
  %v1034 = vld [vmem:[%s1029 + $0x20] sm:$0xff]
  %v1035 = vld [vmem:[%s1029 + $0x28] sm:$0xff]
  %v1036 = vld [vmem:[%s1029 + $0x30] sm:$0xff]
  %v1037 = vld [vmem:[%s1029 + $0x38] sm:$0xff]
  %v1038 = vld [vmem:[%s1029 + $0x40] sm:$0xff]
  %v1039 = vld [vmem:[%s1029 + $0x48] sm:$0xff]
  %v1040 = vld [vmem:[%s1029 + $0x50] sm:$0xff]
  %v1041 = vld [vmem:[%s1029 + $0x58] sm:$0xff]
  %v1042 = vld [vmem:[%s1029 + $0x60] sm:$0xff]
  %v1043 = vld [vmem:[%s1029 + $0x68] sm:$0xff]
  %v1044 = vld [vmem:[%s1029 + $0x70] sm:$0xff]
  %v1045 = vld [vmem:[%s1029 + $0x78] sm:$0xff]
  %v1046 = vld [vmem:[%s1029 + $0x80] sm:$0xff]
  %v1047 = vld [vmem:[%s1029 + $0x88] sm:$0xff]
  %v1048 = vld [vmem:[%s1029 + $0x90] sm:$0xff]
  %v1049 = vld [vmem:[%s1029 + $0x98] sm:$0xff]
  %v1050 = vld [vmem:[%s1029 + $0xa0] sm:$0xff]
  %v1051 = vld [vmem:[%s1029 + $0xa8] sm:$0xff]
  %v1052 = vld [vmem:[%s1029 + $0xb0] sm:$0xff]
  %v1053 = vld [vmem:[%s1029 + $0xb8] sm:$0xff]
  %v1054 = vld [vmem:[%s1029 + $0xc0] sm:$0xf]
  %v1056 = vsel %vm88, %v1022, 0
  %v1059 = vsel %vm88, %v1024, 0
  %v1062 = vsel %vm88, %v1026, 0
  %v1065 = vsel %vm88, %v1028, 0
  %v1068 = vsel %vm101, %v1054, 0
  %1070 = vmatpush.msra.mxu0 %v1045
  %1071 = vmatpush.msra.mxu0 %v1044
  %1072 = vmatpush.msra.mxu0 %v1043
  %1073 = vmatpush.msra.mxu0 %v1042
  %1074 = vmatpush.msra.mxu0 %v1041
  %1075 = vmatpush.msra.mxu0 %v1040
  %1076 = vmatpush.msra.mxu0 %v1039
  %1077 = vmatpush.msra.mxu0 %v1038
  %1078 = vmatpush.msra.mxu0 %v1037
  %1079 = vmatpush.msra.mxu0 %v1036
  %1080 = vmatpush.msra.mxu0 %v1035
  %1081 = vmatpush.msra.mxu0 %v1034
  %1082 = vmatpush.msra.mxu0 %v1033
  %1083 = vmatpush.msra.mxu0 %v1032
  %1084 = vmatpush.msra.mxu0 %v1031
  %1085 = vmatpush.msra.mxu0 %v1030
  %1086 = vmatmul.f32.gmra.mxu0 %v1021
  %v1087 = vpop.f32.mrf.mxu0
  %v1088 = vadd.f32 0.0, %v1087
  %1089 = vmatmul.f32.gmra.mxu0 %v1023
  %v1090 = vpop.f32.mrf.mxu0
  %v1091 = vadd.f32 0.0, %v1090
  %1092 = vmatmul.f32.gmra.mxu0 %v1025
  %v1093 = vpop.f32.mrf.mxu0
  %v1094 = vadd.f32 0.0, %v1093
  %1095 = vmatmul.f32.gmra.mxu0 %v1027
  %v1096 = vpop.f32.mrf.mxu0
  %v1097 = vadd.f32 0.0, %v1096
  %1098 = vdwg.mxu0
  %1099 = vmatpush.msra.mxu0 0.0
  %1100 = vmatpush.msra.mxu0 0.0
  %1101 = vmatpush.msra.mxu0 0.0
  %1102 = vmatpush.msra.mxu0 0.0
  %1103 = vmatpush.msra.mxu0 0.0
  %1104 = vmatpush.msra.mxu0 0.0
  %1105 = vmatpush.msra.mxu0 0.0
  %1106 = vmatpush.msra.mxu0 %v1068
  %1107 = vmatpush.msra.mxu0 %v1053
  %1108 = vmatpush.msra.mxu0 %v1052
  %1109 = vmatpush.msra.mxu0 %v1051
  %1110 = vmatpush.msra.mxu0 %v1050
  %1111 = vmatpush.msra.mxu0 %v1049
  %1112 = vmatpush.msra.mxu0 %v1048
  %1113 = vmatpush.msra.mxu0 %v1047
  %1114 = vmatpush.msra.mxu0 %v1046
  %1115 = vmatmul.f32.gmra.mxu0 %v1056
  %v1116 = vpop.f32.mrf.mxu0
  %v1117 = vadd.f32 %v1088, %v1116
  %1118 = vmatmul.f32.gmra.mxu0 %v1059
  %v1119 = vpop.f32.mrf.mxu0
  %v1120 = vadd.f32 %v1091, %v1119
  %1121 = vmatmul.f32.gmra.mxu0 %v1062
  %v1122 = vpop.f32.mrf.mxu0
  %v1123 = vadd.f32 %v1094, %v1122
  %1124 = vmatmul.f32.gmra.mxu0 %v1065
  %v1125 = vpop.f32.mrf.mxu0
  %v1126 = vadd.f32 %v1097, %v1125
  %1127 = vdwg.mxu0
  %v1128 = vadd.f32 %v1016, %v1117
  %v1129 = vadd.f32 %v1017, %v1120
  %v1130 = vadd.f32 %v1018, %v1123
  %v1131 = vadd.f32 %v1019, %v1126
  %v1132 = vld [vmem:[%s2] sm:$0x1]
  %v1134 = vperm.slane %v1132, 0
  %v1136 = vadd.f32 %v1128, %v1134
  %v1137 = vadd.f32 %v1129, %v1134
  %v1138 = vadd.f32 %v1130, %v1134
  %v1139 = vadd.f32 %v1131, %v1134
  %v1140 = vmax.f32 %v1136, 0.0
  %v1141 = vmax.f32 %v1137, 0.0
  %v1142 = vmax.f32 %v1138, 0.0
  %v1143 = vmax.f32 %v1139, 0.0
  %v1144 = vld [vmem:[%s3] sm:$0xff]
  %v1145 = vld [vmem:[%s3 + $0x8] sm:$0xff]
  %v1146 = vld [vmem:[%s3 + $0x10] sm:$0xff]
  %v1147 = vld [vmem:[%s3 + $0x18] sm:$0xff]
  %v1148 = vld [vmem:[%s3 + $0x20] sm:$0xff]
  %v1149 = vld [vmem:[%s3 + $0x28] sm:$0xff]
  %v1150 = vld [vmem:[%s3 + $0x30] sm:$0xff]
  %v1151 = vld [vmem:[%s3 + $0x38] sm:$0xff]
  %v1152 = vld [vmem:[%s3 + $0x40] sm:$0xff]
  %v1153 = vld [vmem:[%s3 + $0x48] sm:$0xff]
  %v1154 = vld [vmem:[%s3 + $0x50] sm:$0xff]
  %v1155 = vld [vmem:[%s3 + $0x58] sm:$0xff]
  %v1156 = vld [vmem:[%s3 + $0x60] sm:$0xff]
  %v1157 = vld [vmem:[%s3 + $0x68] sm:$0xff]
  %v1158 = vld [vmem:[%s3 + $0x70] sm:$0xff]
  %v1159 = vld [vmem:[%s3 + $0x78] sm:$0xff]
  %v1160 = vld [vmem:[%s4] sm:$0x1]
  %v1162 = vperm.slane %v1160, 0
  %1164 = vmatpush.msra.mxu0 %v1159
  %1165 = vmatpush.msra.mxu0 %v1158
  %1166 = vmatpush.msra.mxu0 %v1157
  %1167 = vmatpush.msra.mxu0 %v1156
  %1168 = vmatpush.msra.mxu0 %v1155
  %1169 = vmatpush.msra.mxu0 %v1154
  %1170 = vmatpush.msra.mxu0 %v1153
  %1171 = vmatpush.msra.mxu0 %v1152
  %1172 = vmatpush.msra.mxu0 %v1151
  %1173 = vmatpush.msra.mxu0 %v1150
  %1174 = vmatpush.msra.mxu0 %v1149
  %1175 = vmatpush.msra.mxu0 %v1148
  %1176 = vmatpush.msra.mxu0 %v1147
  %1177 = vmatpush.msra.mxu0 %v1146
  %1178 = vmatpush.msra.mxu0 %v1145
  %1179 = vmatpush.msra.mxu0 %v1144
  %1180 = vmatmul.f32.gmra.mxu0 %v1140
  %v1181 = vpop.f32.mrf.mxu0
  %v1182 = vadd.f32 %v1162, %v1181
  %1183 = vmatmul.f32.gmra.mxu0 %v1141
  %v1184 = vpop.f32.mrf.mxu0
  %v1185 = vadd.f32 %v1162, %v1184
  %1186 = vmatmul.f32.gmra.mxu0 %v1142
  %v1187 = vpop.f32.mrf.mxu0
  %v1188 = vadd.f32 %v1162, %v1187
  %1189 = vmatmul.f32.gmra.mxu0 %v1143
  %v1190 = vpop.f32.mrf.mxu0
  %v1191 = vadd.f32 %v1162, %v1190
  %1192 = vdwg.mxu0
  %1193 = vst [vmem:[%s5] sm:$0xff] %v1182
  %1194 = vst [vmem:[%s5 + $0x8] sm:$0xff] %v1185
  %1195 = vst [vmem:[%s5 + $0x10] sm:$0xff] %v1188
  %1196 = vst [vmem:[%s5 + $0x18] sm:$0xff] %v1191
  // Predicated region
  $region22: #{tiny_lateral_net_forward.3} parent=0 // pred_check
    _
  $region23: #{tiny_lateral_net_forward.3} parent=0 // pred_check_branch
    %1198 = sbr.rel (0) target = $region25
  $region24: #{tiny_lateral_net_forward.3} parent=0 // pred_region
    _
  $region25: #{tiny_lateral_net_forward.3} parent=0 // pred_fallthru
    _
  // Predicated region
  $region26: #{tiny_lateral_net_forward.3} parent=0 // pred_check
    _
  $region27: #{tiny_lateral_net_forward.3} parent=0 // pred_check_branch
    %1200 = sbr.rel (0) target = $region29
  $region28: #{tiny_lateral_net_forward.3} parent=0 // pred_region
    _
  $region29: #{tiny_lateral_net_forward.3} parent=0 // pred_fallthru
    _

</llo_original>
